<compile_context>
chip_gen: v6e
topology: v6e:2x2x1
jax: 0.10.0
libtpu: 0.0.40
codegen_flags: <defaults>
</compile_context>

<pallas_src>
import jax
import jax.numpy as jnp
import numpy as np
from jax import lax
from jax.experimental import pallas as pl
from jax.experimental.pallas import tpu as pltpu

PAD = 0


# --------------------------------------------------------------------------------------
# Helpers
# --------------------------------------------------------------------------------------
def _const_spec(shape):
    """BlockSpec for a grid-invariant operand (weights/biases): constant index map and
    single buffering (pl.Buffered(1)) so the resident copy is not doubled in VMEM."""
    idx = lambda i: (0,) * len(shape)
    try:
        return pl.BlockSpec(shape, idx, pipeline_mode=pl.Buffered(1))
    except (TypeError, AttributeError):      # older jax without pipeline_mode kwarg
        return pl.BlockSpec(shape, idx)


def _vmem_limit(estimate_bytes):
    """Scoped-VMEM budget from the real footprint: never below the 32 MiB default,
    2x headroom for in-kernel temporaries, capped at 128 MiB.
    TODO(synk): on v7x (64 MiB physical VMEM) cap at ~56 MiB and tile more aggressively."""
    return int(min(max(2 * estimate_bytes, 32 * 2**20), 128 * 2**20))


# --------------------------------------------------------------------------------------
# Kernel 1: paired right/left GRU recurrence with Bahdanau attention + linear_out.
# --------------------------------------------------------------------------------------
def decoder_recurrence_kernel(
    ctx_ref, mask_ref, cache_ref, h0_ref, out0_ref,
    whbd_ref, bhr_ref, bhl_ref, wlog_ref,
    wihbd_ref, bihr_ref, bihl_ref,
    wout_ref, bout_ref,
    out_ref,
):
    Bb, H = h0_ref.shape
    I = out0_ref.shape[1]
    T = out_ref.shape[1] // I
    Ha = wlog_ref.shape[1]

    # ---- Loop-invariant loads / broadcasts (hoisted out of the recurrence). ----
    # TODO(synk): at production S, avoid the 2x duplication of ctx/cache by keeping a
    #             (2, Bb, ...) formulation instead of stacking along batch.
    ctx2 = jnp.concatenate([ctx_ref[...]] * 2, axis=0)        # (2Bb, S, C)  bf16
    cache2 = jnp.concatenate([cache_ref[...]] * 2, axis=0)    # (2Bb, S, Ha) f32
    negm = jnp.where(mask_ref[...] > 0.5, -1e18, 0.0)         # masked_fill(-1e18)
    negm2 = jnp.concatenate([negm, negm], axis=0)             # (2Bb, S)
    wlog = wlog_ref[...][None, :, :]                          # (1, 1, Ha)
    w_h_bd = whbd_ref[...]                                    # (2H, Ha+3H) bf16
    b_h = jnp.concatenate(
        [jnp.broadcast_to(bhr_ref[...], (Bb, Ha + 3 * H)),
         jnp.broadcast_to(bhl_ref[...], (Bb, Ha + 3 * H))], axis=0)   # (2Bb, Ha+3H)
    w_ih_bd = wihbd_ref[...]                                  # (2C, 3H) bf16
    b_ih = jnp.concatenate(
        [jnp.broadcast_to(bihr_ref[...], (Bb, 3 * H)),
         jnp.broadcast_to(bihl_ref[...], (Bb, 3 * H))], axis=0)       # (2Bb, 3H)
    w_out, b_out = wout_ref[...], bout_ref[...]               # (H, I) bf16 / (1, I) f32
    ones_h = jnp.ones((Bb, 1), jnp.float32)
    zeros_h = jnp.zeros((Bb, 1), jnp.float32)
    sel_top = jnp.concatenate([ones_h, zeros_h], axis=0)      # rows [:Bb]  == forward
    sel_bot = jnp.concatenate([zeros_h, ones_h], axis=0)      # rows [Bb:]  == backward

    def block_diag(x):
        # (2Bb, D) -> (2Bb, 2D): forward rows occupy cols [:D], backward rows cols [D:],
        # so one matmul against vstack([right_W, left_W]) applies per-chain weights.
        return jnp.concatenate([x * sel_top, x * sel_bot], axis=1)

    out_ref[:, 0:I] = out0_ref[...]                           # outputs[0] (middle word)
    h = jnp.concatenate([h0_ref[...]] * 2, axis=0)            # (2Bb, H): [forward; backward]

    # Full static unroll of the paired steps: pair p handles t=2p+1 (right chain) and
    # t=2p+2 (left chain); the chains are data-independent so their MXU/EUP/XLU ops
    # interleave, halving the dependent-chain length.
    for p in range(T // 2):
        t_r, t_l = 2 * p + 1, 2 * p + 2
        # Fused [linear_query | GRU hidden gates] for BOTH chains: one bf16 MXU push.
        hx = jnp.dot(block_diag(h).astype(jnp.bfloat16), w_h_bd,
                     preferred_element_type=jnp.float32) + b_h        # (2Bb, Ha+3H)
        q, gh = hx[:, :Ha], hx[:, Ha:]
        # Bahdanau attention (b_logit dropped: constant shift cancels in softmax).
        e = jnp.tanh(q[:, None, :] + cache2)                          # (2Bb, S, Ha)
        logit = jnp.sum(e * wlog, axis=-1) + negm2                    # (2Bb, S)
        m = jnp.max(logit, axis=-1, keepdims=True)
        pexp = jnp.exp(logit - m)
        w = pexp * pl.reciprocal(jnp.sum(pexp, axis=-1, keepdims=True), approx=True)
        # Context reduction as a batched MXU matmul: (2Bb,1,S) x (2Bb,S,C) -> (2Bb,C).
        c = jnp.einsum("bqs,bsc->bqc", w[:, None, :].astype(jnp.bfloat16), ctx2,
                       preferred_element_type=jnp.float32)[:, 0, :]
        # GRU input gates for both chains: one bf16 MXU push (gate order [r; z; n]).
        gi = jnp.dot(block_diag(c).astype(jnp.bfloat16), w_ih_bd,
                     preferred_element_type=jnp.float32) + b_ih       # (2Bb, 3H)
        r = jax.nn.sigmoid(gi[:, :H] + gh[:, :H])
        z = jax.nn.sigmoid(gi[:, H:2 * H] + gh[:, H:2 * H])
        n = jnp.tanh(gi[:, 2 * H:] + r * gh[:, 2 * H:])
        h_new = (1.0 - z) * n + z * h                                 # (2Bb, H)
        # linear_out once per pair (off the critical path), stored immediately at
        # static lane offsets into the lane-dense (Bb, T*I) slab.
        out_pair = jnp.dot(h_new.astype(jnp.bfloat16), w_out,
                           preferred_element_type=jnp.float32) + b_out
        out_ref[:, t_r * I:(t_r + 1) * I] = out_pair[:Bb]
        if t_l < T:
            out_ref[:, t_l * I:(t_l + 1) * I] = out_pair[Bb:]
            h = h_new
        # else: trailing right-only step; the wasted backward-half update is discarded
        # and h is not needed afterwards.


def run_decoder_recurrence(ctx, ctx_mask, enc_cache, h0, out0, params, T):
    B, S, C = ctx.shape
    H = h0.shape[-1]
    Ha = params["w_logit"].shape[-1]
    I = params["w_out"].shape[0]
    bf = jnp.bfloat16

    # Block-diagonal-stacked weights: top H (resp. C) rows drive the right chain,
    # bottom rows the left chain; linear_query (shared w_q) is fused with the hidden
    # gates so each paired step consumes h with a single MXU push.
    w_h_bd = jnp.concatenate(
        [jnp.concatenate([params["w_q"].T, params["w_hh_r"].T], axis=1),
         jnp.concatenate([params["w_q"].T, params["w_hh_l"].T], axis=1)],
        axis=0).astype(bf)                                           # (2H, Ha+3H)
    b_h_r = jnp.concatenate([params["b_q"], params["b_hh_r"]])[None, :]
    b_h_l = jnp.concatenate([params["b_q"], params["b_hh_l"]])[None, :]
    w_ih_bd = jnp.concatenate([params["w_ih_r"].T, params["w_ih_l"].T],
                              axis=0).astype(bf)                     # (2C, 3H)

    # Batch grid ("parallel"): each block's recurrence is independent, so at production
    # batch this shards across v7x's 2 TensorCores; degenerates to one block here.
    Bb = B if B <= 8 else 8
    assert B % Bb == 0, "batch must be a multiple of the batch block"
    grid = (B // Bb,)

    f32, b16 = 4, 2
    est = (2 * (Bb * S * C * b16 + Bb * S * f32 + Bb * S * Ha * f32
                + Bb * (H + I) * f32)                                 # batch inputs x2 buf
           + (2 * H * (Ha + 3 * H) + 2 * C * 3 * H + H * I) * b16     # bf16 weights x1 buf
           + (2 * (Ha + 3 * H) + Ha + 2 * 3 * H + I) * f32            # f32 biases
           + 2 * Bb * T * I * f32                                     # output slab x2 buf
           + 2 * Bb * S * (C * b16 + (2 * Ha + 1) * f32))             # in-kernel dups + e

    args = (
        ctx.astype(bf), ctx_mask, enc_cache, h0, out0,
        w_h_bd, b_h_r, b_h_l, params["w_logit"],
        w_ih_bd, params["b_ih_r"][None, :], params["b_ih_l"][None, :],
        params["w_out"].T.astype(bf), params["b_out"][None, :],
    )
    return pl.pallas_call(
        decoder_recurrence_kernel,
        out_shape=jax.ShapeDtypeStruct((B, T * I), jnp.float32),      # lane-dense slab
        grid=grid,
        in_specs=[
            pl.BlockSpec((Bb, S, C), lambda b: (b, 0, 0)),
            pl.BlockSpec((Bb, S), lambda b: (b, 0)),
            pl.BlockSpec((Bb, S, Ha), lambda b: (b, 0, 0)),
            pl.BlockSpec((Bb, H), lambda b: (b, 0)),
            pl.BlockSpec((Bb, I), lambda b: (b, 0)),
            _const_spec((2 * H, Ha + 3 * H)),
            _const_spec((1, Ha + 3 * H)),
            _const_spec((1, Ha + 3 * H)),
            _const_spec((1, Ha)),
            _const_spec((2 * C, 3 * H)),
            _const_spec((1, 3 * H)),
            _const_spec((1, 3 * H)),
            _const_spec((H, I)),
            _const_spec((1, I)),
        ],
        out_specs=pl.BlockSpec((Bb, T * I), lambda b: (b, 0)),
        compiler_params=pltpu.CompilerParams(
            dimension_semantics=("parallel",),
            vmem_limit_bytes=_vmem_limit(est)),
    )(*args)


# --------------------------------------------------------------------------------------
# Kernel 2: linear_emb shifted add + Generator (proj, -inf at PAD, log_softmax).
# --------------------------------------------------------------------------------------
def generator_kernel(x_ref, emb_ref, wemb_ref, bemb_ref, wgen_ref, padvec_ref, out_ref):
    # linear_emb on the time-shifted embeddings. The bias is added unconditionally:
    # the t=0 rows have all-zero emb and the wrapper pre-subtracted b_emb from outputs[0].
    emb_proj = jnp.dot(emb_ref[...], wemb_ref[...],
                       preferred_element_type=jnp.float32) + bemb_ref[...]
    y = x_ref[...] + emb_proj
    logits = jnp.dot(y.astype(jnp.bfloat16), wgen_ref[...],
                     preferred_element_type=jnp.float32) + padvec_ref[...]  # -inf at PAD
    m = jnp.max(logits, axis=-1, keepdims=True)
    lse = jnp.log(jnp.sum(jnp.exp(logits - m), axis=-1, keepdims=True)) + m
    out_ref[...] = logits - lse                                             # log_softmax


def run_generator(x2d, emb2d, params, V):
    N, I = x2d.shape
    bf = jnp.bfloat16
    # 256 rows = one MXU pass on v6e/v7x (two on v5e); amortizes the ~0.35us grid step.
    row_block = N if N <= 256 else 256
    padvec = jnp.zeros((1, V), jnp.float32).at[0, PAD].set(-jnp.inf)
    f32, b16 = 4, 2
    est = (2 * row_block * I * (f32 + b16)          # x (f32) + shifted emb (bf16), x2 buf
           + (I * I + I * V) * b16 + (I + V) * f32  # single-buffered weights / bias / pad
           + 2 * row_block * V * f32                # output tile, x2 buf
           + 2 * row_block * V * f32)               # in-kernel logits temporaries
    # TODO(synk): at production V (e.g. 32k) add a second grid axis over V with a
    #             two-pass/online log-softmax so the (I,V) weight and the (rows,V) tile
    #             never co-reside in full under v7x's 64 MiB VMEM.
    return pl.pallas_call(
        generator_kernel,
        out_shape=jax.ShapeDtypeStruct((N, V), jnp.float32),
        grid=(pl.cdiv(N, row_block),),
        in_specs=[
            pl.BlockSpec((row_block, I), lambda i: (i, 0)),
            pl.BlockSpec((row_block, I), lambda i: (i, 0)),
            _const_spec((I, I)),
            _const_spec((1, I)),
            _const_spec((I, V)),
            _const_spec((1, V)),
        ],
        out_specs=pl.BlockSpec((row_block, V), lambda i: (i, 0)),
        compiler_params=pltpu.CompilerParams(
            dimension_semantics=("parallel",),
            vmem_limit_bytes=_vmem_limit(est)),
    )(x2d, emb2d.astype(bf), params["w_emb"].T.astype(bf),
      params["b_emb"][None, :], params["w_gen"].T.astype(bf), padvec)


# --------------------------------------------------------------------------------------
# Glue: full Decoder.forward semantics.
# --------------------------------------------------------------------------------------
def decoder_forward(params, ctx, ctx_mask, embeddings, hiddens, enc_cache, outputs_init):
    B, T, I = embeddings.shape
    V = params["w_gen"].shape[0]
    # Kernel 2 adds linear_emb (incl. its bias) to every row; the t=0 shifted-emb row is
    # all-zero, so pre-subtract b_emb from outputs[0] to keep the t=0 output bias-free.
    out0 = outputs_init - params["b_emb"][None, :]
    out_slab = run_decoder_recurrence(ctx, ctx_mask, enc_cache, hiddens[:, 0, :],
                                      out0, params, T)                # (B, T*I)
    emb_shift = jnp.concatenate(
        [jnp.zeros((B, 1, I), jnp.float32), embeddings[:, :-1, :]], axis=1)
    logp = run_generator(out_slab.reshape(B * T, I), emb_shift.reshape(B * T, I),
                         params, V)
    return logp.reshape(B, T, V)


# --------------------------------------------------------------------------------------
# Pure-JAX reference (mirrors the PyTorch code, full-f32 matmul precision).
# --------------------------------------------------------------------------------------
def reference_forward(params, ctx, ctx_mask, embeddings, hiddens, enc_cache, outputs_init):
    P = lax.Precision.HIGHEST
    B, T, I = embeddings.shape
    H = hiddens.shape[-1]

    def lin(x, w, b=None):
        y = jnp.dot(x, w.T, precision=P)
        return y if b is None else y + b

    def attention(h):
        q = lin(h, params["w_q"], params["b_q"])
        e = jnp.tanh(q[:, None, :] + enc_cache)
        logit = jnp.einsum("bsh,h->bs", e, params["w_logit"][0], precision=P)
        logit = logit + params["b_logit"][0]
        logit = jnp.where(ctx_mask > 0.5, -1e18, logit)
        w = jax.nn.softmax(logit, axis=-1)
        return jnp.einsum("bs,bsc->bc", w, ctx, precision=P)

    def gru(x, h, wih, whh, bih, bhh):
        gi = lin(x, wih, bih)
        gh = lin(h, whh, bhh)
        r = jax.nn.sigmoid(gi[:, :H] + gh[:, :H])
        z = jax.nn.sigmoid(gi[:, H:2 * H] + gh[:, H:2 * H])
        n = jnp.tanh(gi[:, 2 * H:] + r * gh[:, 2 * H:])
        return (1.0 - z) * n + z * h

    fh = hiddens[:, 0, :]
    bh = hiddens[:, 0, :]
    outs = [outputs_init]
    right = True
    for _ in range(1, T):
        if right:
            c = attention(fh)
            fh = gru(c, fh, params["w_ih_r"], params["w_hh_r"],
                     params["b_ih_r"], params["b_hh_r"])
            outs.append(lin(fh, params["w_out"], params["b_out"]))
        else:
            c = attention(bh)
            bh = gru(c, bh, params["w_ih_l"], params["w_hh_l"],
                     params["b_ih_l"], params["b_hh_l"])
            outs.append(lin(bh, params["w_out"], params["b_out"]))
        right = not right
    outs = jnp.stack(outs, axis=1)
    add = lin(embeddings[:, :-1], params["w_emb"], params["b_emb"])
    outs = outs.at[:, 1:].add(add)
    logits = jnp.dot(outs, params["w_gen"].T, precision=P)
    logits = logits.at[:, :, PAD].set(-jnp.inf)
    return jax.nn.log_softmax(logits, axis=-1)


if __name__ == "__main__":
    B, S, T = 2, 8, 8
    C = H = I = 32           # context_size = hidden_size = input_size = 32
    V = 64                   # n_words

    key = jax.random.PRNGKey(0)
    ks = jax.random.split(key, 26)

    def init(k, shape, scale=0.1):
        return jax.random.normal(k, shape, jnp.float32) * scale

    params = {
        # BahdanauAttention (attn hidden = query_size = H)
        "w_q": init(ks[0], (H, H)), "b_q": init(ks[1], (H,)),
        "w_key": init(ks[2], (H, C)), "b_key": init(ks[3], (H,)),
        "w_logit": init(ks[4], (1, H)), "b_logit": init(ks[5], (1,)),
        # rnn_right / rnn_left GRU weights (PyTorch layout: (3H, in), gates [r; z; n])
        "w_ih_r": init(ks[6], (3 * H, C)), "w_hh_r": init(ks[7], (3 * H, H)),
        "b_ih_r": init(ks[8], (3 * H,)), "b_hh_r": init(ks[9], (3 * H,)),
        "w_ih_l": init(ks[10], (3 * H, C)), "w_hh_l": init(ks[11], (3 * H, H)),
        "b_ih_l": init(ks[12], (3 * H,)), "b_hh_l": init(ks[13], (3 * H,)),
        # linear_out / linear_emb / generator proj (no bias, proj_share_weight=False)
        "w_out": init(ks[14], (I, H)), "b_out": init(ks[15], (I,)),
        "w_emb": init(ks[16], (I, I)), "b_emb": init(ks[17], (I,)),
        "w_gen": init(ks[18], (V, I)),
        # bridge + middle_classifier (used only in glue to build forward() inputs)
        "w_bridge": init(ks[19], (H, C)), "b_bridge": init(ks[20], (H,)),
        "w_mid": init(ks[21], (I, C)), "b_mid": init(ks[22], (I,)),
    }

    ctx = jax.random.normal(ks[23], (B, S, C), jnp.float32)
    embeddings = jax.random.normal(ks[24], (B, T, I), jnp.float32)
    ctx_mask = jnp.zeros((B, S), jnp.float32).at[1, S - 1].set(1.0)   # 1.0 == PAD

    # init_decoder(): dec_init = tanh(linear_bridge(ctx_mean)); enc_cache = linear_key(ctx)
    no_pad = 1.0 - ctx_mask
    ctx_mean = jnp.sum(ctx * no_pad[:, :, None], axis=1) / jnp.sum(no_pad[:, :, None], axis=1)
    dec_init = jnp.tanh(ctx_mean @ params["w_bridge"].T + params["b_bridge"])
    hiddens = dec_init[:, None, :]                                    # (B, 1, H)
    enc_cache = ctx @ params["w_key"].T + params["b_key"]             # (B, S, H)

    # get_middle_word(): middle_output = tanh(middle_classifier(middle_ctx)) -> outputs[0]
    outputs_init = jnp.tanh(ctx_mean @ params["w_mid"].T + params["b_mid"])

    # TODO(synk): dropout (p=0.0 -> no-op), embedding lookup and the inference()/one_step
    #             beam paths are not part of forward() and are not implemented.

    fwd = jax.jit(decoder_forward)
    out = fwd(params, ctx, ctx_mask, embeddings, hiddens, enc_cache, outputs_init)
    out = jax.block_until_ready(out)

    ref = reference_forward(params, ctx, ctx_mask, embeddings, hiddens, enc_cache,
                            outputs_init)
    assert out.shape == (B, T, V)
    # Kernel matmuls run on bf16 operands (single-pass MXU, f32 accumulation) while the
    # reference is full-f32 HIGHEST, so the tolerance reflects bf16 precision propagated
    # through the T-step tanh/sigmoid recurrence (structural bugs would be >> 0.1).
    np.testing.assert_allclose(np.asarray(out), np.asarray(ref), atol=5e-2, rtol=5e-2)
    print("KERNEL_OK")
</pallas_src>

<mosaic_0001>
module attributes {stable_mosaic.version = 11 : i64} {
  func.func @decoder_recurrence_kernel(%arg0: i32, %arg1: memref<2x8x32xbf16, #tpu.memory_space<vmem>>, %arg2: memref<2x8xf32, #tpu.memory_space<vmem>>, %arg3: memref<2x8x32xf32, #tpu.memory_space<vmem>>, %arg4: memref<2x32xf32, #tpu.memory_space<vmem>>, %arg5: memref<2x32xf32, #tpu.memory_space<vmem>>, %arg6: memref<64x128xbf16, #tpu.memory_space<vmem>>, %arg7: memref<1x128xf32, #tpu.memory_space<vmem>>, %arg8: memref<1x128xf32, #tpu.memory_space<vmem>>, %arg9: memref<1x32xf32, #tpu.memory_space<vmem>>, %arg10: memref<64x96xbf16, #tpu.memory_space<vmem>>, %arg11: memref<1x96xf32, #tpu.memory_space<vmem>>, %arg12: memref<1x96xf32, #tpu.memory_space<vmem>>, %arg13: memref<32x32xbf16, #tpu.memory_space<vmem>>, %arg14: memref<1x32xf32, #tpu.memory_space<vmem>>, %arg15: memref<2x256xf32, #tpu.memory_space<vmem>>) attributes {dimension_semantics = [#tpu.dimension_semantics<parallel>], iteration_bounds = array<i64: 1>, scalar_prefetch = 0 : i64, scratch_operands = 0 : i64, tpu.core_type = #tpu.core_type<tc>, window_params = [{transform_indices = @transform_0, window_bounds = array<i64: 2, 8, 32>}, {transform_indices = @transform_1, window_bounds = array<i64: 2, 8>}, {transform_indices = @transform_2, window_bounds = array<i64: 2, 8, 32>}, {transform_indices = @transform_3, window_bounds = array<i64: 2, 32>}, {transform_indices = @transform_4, window_bounds = array<i64: 2, 32>}, {pipeline_mode = #tpu.pipeline_mode<synchronous>, transform_indices = @transform_5, window_bounds = array<i64: 64, 128>}, {pipeline_mode = #tpu.pipeline_mode<synchronous>, transform_indices = @transform_6, window_bounds = array<i64: 1, 128>}, {pipeline_mode = #tpu.pipeline_mode<synchronous>, transform_indices = @transform_7, window_bounds = array<i64: 1, 128>}, {pipeline_mode = #tpu.pipeline_mode<synchronous>, transform_indices = @transform_8, window_bounds = array<i64: 1, 32>}, {pipeline_mode = #tpu.pipeline_mode<synchronous>, transform_indices = @transform_9, window_bounds = array<i64: 64, 96>}, {pipeline_mode = #tpu.pipeline_mode<synchronous>, transform_indices = @transform_10, window_bounds = array<i64: 1, 96>}, {pipeline_mode = #tpu.pipeline_mode<synchronous>, transform_indices = @transform_11, window_bounds = array<i64: 1, 96>}, {pipeline_mode = #tpu.pipeline_mode<synchronous>, transform_indices = @transform_12, window_bounds = array<i64: 32, 32>}, {pipeline_mode = #tpu.pipeline_mode<synchronous>, transform_indices = @transform_13, window_bounds = array<i64: 1, 32>}, {transform_indices = @transform_14, window_bounds = array<i64: 2, 256>}]} {
    %c0 = arith.constant 0 : index
    %c0_0 = arith.constant 0 : index
    %c0_1 = arith.constant 0 : index
    %0 = vector.load %arg1[%c0, %c0_0, %c0_1] : memref<2x8x32xbf16, #tpu.memory_space<vmem>>, vector<2x8x32xbf16>
    %1 = tpu.concatenate %0, %0 in 0 : vector<2x8x32xbf16>, vector<2x8x32xbf16> -> vector<4x8x32xbf16>
    %c0_2 = arith.constant 0 : index
    %c0_3 = arith.constant 0 : index
    %c0_4 = arith.constant 0 : index
    %2 = vector.load %arg3[%c0_2, %c0_3, %c0_4] : memref<2x8x32xf32, #tpu.memory_space<vmem>>, vector<2x8x32xf32>
    %3 = tpu.concatenate %2, %2 in 0 : vector<2x8x32xf32>, vector<2x8x32xf32> -> vector<4x8x32xf32>
    %c0_5 = arith.constant 0 : index
    %c0_6 = arith.constant 0 : index
    %4 = vector.load %arg2[%c0_5, %c0_6] : memref<2x8xf32, #tpu.memory_space<vmem>>, vector<2x8xf32>
    %cst = arith.constant 5.000000e-01 : f32
    %5 = vector.broadcast %cst : f32 to vector<2x8xf32>
    %6 = arith.cmpf ogt, %4, %5 : vector<2x8xf32>
    %cst_7 = arith.constant -9.99999984E+17 : f32
    %cst_8 = arith.constant 0.000000e+00 : f32
    %7 = vector.broadcast %cst_7 : f32 to vector<2x8xf32>
    %8 = vector.broadcast %cst_8 : f32 to vector<2x8xf32>
    %9 = arith.select %6, %7, %8 : vector<2x8xi1>, vector<2x8xf32>
    %10 = tpu.concatenate %9, %9 in 0 : vector<2x8xf32>, vector<2x8xf32> -> vector<4x8xf32>
    %c0_9 = arith.constant 0 : index
    %c0_10 = arith.constant 0 : index
    %11 = vector.load %arg9[%c0_9, %c0_10] : memref<1x32xf32, #tpu.memory_space<vmem>>, vector<1x32xf32>
    %12 = vector.shape_cast %11 : vector<1x32xf32> to vector<1x1x32xf32>
    %c0_11 = arith.constant 0 : index
    %c0_12 = arith.constant 0 : index
    %13 = vector.load %arg6[%c0_11, %c0_12] : memref<64x128xbf16, #tpu.memory_space<vmem>>, vector<64x128xbf16>
    %c0_13 = arith.constant 0 : index
    %c0_14 = arith.constant 0 : index
    %14 = vector.load %arg7[%c0_13, %c0_14] : memref<1x128xf32, #tpu.memory_space<vmem>>, vector<1x128xf32>
    %15 = vector.shape_cast %14 : vector<1x128xf32> to vector<1x128xf32>
    %16 = vector.broadcast %15 : vector<1x128xf32> to vector<2x128xf32>
    %c0_15 = arith.constant 0 : index
    %c0_16 = arith.constant 0 : index
    %17 = vector.load %arg8[%c0_15, %c0_16] : memref<1x128xf32, #tpu.memory_space<vmem>>, vector<1x128xf32>
    %18 = vector.shape_cast %17 : vector<1x128xf32> to vector<1x128xf32>
    %19 = vector.broadcast %18 : vector<1x128xf32> to vector<2x128xf32>
    %20 = tpu.concatenate %16, %19 in 0 : vector<2x128xf32>, vector<2x128xf32> -> vector<4x128xf32>
    %c0_17 = arith.constant 0 : index
    %c0_18 = arith.constant 0 : index
    %21 = vector.load %arg10[%c0_17, %c0_18] : memref<64x96xbf16, #tpu.memory_space<vmem>>, vector<64x96xbf16>
    %c0_19 = arith.constant 0 : index
    %c0_20 = arith.constant 0 : index
    %22 = vector.load %arg11[%c0_19, %c0_20] : memref<1x96xf32, #tpu.memory_space<vmem>>, vector<1x96xf32>
    %23 = vector.shape_cast %22 : vector<1x96xf32> to vector<1x96xf32>
    %24 = vector.broadcast %23 : vector<1x96xf32> to vector<2x96xf32>
    %c0_21 = arith.constant 0 : index
    %c0_22 = arith.constant 0 : index
    %25 = vector.load %arg12[%c0_21, %c0_22] : memref<1x96xf32, #tpu.memory_space<vmem>>, vector<1x96xf32>
    %26 = vector.shape_cast %25 : vector<1x96xf32> to vector<1x96xf32>
    %27 = vector.broadcast %26 : vector<1x96xf32> to vector<2x96xf32>
    %28 = tpu.concatenate %24, %27 in 0 : vector<2x96xf32>, vector<2x96xf32> -> vector<4x96xf32>
    %c0_23 = arith.constant 0 : index
    %c0_24 = arith.constant 0 : index
    %29 = vector.load %arg13[%c0_23, %c0_24] : memref<32x32xbf16, #tpu.memory_space<vmem>>, vector<32x32xbf16>
    %c0_25 = arith.constant 0 : index
    %c0_26 = arith.constant 0 : index
    %30 = vector.load %arg14[%c0_25, %c0_26] : memref<1x32xf32, #tpu.memory_space<vmem>>, vector<1x32xf32>
    %cst_27 = arith.constant 1.000000e+00 : f32
    %31 = vector.broadcast %cst_27 : f32 to vector<2x1xf32>
    %cst_28 = arith.constant 0.000000e+00 : f32
    %32 = vector.broadcast %cst_28 : f32 to vector<2x1xf32>
    %33 = tpu.concatenate %31, %32 in 0 : vector<2x1xf32>, vector<2x1xf32> -> vector<4x1xf32>
    %34 = tpu.concatenate %32, %31 in 0 : vector<2x1xf32>, vector<2x1xf32> -> vector<4x1xf32>
    %c0_29 = arith.constant 0 : index
    %c0_30 = arith.constant 0 : index
    %35 = vector.load %arg5[%c0_29, %c0_30] : memref<2x32xf32, #tpu.memory_space<vmem>>, vector<2x32xf32>
    %c0_31 = arith.constant 0 : index
    %c0_32 = arith.constant 0 : index
    %36 = vector.load %arg15[%c0_31, %c0_32] : memref<2x256xf32, #tpu.memory_space<vmem>>, vector<2x32xf32>
    tpu.vector_store %arg15[%c0_31, %c0_32], %35 {strides = array<i32>} : memref<2x256xf32, #tpu.memory_space<vmem>>, vector<2x32xf32>,
    %c0_33 = arith.constant 0 : index
    %c0_34 = arith.constant 0 : index
    %37 = vector.load %arg4[%c0_33, %c0_34] : memref<2x32xf32, #tpu.memory_space<vmem>>, vector<2x32xf32>
    %38 = tpu.concatenate %37, %37 in 0 : vector<2x32xf32>, vector<2x32xf32> -> vector<4x32xf32>
    %39 = vector.broadcast %33 : vector<4x1xf32> to vector<4x32xf32>
    %40 = arith.mulf %38, %39 : vector<4x32xf32>
    %41 = vector.broadcast %34 : vector<4x1xf32> to vector<4x32xf32>
    %42 = arith.mulf %38, %41 : vector<4x32xf32>
    %43 = tpu.concatenate %40, %42 in 1 : vector<4x32xf32>, vector<4x32xf32> -> vector<4x64xf32>
    %44 = arith.truncf %43 : vector<4x64xf32> to vector<4x64xbf16>
    %cst_35 = arith.constant dense<0.000000e+00> : vector<4x128xf32>
    %45 = tpu.matmul %44, %13, %cst_35 {dimension_numbers = #tpu.dot_dimension_numbers<[1], [0], [0], [1], [0, 0, 1, 1], [], []>} : vector<4x64xbf16>, vector<64x128xbf16>, vector<4x128xf32> -> vector<4x128xf32>
    %46 = arith.addf %45, %20 : vector<4x128xf32>
    %47 = vector.extract_strided_slice %46 {offsets = [0, 0], sizes = [4, 32], strides = [1, 1]} : vector<4x128xf32> to vector<4x32xf32>
    %48 = vector.extract_strided_slice %46 {offsets = [0, 32], sizes = [4, 96], strides = [1, 1]} : vector<4x128xf32> to vector<4x96xf32>
    %49 = vector.shape_cast %47 : vector<4x32xf32> to vector<4x1x32xf32>
    %50 = vector.broadcast %49 : vector<4x1x32xf32> to vector<4x8x32xf32>
    %51 = arith.addf %50, %3 : vector<4x8x32xf32>
    %52 = math.tanh %51 : vector<4x8x32xf32>
    %53 = vector.broadcast %12 : vector<1x1x32xf32> to vector<4x8x32xf32>
    %54 = arith.mulf %52, %53 : vector<4x8x32xf32>
    %cst_36 = arith.constant dense<0.000000e+00> : vector<4x8xf32>
    %55 = vector.multi_reduction <add>, %54, %cst_36 [2] : vector<4x8x32xf32> to vector<4x8xf32>
    %56 = arith.addf %55, %10 : vector<4x8xf32>
    %cst_37 = arith.constant dense<0xFF800000> : vector<4xf32>
    %57 = vector.multi_reduction <maximumf>, %56, %cst_37 [1] : vector<4x8xf32> to vector<4xf32>
    %58 = vector.shape_cast %57 : vector<4xf32> to vector<4x1xf32>
    %59 = vector.broadcast %58 : vector<4x1xf32> to vector<4x8xf32>
    %60 = arith.subf %56, %59 : vector<4x8xf32>
    %61 = math.exp %60 : vector<4x8xf32>
    %cst_38 = arith.constant dense<0.000000e+00> : vector<4xf32>
    %62 = vector.multi_reduction <add>, %61, %cst_38 [1] : vector<4x8xf32> to vector<4xf32>
    %63 = vector.shape_cast %62 : vector<4xf32> to vector<4x1xf32>
    %64 = tpu.reciprocal %63 {approx = true} : vector<4x1xf32> -> vector<4x1xf32>
    %65 = vector.broadcast %64 : vector<4x1xf32> to vector<4x8xf32>
    %66 = arith.mulf %61, %65 : vector<4x8xf32>
    %67 = vector.shape_cast %66 : vector<4x8xf32> to vector<4x1x8xf32>
    %68 = arith.truncf %67 : vector<4x1x8xf32> to vector<4x1x8xbf16>
    "tpu.trace_start"() <{level = 10 : i32, message = "bqs,bsc->bqc"}> : () -> ()
    %cst_39 = arith.constant dense<0.000000e+00> : vector<4x1x32xf32>
    %69 = tpu.matmul %68, %1, %cst_39 {dimension_numbers = #tpu.dot_dimension_numbers<[2], [1], [1], [2], [0, 0, 0, 1, 1, 2], [0], [0]>} : vector<4x1x8xbf16>, vector<4x8x32xbf16>, vector<4x1x32xf32> -> vector<4x1x32xf32>
    "tpu.trace_stop"() : () -> ()
    %70 = vector.shape_cast %69 : vector<4x1x32xf32> to vector<4x32xf32>
    %71 = vector.broadcast %33 : vector<4x1xf32> to vector<4x32xf32>
    %72 = arith.mulf %70, %71 : vector<4x32xf32>
    %73 = vector.broadcast %34 : vector<4x1xf32> to vector<4x32xf32>
    %74 = arith.mulf %70, %73 : vector<4x32xf32>
    %75 = tpu.concatenate %72, %74 in 1 : vector<4x32xf32>, vector<4x32xf32> -> vector<4x64xf32>
    %76 = arith.truncf %75 : vector<4x64xf32> to vector<4x64xbf16>
    %cst_40 = arith.constant dense<0.000000e+00> : vector<4x96xf32>
    %77 = tpu.matmul %76, %21, %cst_40 {dimension_numbers = #tpu.dot_dimension_numbers<[1], [0], [0], [1], [0, 0, 1, 1], [], []>} : vector<4x64xbf16>, vector<64x96xbf16>, vector<4x96xf32> -> vector<4x96xf32>
    %78 = arith.addf %77, %28 : vector<4x96xf32>
    %79 = vector.extract_strided_slice %78 {offsets = [0, 0], sizes = [4, 32], strides = [1, 1]} : vector<4x96xf32> to vector<4x32xf32>
    %80 = vector.extract_strided_slice %48 {offsets = [0, 0], sizes = [4, 32], strides = [1, 1]} : vector<4x96xf32> to vector<4x32xf32>
    %81 = arith.addf %79, %80 : vector<4x32xf32>
    %82 = arith.negf %81 : vector<4x32xf32>
    %83 = math.exp %82 : vector<4x32xf32>
    %cst_41 = arith.constant 1.000000e+00 : f32
    %84 = vector.broadcast %cst_41 : f32 to vector<4x32xf32>
    %85 = arith.addf %84, %83 : vector<4x32xf32>
    %86 = arith.divf %84, %85 : vector<4x32xf32>
    %87 = vector.extract_strided_slice %78 {offsets = [0, 32], sizes = [4, 32], strides = [1, 1]} : vector<4x96xf32> to vector<4x32xf32>
    %88 = vector.extract_strided_slice %48 {offsets = [0, 32], sizes = [4, 32], strides = [1, 1]} : vector<4x96xf32> to vector<4x32xf32>
    %89 = arith.addf %87, %88 : vector<4x32xf32>
    %90 = arith.negf %89 : vector<4x32xf32>
    %91 = math.exp %90 : vector<4x32xf32>
    %cst_42 = arith.constant 1.000000e+00 : f32
    %92 = vector.broadcast %cst_42 : f32 to vector<4x32xf32>
    %93 = arith.addf %92, %91 : vector<4x32xf32>
    %94 = arith.divf %92, %93 : vector<4x32xf32>
    %95 = vector.extract_strided_slice %78 {offsets = [0, 64], sizes = [4, 32], strides = [1, 1]} : vector<4x96xf32> to vector<4x32xf32>
    %96 = vector.extract_strided_slice %48 {offsets = [0, 64], sizes = [4, 32], strides = [1, 1]} : vector<4x96xf32> to vector<4x32xf32>
    %97 = arith.mulf %86, %96 : vector<4x32xf32>
    %98 = arith.addf %95, %97 : vector<4x32xf32>
    %99 = math.tanh %98 : vector<4x32xf32>
    %cst_43 = arith.constant 1.000000e+00 : f32
    %100 = vector.broadcast %cst_43 : f32 to vector<4x32xf32>
    %101 = arith.subf %100, %94 : vector<4x32xf32>
    %102 = arith.mulf %101, %99 : vector<4x32xf32>
    %103 = arith.mulf %94, %38 : vector<4x32xf32>
    %104 = arith.addf %102, %103 : vector<4x32xf32>
    %105 = arith.truncf %104 : vector<4x32xf32> to vector<4x32xbf16>
    %cst_44 = arith.constant dense<0.000000e+00> : vector<4x32xf32>
    %106 = tpu.matmul %105, %29, %cst_44 {dimension_numbers = #tpu.dot_dimension_numbers<[1], [0], [0], [1], [0, 0, 1, 1], [], []>} : vector<4x32xbf16>, vector<32x32xbf16>, vector<4x32xf32> -> vector<4x32xf32>
    %107 = vector.broadcast %30 : vector<1x32xf32> to vector<4x32xf32>
    %108 = arith.addf %106, %107 : vector<4x32xf32>
    %109 = vector.extract_strided_slice %108 {offsets = [0, 0], sizes = [2, 32], strides = [1, 1]} : vector<4x32xf32> to vector<2x32xf32>
    %c0_45 = arith.constant 0 : index
    %c32 = arith.constant 32 : index
    %110 = vector.load %arg15[%c0_45, %c32] : memref<2x256xf32, #tpu.memory_space<vmem>>, vector<2x32xf32>
    tpu.vector_store %arg15[%c0_45, %c32], %109 {strides = array<i32>} : memref<2x256xf32, #tpu.memory_space<vmem>>, vector<2x32xf32>,
    %111 = vector.extract_strided_slice %108 {offsets = [2, 0], sizes = [2, 32], strides = [1, 1]} : vector<4x32xf32> to vector<2x32xf32>
    %c0_46 = arith.constant 0 : index
    %c64 = arith.constant 64 : index
    %112 = vector.load %arg15[%c0_46, %c64] : memref<2x256xf32, #tpu.memory_space<vmem>>, vector<2x32xf32>
    tpu.vector_store %arg15[%c0_46, %c64], %111 {strides = array<i32>} : memref<2x256xf32, #tpu.memory_space<vmem>>, vector<2x32xf32>,
    %113 = vector.broadcast %33 : vector<4x1xf32> to vector<4x32xf32>
    %114 = arith.mulf %104, %113 : vector<4x32xf32>
    %115 = vector.broadcast %34 : vector<4x1xf32> to vector<4x32xf32>
    %116 = arith.mulf %104, %115 : vector<4x32xf32>
    %117 = tpu.concatenate %114, %116 in 1 : vector<4x32xf32>, vector<4x32xf32> -> vector<4x64xf32>
    %118 = arith.truncf %117 : vector<4x64xf32> to vector<4x64xbf16>
    %cst_47 = arith.constant dense<0.000000e+00> : vector<4x128xf32>
    %119 = tpu.matmul %118, %13, %cst_47 {dimension_numbers = #tpu.dot_dimension_numbers<[1], [0], [0], [1], [0, 0, 1, 1], [], []>} : vector<4x64xbf16>, vector<64x128xbf16>, vector<4x128xf32> -> vector<4x128xf32>
    %120 = arith.addf %119, %20 : vector<4x128xf32>
    %121 = vector.extract_strided_slice %120 {offsets = [0, 0], sizes = [4, 32], strides = [1, 1]} : vector<4x128xf32> to vector<4x32xf32>
    %122 = vector.extract_strided_slice %120 {offsets = [0, 32], sizes = [4, 96], strides = [1, 1]} : vector<4x128xf32> to vector<4x96xf32>
    %123 = vector.shape_cast %121 : vector<4x32xf32> to vector<4x1x32xf32>
    %124 = vector.broadcast %123 : vector<4x1x32xf32> to vector<4x8x32xf32>
    %125 = arith.addf %124, %3 : vector<4x8x32xf32>
    %126 = math.tanh %125 : vector<4x8x32xf32>
    %127 = vector.broadcast %12 : vector<1x1x32xf32> to vector<4x8x32xf32>
    %128 = arith.mulf %126, %127 : vector<4x8x32xf32>
    %cst_48 = arith.constant dense<0.000000e+00> : vector<4x8xf32>
    %129 = vector.multi_reduction <add>, %128, %cst_48 [2] : vector<4x8x32xf32> to vector<4x8xf32>
    %130 = arith.addf %129, %10 : vector<4x8xf32>
    %cst_49 = arith.constant dense<0xFF800000> : vector<4xf32>
    %131 = vector.multi_reduction <maximumf>, %130, %cst_49 [1] : vector<4x8xf32> to vector<4xf32>
    %132 = vector.shape_cast %131 : vector<4xf32> to vector<4x1xf32>
    %133 = vector.broadcast %132 : vector<4x1xf32> to vector<4x8xf32>
    %134 = arith.subf %130, %133 : vector<4x8xf32>
    %135 = math.exp %134 : vector<4x8xf32>
    %cst_50 = arith.constant dense<0.000000e+00> : vector<4xf32>
    %136 = vector.multi_reduction <add>, %135, %cst_50 [1] : vector<4x8xf32> to vector<4xf32>
    %137 = vector.shape_cast %136 : vector<4xf32> to vector<4x1xf32>
    %138 = tpu.reciprocal %137 {approx = true} : vector<4x1xf32> -> vector<4x1xf32>
    %139 = vector.broadcast %138 : vector<4x1xf32> to vector<4x8xf32>
    %140 = arith.mulf %135, %139 : vector<4x8xf32>
    %141 = vector.shape_cast %140 : vector<4x8xf32> to vector<4x1x8xf32>
    %142 = arith.truncf %141 : vector<4x1x8xf32> to vector<4x1x8xbf16>
    "tpu.trace_start"() <{level = 10 : i32, message = "bqs,bsc->bqc"}> : () -> ()
    %cst_51 = arith.constant dense<0.000000e+00> : vector<4x1x32xf32>
    %143 = tpu.matmul %142, %1, %cst_51 {dimension_numbers = #tpu.dot_dimension_numbers<[2], [1], [1], [2], [0, 0, 0, 1, 1, 2], [0], [0]>} : vector<4x1x8xbf16>, vector<4x8x32xbf16>, vector<4x1x32xf32> -> vector<4x1x32xf32>
    "tpu.trace_stop"() : () -> ()
    %144 = vector.shape_cast %143 : vector<4x1x32xf32> to vector<4x32xf32>
    %145 = vector.broadcast %33 : vector<4x1xf32> to vector<4x32xf32>
    %146 = arith.mulf %144, %145 : vector<4x32xf32>
    %147 = vector.broadcast %34 : vector<4x1xf32> to vector<4x32xf32>
    %148 = arith.mulf %144, %147 : vector<4x32xf32>
    %149 = tpu.concatenate %146, %148 in 1 : vector<4x32xf32>, vector<4x32xf32> -> vector<4x64xf32>
    %150 = arith.truncf %149 : vector<4x64xf32> to vector<4x64xbf16>
    %cst_52 = arith.constant dense<0.000000e+00> : vector<4x96xf32>
    %151 = tpu.matmul %150, %21, %cst_52 {dimension_numbers = #tpu.dot_dimension_numbers<[1], [0], [0], [1], [0, 0, 1, 1], [], []>} : vector<4x64xbf16>, vector<64x96xbf16>, vector<4x96xf32> -> vector<4x96xf32>
    %152 = arith.addf %151, %28 : vector<4x96xf32>
    %153 = vector.extract_strided_slice %152 {offsets = [0, 0], sizes = [4, 32], strides = [1, 1]} : vector<4x96xf32> to vector<4x32xf32>
    %154 = vector.extract_strided_slice %122 {offsets = [0, 0], sizes = [4, 32], strides = [1, 1]} : vector<4x96xf32> to vector<4x32xf32>
    %155 = arith.addf %153, %154 : vector<4x32xf32>
    %156 = arith.negf %155 : vector<4x32xf32>
    %157 = math.exp %156 : vector<4x32xf32>
    %cst_53 = arith.constant 1.000000e+00 : f32
    %158 = vector.broadcast %cst_53 : f32 to vector<4x32xf32>
    %159 = arith.addf %158, %157 : vector<4x32xf32>
    %160 = arith.divf %158, %159 : vector<4x32xf32>
    %161 = vector.extract_strided_slice %152 {offsets = [0, 32], sizes = [4, 32], strides = [1, 1]} : vector<4x96xf32> to vector<4x32xf32>
    %162 = vector.extract_strided_slice %122 {offsets = [0, 32], sizes = [4, 32], strides = [1, 1]} : vector<4x96xf32> to vector<4x32xf32>
    %163 = arith.addf %161, %162 : vector<4x32xf32>
    %164 = arith.negf %163 : vector<4x32xf32>
    %165 = math.exp %164 : vector<4x32xf32>
    %cst_54 = arith.constant 1.000000e+00 : f32
    %166 = vector.broadcast %cst_54 : f32 to vector<4x32xf32>
    %167 = arith.addf %166, %165 : vector<4x32xf32>
    %168 = arith.divf %166, %167 : vector<4x32xf32>
    %169 = vector.extract_strided_slice %152 {offsets = [0, 64], sizes = [4, 32], strides = [1, 1]} : vector<4x96xf32> to vector<4x32xf32>
    %170 = vector.extract_strided_slice %122 {offsets = [0, 64], sizes = [4, 32], strides = [1, 1]} : vector<4x96xf32> to vector<4x32xf32>
    %171 = arith.mulf %160, %170 : vector<4x32xf32>
    %172 = arith.addf %169, %171 : vector<4x32xf32>
    %173 = math.tanh %172 : vector<4x32xf32>
    %cst_55 = arith.constant 1.000000e+00 : f32
    %174 = vector.broadcast %cst_55 : f32 to vector<4x32xf32>
    %175 = arith.subf %174, %168 : vector<4x32xf32>
    %176 = arith.mulf %175, %173 : vector<4x32xf32>
    %177 = arith.mulf %168, %104 : vector<4x32xf32>
    %178 = arith.addf %176, %177 : vector<4x32xf32>
    %179 = arith.truncf %178 : vector<4x32xf32> to vector<4x32xbf16>
    %cst_56 = arith.constant dense<0.000000e+00> : vector<4x32xf32>
    %180 = tpu.matmul %179, %29, %cst_56 {dimension_numbers = #tpu.dot_dimension_numbers<[1], [0], [0], [1], [0, 0, 1, 1], [], []>} : vector<4x32xbf16>, vector<32x32xbf16>, vector<4x32xf32> -> vector<4x32xf32>
    %181 = vector.broadcast %30 : vector<1x32xf32> to vector<4x32xf32>
    %182 = arith.addf %180, %181 : vector<4x32xf32>
    %183 = vector.extract_strided_slice %182 {offsets = [0, 0], sizes = [2, 32], strides = [1, 1]} : vector<4x32xf32> to vector<2x32xf32>
    %c0_57 = arith.constant 0 : index
    %c96 = arith.constant 96 : index
    %184 = vector.load %arg15[%c0_57, %c96] : memref<2x256xf32, #tpu.memory_space<vmem>>, vector<2x32xf32>
    tpu.vector_store %arg15[%c0_57, %c96], %183 {strides = array<i32>} : memref<2x256xf32, #tpu.memory_space<vmem>>, vector<2x32xf32>,
    %185 = vector.extract_strided_slice %182 {offsets = [2, 0], sizes = [2, 32], strides = [1, 1]} : vector<4x32xf32> to vector<2x32xf32>
    %c0_58 = arith.constant 0 : index
    %c128 = arith.constant 128 : index
    %186 = vector.load %arg15[%c0_58, %c128] : memref<2x256xf32, #tpu.memory_space<vmem>>, vector<2x32xf32>
    tpu.vector_store %arg15[%c0_58, %c128], %185 {strides = array<i32>} : memref<2x256xf32, #tpu.memory_space<vmem>>, vector<2x32xf32>,
    %187 = vector.broadcast %33 : vector<4x1xf32> to vector<4x32xf32>
    %188 = arith.mulf %178, %187 : vector<4x32xf32>
    %189 = vector.broadcast %34 : vector<4x1xf32> to vector<4x32xf32>
    %190 = arith.mulf %178, %189 : vector<4x32xf32>
    %191 = tpu.concatenate %188, %190 in 1 : vector<4x32xf32>, vector<4x32xf32> -> vector<4x64xf32>
    %192 = arith.truncf %191 : vector<4x64xf32> to vector<4x64xbf16>
    %cst_59 = arith.constant dense<0.000000e+00> : vector<4x128xf32>
    %193 = tpu.matmul %192, %13, %cst_59 {dimension_numbers = #tpu.dot_dimension_numbers<[1], [0], [0], [1], [0, 0, 1, 1], [], []>} : vector<4x64xbf16>, vector<64x128xbf16>, vector<4x128xf32> -> vector<4x128xf32>
    %194 = arith.addf %193, %20 : vector<4x128xf32>
    %195 = vector.extract_strided_slice %194 {offsets = [0, 0], sizes = [4, 32], strides = [1, 1]} : vector<4x128xf32> to vector<4x32xf32>
    %196 = vector.extract_strided_slice %194 {offsets = [0, 32], sizes = [4, 96], strides = [1, 1]} : vector<4x128xf32> to vector<4x96xf32>
    %197 = vector.shape_cast %195 : vector<4x32xf32> to vector<4x1x32xf32>
    %198 = vector.broadcast %197 : vector<4x1x32xf32> to vector<4x8x32xf32>
    %199 = arith.addf %198, %3 : vector<4x8x32xf32>
    %200 = math.tanh %199 : vector<4x8x32xf32>
    %201 = vector.broadcast %12 : vector<1x1x32xf32> to vector<4x8x32xf32>
    %202 = arith.mulf %200, %201 : vector<4x8x32xf32>
    %cst_60 = arith.constant dense<0.000000e+00> : vector<4x8xf32>
    %203 = vector.multi_reduction <add>, %202, %cst_60 [2] : vector<4x8x32xf32> to vector<4x8xf32>
    %204 = arith.addf %203, %10 : vector<4x8xf32>
    %cst_61 = arith.constant dense<0xFF800000> : vector<4xf32>
    %205 = vector.multi_reduction <maximumf>, %204, %cst_61 [1] : vector<4x8xf32> to vector<4xf32>
    %206 = vector.shape_cast %205 : vector<4xf32> to vector<4x1xf32>
    %207 = vector.broadcast %206 : vector<4x1xf32> to vector<4x8xf32>
    %208 = arith.subf %204, %207 : vector<4x8xf32>
    %209 = math.exp %208 : vector<4x8xf32>
    %cst_62 = arith.constant dense<0.000000e+00> : vector<4xf32>
    %210 = vector.multi_reduction <add>, %209, %cst_62 [1] : vector<4x8xf32> to vector<4xf32>
    %211 = vector.shape_cast %210 : vector<4xf32> to vector<4x1xf32>
    %212 = tpu.reciprocal %211 {approx = true} : vector<4x1xf32> -> vector<4x1xf32>
    %213 = vector.broadcast %212 : vector<4x1xf32> to vector<4x8xf32>
    %214 = arith.mulf %209, %213 : vector<4x8xf32>
    %215 = vector.shape_cast %214 : vector<4x8xf32> to vector<4x1x8xf32>
    %216 = arith.truncf %215 : vector<4x1x8xf32> to vector<4x1x8xbf16>
    "tpu.trace_start"() <{level = 10 : i32, message = "bqs,bsc->bqc"}> : () -> ()
    %cst_63 = arith.constant dense<0.000000e+00> : vector<4x1x32xf32>
    %217 = tpu.matmul %216, %1, %cst_63 {dimension_numbers = #tpu.dot_dimension_numbers<[2], [1], [1], [2], [0, 0, 0, 1, 1, 2], [0], [0]>} : vector<4x1x8xbf16>, vector<4x8x32xbf16>, vector<4x1x32xf32> -> vector<4x1x32xf32>
    "tpu.trace_stop"() : () -> ()
    %218 = vector.shape_cast %217 : vector<4x1x32xf32> to vector<4x32xf32>
    %219 = vector.broadcast %33 : vector<4x1xf32> to vector<4x32xf32>
    %220 = arith.mulf %218, %219 : vector<4x32xf32>
    %221 = vector.broadcast %34 : vector<4x1xf32> to vector<4x32xf32>
    %222 = arith.mulf %218, %221 : vector<4x32xf32>
    %223 = tpu.concatenate %220, %222 in 1 : vector<4x32xf32>, vector<4x32xf32> -> vector<4x64xf32>
    %224 = arith.truncf %223 : vector<4x64xf32> to vector<4x64xbf16>
    %cst_64 = arith.constant dense<0.000000e+00> : vector<4x96xf32>
    %225 = tpu.matmul %224, %21, %cst_64 {dimension_numbers = #tpu.dot_dimension_numbers<[1], [0], [0], [1], [0, 0, 1, 1], [], []>} : vector<4x64xbf16>, vector<64x96xbf16>, vector<4x96xf32> -> vector<4x96xf32>
    %226 = arith.addf %225, %28 : vector<4x96xf32>
    %227 = vector.extract_strided_slice %226 {offsets = [0, 0], sizes = [4, 32], strides = [1, 1]} : vector<4x96xf32> to vector<4x32xf32>
    %228 = vector.extract_strided_slice %196 {offsets = [0, 0], sizes = [4, 32], strides = [1, 1]} : vector<4x96xf32> to vector<4x32xf32>
    %229 = arith.addf %227, %228 : vector<4x32xf32>
    %230 = arith.negf %229 : vector<4x32xf32>
    %231 = math.exp %230 : vector<4x32xf32>
    %cst_65 = arith.constant 1.000000e+00 : f32
    %232 = vector.broadcast %cst_65 : f32 to vector<4x32xf32>
    %233 = arith.addf %232, %231 : vector<4x32xf32>
    %234 = arith.divf %232, %233 : vector<4x32xf32>
    %235 = vector.extract_strided_slice %226 {offsets = [0, 32], sizes = [4, 32], strides = [1, 1]} : vector<4x96xf32> to vector<4x32xf32>
    %236 = vector.extract_strided_slice %196 {offsets = [0, 32], sizes = [4, 32], strides = [1, 1]} : vector<4x96xf32> to vector<4x32xf32>
    %237 = arith.addf %235, %236 : vector<4x32xf32>
    %238 = arith.negf %237 : vector<4x32xf32>
    %239 = math.exp %238 : vector<4x32xf32>
    %cst_66 = arith.constant 1.000000e+00 : f32
    %240 = vector.broadcast %cst_66 : f32 to vector<4x32xf32>
    %241 = arith.addf %240, %239 : vector<4x32xf32>
    %242 = arith.divf %240, %241 : vector<4x32xf32>
    %243 = vector.extract_strided_slice %226 {offsets = [0, 64], sizes = [4, 32], strides = [1, 1]} : vector<4x96xf32> to vector<4x32xf32>
    %244 = vector.extract_strided_slice %196 {offsets = [0, 64], sizes = [4, 32], strides = [1, 1]} : vector<4x96xf32> to vector<4x32xf32>
    %245 = arith.mulf %234, %244 : vector<4x32xf32>
    %246 = arith.addf %243, %245 : vector<4x32xf32>
    %247 = math.tanh %246 : vector<4x32xf32>
    %cst_67 = arith.constant 1.000000e+00 : f32
    %248 = vector.broadcast %cst_67 : f32 to vector<4x32xf32>
    %249 = arith.subf %248, %242 : vector<4x32xf32>
    %250 = arith.mulf %249, %247 : vector<4x32xf32>
    %251 = arith.mulf %242, %178 : vector<4x32xf32>
    %252 = arith.addf %250, %251 : vector<4x32xf32>
    %253 = arith.truncf %252 : vector<4x32xf32> to vector<4x32xbf16>
    %cst_68 = arith.constant dense<0.000000e+00> : vector<4x32xf32>
    %254 = tpu.matmul %253, %29, %cst_68 {dimension_numbers = #tpu.dot_dimension_numbers<[1], [0], [0], [1], [0, 0, 1, 1], [], []>} : vector<4x32xbf16>, vector<32x32xbf16>, vector<4x32xf32> -> vector<4x32xf32>
    %255 = vector.broadcast %30 : vector<1x32xf32> to vector<4x32xf32>
    %256 = arith.addf %254, %255 : vector<4x32xf32>
    %257 = vector.extract_strided_slice %256 {offsets = [0, 0], sizes = [2, 32], strides = [1, 1]} : vector<4x32xf32> to vector<2x32xf32>
    %c0_69 = arith.constant 0 : index
    %c160 = arith.constant 160 : index
    %258 = vector.load %arg15[%c0_69, %c160] : memref<2x256xf32, #tpu.memory_space<vmem>>, vector<2x32xf32>
    tpu.vector_store %arg15[%c0_69, %c160], %257 {strides = array<i32>} : memref<2x256xf32, #tpu.memory_space<vmem>>, vector<2x32xf32>,
    %259 = vector.extract_strided_slice %256 {offsets = [2, 0], sizes = [2, 32], strides = [1, 1]} : vector<4x32xf32> to vector<2x32xf32>
    %c0_70 = arith.constant 0 : index
    %c192 = arith.constant 192 : index
    %260 = vector.load %arg15[%c0_70, %c192] : memref<2x256xf32, #tpu.memory_space<vmem>>, vector<2x32xf32>
    tpu.vector_store %arg15[%c0_70, %c192], %259 {strides = array<i32>} : memref<2x256xf32, #tpu.memory_space<vmem>>, vector<2x32xf32>,
    %261 = vector.broadcast %33 : vector<4x1xf32> to vector<4x32xf32>
    %262 = arith.mulf %252, %261 : vector<4x32xf32>
    %263 = vector.broadcast %34 : vector<4x1xf32> to vector<4x32xf32>
    %264 = arith.mulf %252, %263 : vector<4x32xf32>
    %265 = tpu.concatenate %262, %264 in 1 : vector<4x32xf32>, vector<4x32xf32> -> vector<4x64xf32>
    %266 = arith.truncf %265 : vector<4x64xf32> to vector<4x64xbf16>
    %cst_71 = arith.constant dense<0.000000e+00> : vector<4x128xf32>
    %267 = tpu.matmul %266, %13, %cst_71 {dimension_numbers = #tpu.dot_dimension_numbers<[1], [0], [0], [1], [0, 0, 1, 1], [], []>} : vector<4x64xbf16>, vector<64x128xbf16>, vector<4x128xf32> -> vector<4x128xf32>
    %268 = arith.addf %267, %20 : vector<4x128xf32>
    %269 = vector.extract_strided_slice %268 {offsets = [0, 0], sizes = [4, 32], strides = [1, 1]} : vector<4x128xf32> to vector<4x32xf32>
    %270 = vector.extract_strided_slice %268 {offsets = [0, 32], sizes = [4, 96], strides = [1, 1]} : vector<4x128xf32> to vector<4x96xf32>
    %271 = vector.shape_cast %269 : vector<4x32xf32> to vector<4x1x32xf32>
    %272 = vector.broadcast %271 : vector<4x1x32xf32> to vector<4x8x32xf32>
    %273 = arith.addf %272, %3 : vector<4x8x32xf32>
    %274 = math.tanh %273 : vector<4x8x32xf32>
    %275 = vector.broadcast %12 : vector<1x1x32xf32> to vector<4x8x32xf32>
    %276 = arith.mulf %274, %275 : vector<4x8x32xf32>
    %cst_72 = arith.constant dense<0.000000e+00> : vector<4x8xf32>
    %277 = vector.multi_reduction <add>, %276, %cst_72 [2] : vector<4x8x32xf32> to vector<4x8xf32>
    %278 = arith.addf %277, %10 : vector<4x8xf32>
    %cst_73 = arith.constant dense<0xFF800000> : vector<4xf32>
    %279 = vector.multi_reduction <maximumf>, %278, %cst_73 [1] : vector<4x8xf32> to vector<4xf32>
    %280 = vector.shape_cast %279 : vector<4xf32> to vector<4x1xf32>
    %281 = vector.broadcast %280 : vector<4x1xf32> to vector<4x8xf32>
    %282 = arith.subf %278, %281 : vector<4x8xf32>
    %283 = math.exp %282 : vector<4x8xf32>
    %cst_74 = arith.constant dense<0.000000e+00> : vector<4xf32>
    %284 = vector.multi_reduction <add>, %283, %cst_74 [1] : vector<4x8xf32> to vector<4xf32>
    %285 = vector.shape_cast %284 : vector<4xf32> to vector<4x1xf32>
    %286 = tpu.reciprocal %285 {approx = true} : vector<4x1xf32> -> vector<4x1xf32>
    %287 = vector.broadcast %286 : vector<4x1xf32> to vector<4x8xf32>
    %288 = arith.mulf %283, %287 : vector<4x8xf32>
    %289 = vector.shape_cast %288 : vector<4x8xf32> to vector<4x1x8xf32>
    %290 = arith.truncf %289 : vector<4x1x8xf32> to vector<4x1x8xbf16>
    "tpu.trace_start"() <{level = 10 : i32, message = "bqs,bsc->bqc"}> : () -> ()
    %cst_75 = arith.constant dense<0.000000e+00> : vector<4x1x32xf32>
    %291 = tpu.matmul %290, %1, %cst_75 {dimension_numbers = #tpu.dot_dimension_numbers<[2], [1], [1], [2], [0, 0, 0, 1, 1, 2], [0], [0]>} : vector<4x1x8xbf16>, vector<4x8x32xbf16>, vector<4x1x32xf32> -> vector<4x1x32xf32>
    "tpu.trace_stop"() : () -> ()
    %292 = vector.shape_cast %291 : vector<4x1x32xf32> to vector<4x32xf32>
    %293 = vector.broadcast %33 : vector<4x1xf32> to vector<4x32xf32>
    %294 = arith.mulf %292, %293 : vector<4x32xf32>
    %295 = vector.broadcast %34 : vector<4x1xf32> to vector<4x32xf32>
    %296 = arith.mulf %292, %295 : vector<4x32xf32>
    %297 = tpu.concatenate %294, %296 in 1 : vector<4x32xf32>, vector<4x32xf32> -> vector<4x64xf32>
    %298 = arith.truncf %297 : vector<4x64xf32> to vector<4x64xbf16>
    %cst_76 = arith.constant dense<0.000000e+00> : vector<4x96xf32>
    %299 = tpu.matmul %298, %21, %cst_76 {dimension_numbers = #tpu.dot_dimension_numbers<[1], [0], [0], [1], [0, 0, 1, 1], [], []>} : vector<4x64xbf16>, vector<64x96xbf16>, vector<4x96xf32> -> vector<4x96xf32>
    %300 = arith.addf %299, %28 : vector<4x96xf32>
    %301 = vector.extract_strided_slice %300 {offsets = [0, 0], sizes = [4, 32], strides = [1, 1]} : vector<4x96xf32> to vector<4x32xf32>
    %302 = vector.extract_strided_slice %270 {offsets = [0, 0], sizes = [4, 32], strides = [1, 1]} : vector<4x96xf32> to vector<4x32xf32>
    %303 = arith.addf %301, %302 : vector<4x32xf32>
    %304 = arith.negf %303 : vector<4x32xf32>
    %305 = math.exp %304 : vector<4x32xf32>
    %cst_77 = arith.constant 1.000000e+00 : f32
    %306 = vector.broadcast %cst_77 : f32 to vector<4x32xf32>
    %307 = arith.addf %306, %305 : vector<4x32xf32>
    %308 = arith.divf %306, %307 : vector<4x32xf32>
    %309 = vector.extract_strided_slice %300 {offsets = [0, 32], sizes = [4, 32], strides = [1, 1]} : vector<4x96xf32> to vector<4x32xf32>
    %310 = vector.extract_strided_slice %270 {offsets = [0, 32], sizes = [4, 32], strides = [1, 1]} : vector<4x96xf32> to vector<4x32xf32>
    %311 = arith.addf %309, %310 : vector<4x32xf32>
    %312 = arith.negf %311 : vector<4x32xf32>
    %313 = math.exp %312 : vector<4x32xf32>
    %cst_78 = arith.constant 1.000000e+00 : f32
    %314 = vector.broadcast %cst_78 : f32 to vector<4x32xf32>
    %315 = arith.addf %314, %313 : vector<4x32xf32>
    %316 = arith.divf %314, %315 : vector<4x32xf32>
    %317 = vector.extract_strided_slice %300 {offsets = [0, 64], sizes = [4, 32], strides = [1, 1]} : vector<4x96xf32> to vector<4x32xf32>
    %318 = vector.extract_strided_slice %270 {offsets = [0, 64], sizes = [4, 32], strides = [1, 1]} : vector<4x96xf32> to vector<4x32xf32>
    %319 = arith.mulf %308, %318 : vector<4x32xf32>
    %320 = arith.addf %317, %319 : vector<4x32xf32>
    %321 = math.tanh %320 : vector<4x32xf32>
    %cst_79 = arith.constant 1.000000e+00 : f32
    %322 = vector.broadcast %cst_79 : f32 to vector<4x32xf32>
    %323 = arith.subf %322, %316 : vector<4x32xf32>
    %324 = arith.mulf %323, %321 : vector<4x32xf32>
    %325 = arith.mulf %316, %252 : vector<4x32xf32>
    %326 = arith.addf %324, %325 : vector<4x32xf32>
    %327 = arith.truncf %326 : vector<4x32xf32> to vector<4x32xbf16>
    %cst_80 = arith.constant dense<0.000000e+00> : vector<4x32xf32>
    %328 = tpu.matmul %327, %29, %cst_80 {dimension_numbers = #tpu.dot_dimension_numbers<[1], [0], [0], [1], [0, 0, 1, 1], [], []>} : vector<4x32xbf16>, vector<32x32xbf16>, vector<4x32xf32> -> vector<4x32xf32>
    %329 = vector.broadcast %30 : vector<1x32xf32> to vector<4x32xf32>
    %330 = arith.addf %328, %329 : vector<4x32xf32>
    %331 = vector.extract_strided_slice %330 {offsets = [0, 0], sizes = [2, 32], strides = [1, 1]} : vector<4x32xf32> to vector<2x32xf32>
    %c0_81 = arith.constant 0 : index
    %c224 = arith.constant 224 : index
    %332 = vector.load %arg15[%c0_81, %c224] : memref<2x256xf32, #tpu.memory_space<vmem>>, vector<2x32xf32>
    tpu.vector_store %arg15[%c0_81, %c224], %331 {strides = array<i32>} : memref<2x256xf32, #tpu.memory_space<vmem>>, vector<2x32xf32>,
    return
  }
  func.func @transform_0(%arg0: i32) -> (i32, i32, i32) {
    %c0_i32 = arith.constant 0 : i32
    %c0_i32_0 = arith.constant 0 : i32
    %c0_i32_1 = arith.constant 0 : i32
    return %arg0, %c0_i32, %c0_i32_0 : i32, i32, i32
  }
  func.func @transform_1(%arg0: i32) -> (i32, i32) {
    %c0_i32 = arith.constant 0 : i32
    %c0_i32_0 = arith.constant 0 : i32
    return %arg0, %c0_i32 : i32, i32
  }
  func.func @transform_2(%arg0: i32) -> (i32, i32, i32) {
    %c0_i32 = arith.constant 0 : i32
    %c0_i32_0 = arith.constant 0 : i32
    %c0_i32_1 = arith.constant 0 : i32
    return %arg0, %c0_i32, %c0_i32_0 : i32, i32, i32
  }
  func.func @transform_3(%arg0: i32) -> (i32, i32) {
    %c0_i32 = arith.constant 0 : i32
    %c0_i32_0 = arith.constant 0 : i32
    return %arg0, %c0_i32 : i32, i32
  }
  func.func @transform_4(%arg0: i32) -> (i32, i32) {
    %c0_i32 = arith.constant 0 : i32
    %c0_i32_0 = arith.constant 0 : i32
    return %arg0, %c0_i32 : i32, i32
  }
  func.func @transform_5(%arg0: i32) -> (i32, i32) {
    %c0_i32 = arith.constant 0 : i32
    %c0_i32_0 = arith.constant 0 : i32
    %c0_i32_1 = arith.constant 0 : i32
    return %c0_i32, %c0_i32_0 : i32, i32
  }
  func.func @transform_6(%arg0: i32) -> (i32, i32) {
    %c0_i32 = arith.constant 0 : i32
    %c0_i32_0 = arith.constant 0 : i32
    %c0_i32_1 = arith.constant 0 : i32
    return %c0_i32, %c0_i32_0 : i32, i32
  }
  func.func @transform_7(%arg0: i32) -> (i32, i32) {
    %c0_i32 = arith.constant 0 : i32
    %c0_i32_0 = arith.constant 0 : i32
    %c0_i32_1 = arith.constant 0 : i32
    return %c0_i32, %c0_i32_0 : i32, i32
  }
  func.func @transform_8(%arg0: i32) -> (i32, i32) {
    %c0_i32 = arith.constant 0 : i32
    %c0_i32_0 = arith.constant 0 : i32
    %c0_i32_1 = arith.constant 0 : i32
    return %c0_i32, %c0_i32_0 : i32, i32
  }
  func.func @transform_9(%arg0: i32) -> (i32, i32) {
    %c0_i32 = arith.constant 0 : i32
    %c0_i32_0 = arith.constant 0 : i32
    %c0_i32_1 = arith.constant 0 : i32
    return %c0_i32, %c0_i32_0 : i32, i32
  }
  func.func @transform_10(%arg0: i32) -> (i32, i32) {
    %c0_i32 = arith.constant 0 : i32
    %c0_i32_0 = arith.constant 0 : i32
    %c0_i32_1 = arith.constant 0 : i32
    return %c0_i32, %c0_i32_0 : i32, i32
  }
  func.func @transform_11(%arg0: i32) -> (i32, i32) {
    %c0_i32 = arith.constant 0 : i32
    %c0_i32_0 = arith.constant 0 : i32
    %c0_i32_1 = arith.constant 0 : i32
    return %c0_i32, %c0_i32_0 : i32, i32
  }
  func.func @transform_12(%arg0: i32) -> (i32, i32) {
    %c0_i32 = arith.constant 0 : i32
    %c0_i32_0 = arith.constant 0 : i32
    %c0_i32_1 = arith.constant 0 : i32
    return %c0_i32, %c0_i32_0 : i32, i32
  }
  func.func @transform_13(%arg0: i32) -> (i32, i32) {
    %c0_i32 = arith.constant 0 : i32
    %c0_i32_0 = arith.constant 0 : i32
    %c0_i32_1 = arith.constant 0 : i32
    return %c0_i32, %c0_i32_0 : i32, i32
  }
  func.func @transform_14(%arg0: i32) -> (i32, i32) {
    %c0_i32 = arith.constant 0 : i32
    %c0_i32_0 = arith.constant 0 : i32
    return %arg0, %c0_i32 : i32, i32
  }
}

module attributes {stable_mosaic.version = 11 : i64} {
  func.func @generator_kernel(%arg0: i32, %arg1: memref<16x32xf32, #tpu.memory_space<vmem>>, %arg2: memref<16x32xbf16, #tpu.memory_space<vmem>>, %arg3: memref<32x32xbf16, #tpu.memory_space<vmem>>, %arg4: memref<1x32xf32, #tpu.memory_space<vmem>>, %arg5: memref<32x64xbf16, #tpu.memory_space<vmem>>, %arg6: memref<1x64xf32, #tpu.memory_space<vmem>>, %arg7: memref<16x64xf32, #tpu.memory_space<vmem>>) attributes {dimension_semantics = [#tpu.dimension_semantics<parallel>], iteration_bounds = array<i64: 1>, scalar_prefetch = 0 : i64, scratch_operands = 0 : i64, tpu.core_type = #tpu.core_type<tc>, window_params = [{transform_indices = @transform_0, window_bounds = array<i64: 16, 32>}, {transform_indices = @transform_1, window_bounds = array<i64: 16, 32>}, {pipeline_mode = #tpu.pipeline_mode<synchronous>, transform_indices = @transform_2, window_bounds = array<i64: 32, 32>}, {pipeline_mode = #tpu.pipeline_mode<synchronous>, transform_indices = @transform_3, window_bounds = array<i64: 1, 32>}, {pipeline_mode = #tpu.pipeline_mode<synchronous>, transform_indices = @transform_4, window_bounds = array<i64: 32, 64>}, {pipeline_mode = #tpu.pipeline_mode<synchronous>, transform_indices = @transform_5, window_bounds = array<i64: 1, 64>}, {transform_indices = @transform_6, window_bounds = array<i64: 16, 64>}]} {
    %c0 = arith.constant 0 : index
    %c0_0 = arith.constant 0 : index
    %0 = vector.load %arg2[%c0, %c0_0] : memref<16x32xbf16, #tpu.memory_space<vmem>>, vector<16x32xbf16>
    %c0_1 = arith.constant 0 : index
    %c0_2 = arith.constant 0 : index
    %1 = vector.load %arg3[%c0_1, %c0_2] : memref<32x32xbf16, #tpu.memory_space<vmem>>, vector<32x32xbf16>
    %cst = arith.constant dense<0.000000e+00> : vector<16x32xf32>
    %2 = tpu.matmul %0, %1, %cst {dimension_numbers = #tpu.dot_dimension_numbers<[1], [0], [0], [1], [0, 0, 1, 1], [], []>} : vector<16x32xbf16>, vector<32x32xbf16>, vector<16x32xf32> -> vector<16x32xf32>
    %c0_3 = arith.constant 0 : index
    %c0_4 = arith.constant 0 : index
    %3 = vector.load %arg4[%c0_3, %c0_4] : memref<1x32xf32, #tpu.memory_space<vmem>>, vector<1x32xf32>
    %4 = vector.broadcast %3 : vector<1x32xf32> to vector<16x32xf32>
    %5 = arith.addf %2, %4 : vector<16x32xf32>
    %c0_5 = arith.constant 0 : index
    %c0_6 = arith.constant 0 : index
    %6 = vector.load %arg1[%c0_5, %c0_6] : memref<16x32xf32, #tpu.memory_space<vmem>>, vector<16x32xf32>
    %7 = arith.addf %6, %5 : vector<16x32xf32>
    %8 = arith.truncf %7 : vector<16x32xf32> to vector<16x32xbf16>
    %c0_7 = arith.constant 0 : index
    %c0_8 = arith.constant 0 : index
    %9 = vector.load %arg5[%c0_7, %c0_8] : memref<32x64xbf16, #tpu.memory_space<vmem>>, vector<32x64xbf16>
    %cst_9 = arith.constant dense<0.000000e+00> : vector<16x64xf32>
    %10 = tpu.matmul %8, %9, %cst_9 {dimension_numbers = #tpu.dot_dimension_numbers<[1], [0], [0], [1], [0, 0, 1, 1], [], []>} : vector<16x32xbf16>, vector<32x64xbf16>, vector<16x64xf32> -> vector<16x64xf32>
    %c0_10 = arith.constant 0 : index
    %c0_11 = arith.constant 0 : index
    %11 = vector.load %arg6[%c0_10, %c0_11] : memref<1x64xf32, #tpu.memory_space<vmem>>, vector<1x64xf32>
    %12 = vector.broadcast %11 : vector<1x64xf32> to vector<16x64xf32>
    %13 = arith.addf %10, %12 : vector<16x64xf32>
    %cst_12 = arith.constant dense<0xFF800000> : vector<16xf32>
    %14 = vector.multi_reduction <maximumf>, %13, %cst_12 [1] : vector<16x64xf32> to vector<16xf32>
    %15 = vector.shape_cast %14 : vector<16xf32> to vector<16x1xf32>
    %16 = vector.broadcast %15 : vector<16x1xf32> to vector<16x64xf32>
    %17 = arith.subf %13, %16 : vector<16x64xf32>
    %18 = math.exp %17 : vector<16x64xf32>
    %cst_13 = arith.constant dense<0.000000e+00> : vector<16xf32>
    %19 = vector.multi_reduction <add>, %18, %cst_13 [1] : vector<16x64xf32> to vector<16xf32>
    %20 = vector.shape_cast %19 : vector<16xf32> to vector<16x1xf32>
    %21 = math.log %20 : vector<16x1xf32>
    %22 = arith.addf %21, %15 : vector<16x1xf32>
    %23 = vector.broadcast %22 : vector<16x1xf32> to vector<16x64xf32>
    %24 = arith.subf %13, %23 : vector<16x64xf32>
    %c0_14 = arith.constant 0 : index
    %c0_15 = arith.constant 0 : index
    %25 = vector.load %arg7[%c0_14, %c0_15] : memref<16x64xf32, #tpu.memory_space<vmem>>, vector<16x64xf32>
    tpu.vector_store %arg7[%c0_14, %c0_15], %24 {strides = array<i32>} : memref<16x64xf32, #tpu.memory_space<vmem>>, vector<16x64xf32>,
    return
  }
  func.func @transform_0(%arg0: i32) -> (i32, i32) {
    %c0_i32 = arith.constant 0 : i32
    %c0_i32_0 = arith.constant 0 : i32
    return %arg0, %c0_i32 : i32, i32
  }
  func.func @transform_1(%arg0: i32) -> (i32, i32) {
    %c0_i32 = arith.constant 0 : i32
    %c0_i32_0 = arith.constant 0 : i32
    return %arg0, %c0_i32 : i32, i32
  }
  func.func @transform_2(%arg0: i32) -> (i32, i32) {
    %c0_i32 = arith.constant 0 : i32
    %c0_i32_0 = arith.constant 0 : i32
    %c0_i32_1 = arith.constant 0 : i32
    return %c0_i32, %c0_i32_0 : i32, i32
  }
  func.func @transform_3(%arg0: i32) -> (i32, i32) {
    %c0_i32 = arith.constant 0 : i32
    %c0_i32_0 = arith.constant 0 : i32
    %c0_i32_1 = arith.constant 0 : i32
    return %c0_i32, %c0_i32_0 : i32, i32
  }
  func.func @transform_4(%arg0: i32) -> (i32, i32) {
    %c0_i32 = arith.constant 0 : i32
    %c0_i32_0 = arith.constant 0 : i32
    %c0_i32_1 = arith.constant 0 : i32
    return %c0_i32, %c0_i32_0 : i32, i32
  }
  func.func @transform_5(%arg0: i32) -> (i32, i32) {
    %c0_i32 = arith.constant 0 : i32
    %c0_i32_0 = arith.constant 0 : i32
    %c0_i32_1 = arith.constant 0 : i32
    return %c0_i32, %c0_i32_0 : i32, i32
  }
  func.func @transform_6(%arg0: i32) -> (i32, i32) {
    %c0_i32 = arith.constant 0 : i32
    %c0_i32_0 = arith.constant 0 : i32
    return %arg0, %c0_i32 : i32, i32
  }
}

</mosaic_0001>

<llo_original>
// kernel: decoder_forward.3
$region0: #{decoder_forward.3}
  #allocation0 [shape = 'u32[]', space=smem, size = 0x4, offset = 0x4, fixed_abs, tag = 'smem constant byte address 0x4 - core index']
  #allocation1 [shape = 'u32[144,128]{1,0:T(1,128)}', space=vmem, size = 0x12000, scoped, tag = 'internal scratch']
  %s0 = inlined_call_operand.vmem [shape: f32[16,32], index: 0, kind: input, shape index: {}]
  %s1 = inlined_call_operand.vmem [shape: bf16[16,32], index: 1, kind: input, shape index: {}]
  %s2 = inlined_call_operand.vmem [shape: bf16[32,32], index: 2, kind: input, shape index: {}]
  %s3 = inlined_call_operand.vmem [shape: f32[1,32], index: 3, kind: input, shape index: {}]
  %s4 = inlined_call_operand.vmem [shape: bf16[32,64], index: 4, kind: input, shape index: {}]
  %s5 = inlined_call_operand.vmem [shape: f32[1,64], index: 5, kind: input, shape index: {}]
  %s6 = inlined_call_operand.hbm [shape: f32[16,64], index: 6, kind: output, shape index: {}]
  %s7 = sld [smem:[#allocation0]]
  $region34: #{decoder_forward.3} parent=0
    _
  %s9 = ssub.s32 1, %s7
  %s10 = scalar_select 0, %s9, %s7
  $region1: #{decoder_forward.3} parent=0
    #allocation2 [shape = 'u8[8192]{0}', space=vmem, size = 0x2000, scoped, tag = 'output window, operand 0, single buffered']
    #allocation3 [shape = 's32[1]{0}', space=sflag, size = 0x4, scoped, tag = 'scoped memory for decoder_forward.3']
    %11 = vsyncpa [#allocation3], 0
    // Predicated region
    $region2: #{decoder_forward.3} parent=1 // pred_check
      _
    $region3: #{decoder_forward.3} parent=1 // pred_check_branch
      %13 = sbr.rel (0) target = $region5
    $region4: #{decoder_forward.3} parent=1 // pred_region
      _
    $region5: #{decoder_forward.3} parent=1 // pred_fallthru
      _
    // Predicated region
    $region6: #{decoder_forward.3} parent=1 // pred_check
      _
    $region7: #{decoder_forward.3} parent=1 // pred_check_branch
      %15 = sbr.rel (0) target = $region9
    $region8: #{decoder_forward.3} parent=1 // pred_region
      _
    $region9: #{decoder_forward.3} parent=1 // pred_fallthru
      _
    // Predicated region
    $region10: #{decoder_forward.3} parent=1 // pred_check
      _
    $region11: #{decoder_forward.3} parent=1 // pred_check_branch
      %17 = sbr.rel (0) target = $region13
    $region12: #{decoder_forward.3} parent=1 // pred_region
      _
    $region13: #{decoder_forward.3} parent=1 // pred_fallthru
      _
    // Predicated region
    $region14: #{decoder_forward.3} parent=1 // pred_check
      _
    $region15: #{decoder_forward.3} parent=1 // pred_check_branch
      %19 = sbr.rel (0) target = $region17
    $region16: #{decoder_forward.3} parent=1 // pred_region
      _
    $region17: #{decoder_forward.3} parent=1 // pred_fallthru
      _
    // Predicated region
    $region18: #{decoder_forward.3} parent=1 // pred_check
      _
    $region19: #{decoder_forward.3} parent=1 // pred_check_branch
      %21 = sbr.rel (0) target = $region21
    $region20: #{decoder_forward.3} parent=1 // pred_region
      _
    $region21: #{decoder_forward.3} parent=1 // pred_fallthru
      _
    // Predicated region
    $region22: #{decoder_forward.3} parent=1 // pred_check
      _
    $region23: #{decoder_forward.3} parent=1 // pred_check_branch
      %23 = sbr.rel (0) target = $region25
    $region24: #{decoder_forward.3} parent=1 // pred_region
      _
    $region25: #{decoder_forward.3} parent=1 // pred_fallthru
      _
    %v25 = vld [vmem:[%s1] sm:$0xf]
    %v26 = vld [vmem:[%s1 + $0x4] sm:$0xf]
    %v27 = vld [vmem:[%s2] sm:$0xf]
    %v28 = vld [vmem:[%s2 + $0x4] sm:$0xf]
    %v29 = vld [vmem:[%s2 + $0x8] sm:$0xf]
    %v30 = vld [vmem:[%s2 + $0xc] sm:$0xf]
    %v31 = vld [vmem:[%s3] sm:$0x1]
    %v33 = vlaneseq
    %v34 = vshrl.u32 %v33, 7
    %v35 = vsub.s32 0, %v34
    %v36 = vrot.slane %v31, %v35
    %v40 = vunpack.c.l.b16 %v25
    %v41 = vunpack.c.l.b16 %v26
    %v42 = vpack.c.b16 %v41, %v40
    %v47 = vunpack.c.l.b16 %v27
    %v48 = vunpack.c.l.b16 %v28
    %v49 = vunpack.c.l.b16 %v29
    %v50 = vunpack.c.l.b16 %v30
    %v51 = vpack.c.b16 %v48, %v47
    %v52 = vpack.c.b16 %v50, %v49
    %vm55 = vcmask 261120
    %v57 = vsel %vm55, %v42, 0
    %59 = vmatprep.subr.bf16.mxu0 0
    %60 = vmatpush1.bf16.msra.mxu0 0
    %61 = vmatprep.subr.bf16.mxu0 0
    %62 = vmatpush1.bf16.msra.mxu0 0
    %63 = vmatprep.subr.bf16.mxu0 0
    %64 = vmatpush1.bf16.msra.mxu0 0
    %65 = vmatprep.subr.bf16.mxu0 0
    %66 = vmatpush1.bf16.msra.mxu0 0
    %67 = vmatprep.subr.bf16.mxu0 0
    %68 = vmatpush1.bf16.msra.mxu0 0
    %69 = vmatprep.subr.bf16.mxu0 0
    %70 = vmatpush1.bf16.msra.mxu0 0
    %71 = vmatprep.subr.bf16.mxu0 0
    %72 = vmatpush1.bf16.msra.mxu0 %v52
    %73 = vmatprep.subr.bf16.mxu0 0
    %74 = vmatpush1.bf16.msra.mxu0 %v51
    %75 = vmatprep.subr.bf16.mxu0 0
    %76 = vmatpush2.bf16.msra.mxu0 0
    %77 = vmatprep.subr.bf16.mxu0 0
    %78 = vmatpush2.bf16.msra.mxu0 0
    %79 = vmatprep.subr.bf16.mxu0 0
    %80 = vmatpush2.bf16.msra.mxu0 0
    %81 = vmatprep.subr.bf16.mxu0 0
    %82 = vmatpush2.bf16.msra.mxu0 0
    %83 = vmatprep.subr.bf16.mxu0 0
    %84 = vmatpush2.bf16.msra.mxu0 0
    %85 = vmatprep.subr.bf16.mxu0 0
    %86 = vmatpush2.bf16.msra.mxu0 0
    %87 = vmatprep.subr.bf16.mxu0 0
    %88 = vmatpush2.bf16.msra.mxu0 0
    %89 = vmatprep.subr.bf16.mxu0 0
    %90 = vmatpush2.bf16.msra.mxu0 0
    %91 = vmatprep.mubr.bf16.mxu0 0
    %92 = vmatmul.mubr.bf16.gmra.mxu0 %v57
    %v93 = vpop.f32.mrf.mxu0
    %v94 = vadd.f32 %v36, %v93
    %v95 = vpop.f32.mrf.mxu0
    %v96 = vpop.f32.mrf.mxu0
    %v97 = vadd.f32 %v36, %v96
    %v98 = vpop.f32.mrf.mxu0
    %99 = vdwg.mxu0
    %v100 = vld [vmem:[%s0] sm:$0xff]
    %v101 = vld [vmem:[%s0 + $0x8] sm:$0xff]
    %v102 = vadd.f32 %v100, %v94
    %v103 = vadd.f32 %v101, %v97
    %v104 = vpack.c.bf16 %v103, %v102
    %v105 = vld [vmem:[%s4] sm:$0xf]
    %v106 = vld [vmem:[%s4 + $0x4] sm:$0xf]
    %v107 = vld [vmem:[%s4 + $0x8] sm:$0xf]
    %v108 = vld [vmem:[%s4 + $0xc] sm:$0xf]
    %v109 = vld [vmem:[%s5] sm:$0x1]
    %v111 = vlaneseq
    %v112 = vshrl.u32 %v111, 7
    %v113 = vsub.s32 0, %v112
    %v114 = vrot.slane %v109, %v113
    %v120 = vunpack.c.l.b16 %v105
    %v121 = vunpack.c.l.b16 %v106
    %v122 = vunpack.c.l.b16 %v107
    %v123 = vunpack.c.l.b16 %v108
    %v124 = vpack.c.b16 %v121, %v120
    %v125 = vpack.c.b16 %v123, %v122
    %v129 = vsel %vm55, %v104, 0
    %131 = vmatprep.subr.bf16.mxu0 0
    %132 = vmatpush1.bf16.msra.mxu0 0
    %133 = vmatprep.subr.bf16.mxu0 0
    %134 = vmatpush1.bf16.msra.mxu0 0
    %135 = vmatprep.subr.bf16.mxu0 0
    %136 = vmatpush1.bf16.msra.mxu0 0
    %137 = vmatprep.subr.bf16.mxu0 0
    %138 = vmatpush1.bf16.msra.mxu0 0
    %139 = vmatprep.subr.bf16.mxu0 0
    %140 = vmatpush1.bf16.msra.mxu0 0
    %141 = vmatprep.subr.bf16.mxu0 0
    %142 = vmatpush1.bf16.msra.mxu0 0
    %143 = vmatprep.subr.bf16.mxu0 0
    %144 = vmatpush1.bf16.msra.mxu0 %v125
    %145 = vmatprep.subr.bf16.mxu0 0
    %146 = vmatpush1.bf16.msra.mxu0 %v124
    %147 = vmatprep.subr.bf16.mxu0 0
    %148 = vmatpush2.bf16.msra.mxu0 0
    %149 = vmatprep.subr.bf16.mxu0 0
    %150 = vmatpush2.bf16.msra.mxu0 0
    %151 = vmatprep.subr.bf16.mxu0 0
    %152 = vmatpush2.bf16.msra.mxu0 0
    %153 = vmatprep.subr.bf16.mxu0 0
    %154 = vmatpush2.bf16.msra.mxu0 0
    %155 = vmatprep.subr.bf16.mxu0 0
    %156 = vmatpush2.bf16.msra.mxu0 0
    %157 = vmatprep.subr.bf16.mxu0 0
    %158 = vmatpush2.bf16.msra.mxu0 0
    %159 = vmatprep.subr.bf16.mxu0 0
    %160 = vmatpush2.bf16.msra.mxu0 0
    %161 = vmatprep.subr.bf16.mxu0 0
    %162 = vmatpush2.bf16.msra.mxu0 0
    %163 = vmatprep.mubr.bf16.mxu0 0
    %164 = vmatmul.mubr.bf16.gmra.mxu0 %v129
    %v165 = vpop.f32.mrf.mxu0
    %v166 = vadd.f32 %v114, %v165
    %v167 = vpop.f32.mrf.mxu0
    %v168 = vpop.f32.mrf.mxu0
    %v169 = vadd.f32 %v114, %v168
    %v170 = vpop.f32.mrf.mxu0
    %171 = vdwg.mxu0
    %vm172 = vcmask 523264
    %v173 = vsel %vm172, %v166, -inf
    %174 = vmax.xlane.f32.xlu0 %v173
    %v175 = vpop.xlane.xlu0 %174
    %v176 = vsel %vm172, %v169, -inf
    %177 = vmax.xlane.f32.xlu0 %v176
    %v178 = vpop.xlane.xlu0 %177
    %v179 = vsub.f32 %v166, %v175
    %v180 = vsub.f32 %v169, %v178
    %v181 = vmul.f32 %v179, 1.442695
    %v182 = vpow.pop %v181
    %v183 = vmul.f32 %v180, 1.442695
    %v184 = vpow.pop %v183
    %v185 = vsel %vm172, %v182, 0.0
    %186 = vadd.xlane.f32.xlu0 %v185
    %v187 = vpop.xlane.xlu0 %186
    %v188 = vsel %vm172, %v184, 0.0
    %189 = vadd.xlane.f32.xlu0 %v188
    %v190 = vpop.xlane.xlu0 %189
    %v191 = vlog2.pop %v187
    %v192 = vmul.f32 %v191, 0.6931472
    %v193 = vlog2.pop %v190
    %v194 = vmul.f32 %v193, 0.6931472
    %v195 = vadd.f32 %v192, %v175
    %v196 = vadd.f32 %v194, %v178
    %v197 = vsub.f32 %v166, %v195
    %v198 = vsub.f32 %v169, %v196
    %199 = vst.msk [vmem:[#allocation2] sm:$0xff] %vm172, %v197
    %200 = vst.msk [vmem:[#allocation2 + $0x8] sm:$0xff] %vm172, %v198
    // Predicated region
    $region26: #{decoder_forward.3} parent=1 // pred_check
      _
    $region27: #{decoder_forward.3} parent=1 // pred_check_branch
      %202 = sbr.rel (0) target = $region29
    $region28: #{decoder_forward.3} parent=1 // pred_region
      %s204 = ssub.s32 256, 256
      %205 = vsyncadd [#allocation3], %s204
      %s206 = sshll.u32 [#allocation2], 4
      %s207 = int_to_ptr.vmem [resolvable:$true] %s206
      %212 = dma.vmem_to_hbm [thread:$0]  %s207, 256, %s6, [#allocation3], 128, 128, 8
    $region29: #{decoder_forward.3} parent=1 // pred_fallthru
      _
    // Predicated region
    $region30: #{decoder_forward.3} parent=1 // pred_check
      _
    $region31: #{decoder_forward.3} parent=1 // pred_check_branch
      %214 = sbr.rel (0) target = $region33
    $region32: #{decoder_forward.3} parent=1 // pred_region
      %215 = dma.done [#allocation3], 256
    $region33: #{decoder_forward.3} parent=1 // pred_fallthru
      _
    %216 = vsyncpa [#allocation3], 1

// kernel: decoder_forward.2
$region0: #{decoder_forward.2}
  #allocation0 [shape = 'u32[]', space=smem, size = 0x4, offset = 0x4, fixed_abs, tag = 'smem constant byte address 0x4 - core index']
  #allocation1 [shape = 'u32[144,128]{1,0:T(1,128)}', space=vmem, size = 0x12000, scoped, tag = 'internal scratch']
  %s0 = inlined_call_operand.vmem [shape: bf16[2,8,32], index: 0, kind: input, shape index: {}]
  %s1 = inlined_call_operand.vmem [shape: f32[2,8], index: 1, kind: input, shape index: {}]
  %s2 = inlined_call_operand.vmem [shape: f32[2,8,32], index: 2, kind: input, shape index: {}]
  %s3 = inlined_call_operand.vmem [shape: f32[2,32], index: 3, kind: input, shape index: {}]
  %s4 = inlined_call_operand.vmem [shape: f32[2,32], index: 4, kind: input, shape index: {}]
  %s5 = inlined_call_operand.vmem [shape: bf16[64,128], index: 5, kind: input, shape index: {}]
  %s6 = inlined_call_operand.vmem [shape: f32[1,128], index: 6, kind: input, shape index: {}]
  %s7 = inlined_call_operand.vmem [shape: f32[1,128], index: 7, kind: input, shape index: {}]
  %s8 = inlined_call_operand.vmem [shape: f32[1,32], index: 8, kind: input, shape index: {}]
  %s9 = inlined_call_operand.vmem [shape: bf16[64,96], index: 9, kind: input, shape index: {}]
  %s10 = inlined_call_operand.vmem [shape: f32[1,96], index: 10, kind: input, shape index: {}]
  %s11 = inlined_call_operand.vmem [shape: f32[1,96], index: 11, kind: input, shape index: {}]
  %s12 = inlined_call_operand.vmem [shape: bf16[32,32], index: 12, kind: input, shape index: {}]
  %s13 = inlined_call_operand.vmem [shape: f32[1,32], index: 13, kind: input, shape index: {}]
  %s14 = inlined_call_operand.vmem [shape: f32[2,256], index: 14, kind: output, shape index: {}]
  %s15 = sld [smem:[#allocation0]]
  $region66: #{decoder_forward.2} parent=0
    _
  %s17 = ssub.s32 1, %s15
  %s18 = scalar_select 0, %s17, %s15
  // Predicated region
  $region2: #{decoder_forward.2} parent=0 // pred_check
    _
  $region3: #{decoder_forward.2} parent=0 // pred_check_branch
    %20 = sbr.rel (0) target = $region5
  $region4: #{decoder_forward.2} parent=0 // pred_region
    _
  $region5: #{decoder_forward.2} parent=0 // pred_fallthru
    _
  // Predicated region
  $region6: #{decoder_forward.2} parent=0 // pred_check
    _
  $region7: #{decoder_forward.2} parent=0 // pred_check_branch
    %22 = sbr.rel (0) target = $region9
  $region8: #{decoder_forward.2} parent=0 // pred_region
    _
  $region9: #{decoder_forward.2} parent=0 // pred_fallthru
    _
  // Predicated region
  $region10: #{decoder_forward.2} parent=0 // pred_check
    _
  $region11: #{decoder_forward.2} parent=0 // pred_check_branch
    %24 = sbr.rel (0) target = $region13
  $region12: #{decoder_forward.2} parent=0 // pred_region
    _
  $region13: #{decoder_forward.2} parent=0 // pred_fallthru
    _
  // Predicated region
  $region14: #{decoder_forward.2} parent=0 // pred_check
    _
  $region15: #{decoder_forward.2} parent=0 // pred_check_branch
    %26 = sbr.rel (0) target = $region17
  $region16: #{decoder_forward.2} parent=0 // pred_region
    _
  $region17: #{decoder_forward.2} parent=0 // pred_fallthru
    _
  // Predicated region
  $region18: #{decoder_forward.2} parent=0 // pred_check
    _
  $region19: #{decoder_forward.2} parent=0 // pred_check_branch
    %28 = sbr.rel (0) target = $region21
  $region20: #{decoder_forward.2} parent=0 // pred_region
    _
  $region21: #{decoder_forward.2} parent=0 // pred_fallthru
    _
  // Predicated region
  $region22: #{decoder_forward.2} parent=0 // pred_check
    _
  $region23: #{decoder_forward.2} parent=0 // pred_check_branch
    %30 = sbr.rel (0) target = $region25
  $region24: #{decoder_forward.2} parent=0 // pred_region
    _
  $region25: #{decoder_forward.2} parent=0 // pred_fallthru
    _
  // Predicated region
  $region26: #{decoder_forward.2} parent=0 // pred_check
    _
  $region27: #{decoder_forward.2} parent=0 // pred_check_branch
    %32 = sbr.rel (0) target = $region29
  $region28: #{decoder_forward.2} parent=0 // pred_region
    _
  $region29: #{decoder_forward.2} parent=0 // pred_fallthru
    _
  // Predicated region
  $region30: #{decoder_forward.2} parent=0 // pred_check
    _
  $region31: #{decoder_forward.2} parent=0 // pred_check_branch
    %34 = sbr.rel (0) target = $region33
  $region32: #{decoder_forward.2} parent=0 // pred_region
    _
  $region33: #{decoder_forward.2} parent=0 // pred_fallthru
    _
  // Predicated region
  $region34: #{decoder_forward.2} parent=0 // pred_check
    _
  $region35: #{decoder_forward.2} parent=0 // pred_check_branch
    %36 = sbr.rel (0) target = $region37
  $region36: #{decoder_forward.2} parent=0 // pred_region
    _
  $region37: #{decoder_forward.2} parent=0 // pred_fallthru
    _
  // Predicated region
  $region38: #{decoder_forward.2} parent=0 // pred_check
    _
  $region39: #{decoder_forward.2} parent=0 // pred_check_branch
    %38 = sbr.rel (0) target = $region41
  $region40: #{decoder_forward.2} parent=0 // pred_region
    _
  $region41: #{decoder_forward.2} parent=0 // pred_fallthru
    _
  // Predicated region
  $region42: #{decoder_forward.2} parent=0 // pred_check
    _
  $region43: #{decoder_forward.2} parent=0 // pred_check_branch
    %40 = sbr.rel (0) target = $region45
  $region44: #{decoder_forward.2} parent=0 // pred_region
    _
  $region45: #{decoder_forward.2} parent=0 // pred_fallthru
    _
  // Predicated region
  $region46: #{decoder_forward.2} parent=0 // pred_check
    _
  $region47: #{decoder_forward.2} parent=0 // pred_check_branch
    %42 = sbr.rel (0) target = $region49
  $region48: #{decoder_forward.2} parent=0 // pred_region
    _
  $region49: #{decoder_forward.2} parent=0 // pred_fallthru
    _
  // Predicated region
  $region50: #{decoder_forward.2} parent=0 // pred_check
    _
  $region51: #{decoder_forward.2} parent=0 // pred_check_branch
    %44 = sbr.rel (0) target = $region53
  $region52: #{decoder_forward.2} parent=0 // pred_region
    _
  $region53: #{decoder_forward.2} parent=0 // pred_fallthru
    _
  // Predicated region
  $region54: #{decoder_forward.2} parent=0 // pred_check
    _
  $region55: #{decoder_forward.2} parent=0 // pred_check_branch
    %46 = sbr.rel (0) target = $region57
  $region56: #{decoder_forward.2} parent=0 // pred_region
    _
  $region57: #{decoder_forward.2} parent=0 // pred_fallthru
    _
  %v48 = vld [vmem:[%s0] sm:$0xf]
  %v49 = vld [vmem:[%s0 + $0x4] sm:$0xf]
  %v50 = vld [vmem:[%s2] sm:$0xff]
  %v51 = vld [vmem:[%s2 + $0x8] sm:$0xff]
  %v52 = vld [vmem:[%s1] sm:$0x3]
  %vm53 = vcmp.gt.f32.partialorder %v52, 0.5
  %v54 = vsel %vm53, -1e+18, 0.0
  %v56 = vrot.slane %v54, 6
  %vm58 = vcmask 1041408
  %v59 = vsel %vm58, %v54, %v56
  %v60 = vld [vmem:[%s8] sm:$0x1]
  %v61 = vld [vmem:[%s5] sm:$0xf]
  %v62 = vld [vmem:[%s5 + $0x4] sm:$0xf]
  %v63 = vld [vmem:[%s5 + $0x8] sm:$0xf]
  %v64 = vld [vmem:[%s5 + $0xc] sm:$0xf]
  %v65 = vld [vmem:[%s5 + $0x10] sm:$0xf]
  %v66 = vld [vmem:[%s5 + $0x14] sm:$0xf]
  %v67 = vld [vmem:[%s5 + $0x18] sm:$0xf]
  %v68 = vld [vmem:[%s5 + $0x1c] sm:$0xf]
  %v69 = vld [vmem:[%s6] sm:$0x1]
  %v71 = vlaneseq
  %v72 = vshrl.u32 %v71, 7
  %v73 = vsub.s32 0, %v72
  %v74 = vrot.slane %v69, %v73
  %v76 = vld [vmem:[%s7] sm:$0x1]
  %v78 = vlaneseq
  %v79 = vshrl.u32 %v78, 7
  %v80 = vsub.s32 0, %v79
  %v81 = vrot.slane %v76, %v80
  %v83 = vsel %vm58, %v74, %v81
  %v84 = vld [vmem:[%s9] sm:$0xf]
  %v85 = vld [vmem:[%s9 + $0x4] sm:$0xf]
  %v86 = vld [vmem:[%s9 + $0x8] sm:$0xf]
  %v87 = vld [vmem:[%s9 + $0xc] sm:$0xf]
  %v88 = vld [vmem:[%s9 + $0x10] sm:$0xf]
  %v89 = vld [vmem:[%s9 + $0x14] sm:$0xf]
  %v90 = vld [vmem:[%s9 + $0x18] sm:$0xf]
  %v91 = vld [vmem:[%s9 + $0x1c] sm:$0xf]
  %v92 = vld [vmem:[%s10] sm:$0x1]
  %v94 = vlaneseq
  %v95 = vshrl.u32 %v94, 7
  %v96 = vsub.s32 0, %v95
  %v97 = vrot.slane %v92, %v96
  %v99 = vld [vmem:[%s11] sm:$0x1]
  %v101 = vlaneseq
  %v102 = vshrl.u32 %v101, 7
  %v103 = vsub.s32 0, %v102
  %v104 = vrot.slane %v99, %v103
  %v106 = vsel %vm58, %v97, %v104
  %v107 = vld [vmem:[%s12] sm:$0xf]
  %v108 = vld [vmem:[%s12 + $0x4] sm:$0xf]
  %v109 = vld [vmem:[%s12 + $0x8] sm:$0xf]
  %v110 = vld [vmem:[%s12 + $0xc] sm:$0xf]
  %v111 = vld [vmem:[%s13] sm:$0x1]
  %v112 = vsel %vm58, 1.0, 0.0
  %v113 = vsel %vm58, 0.0, 1.0
  %v114 = vld [vmem:[%s4] sm:$0x3]
  %vm115 = vcmask 254976
  %116 = vst.msk [vmem:[%s14] sm:$0x3] %vm115, %v114
  %v117 = vld [vmem:[%s3] sm:$0x3]
  %v119 = vrot.slane %v117, 6
  %v121 = vsel %vm58, %v117, %v119
  %123 = vset.pattern.permute.xlu0 0
  %124 = vperm.xlu0 %123, %v112
  %v125 = vpop.permute.xlu0 %124
  %v127 = vmul.f32 %v121, %v125
  %129 = vset.pattern.permute.xlu0 0
  %130 = vperm.xlu0 %129, %v113
  %v131 = vpop.permute.xlu0 %130
  %v133 = vmul.f32 %v121, %v131
  %135 = vrot.lane.b32.xlu0 %v133, 32
  %v136 = vpop.permute.xlu0 %135
  %vm138 = vcmask 261120
  %v139 = vsel %vm138, %v127, %v136
  %v140 = vpack.c.bf16 %v139, %v139
  %v149 = vunpack.c.l.b16 %v61
  %v150 = vunpack.c.l.b16 %v62
  %v151 = vunpack.c.l.b16 %v63
  %v152 = vunpack.c.l.b16 %v64
  %v153 = vunpack.c.l.b16 %v65
  %v154 = vunpack.c.l.b16 %v66
  %v155 = vunpack.c.l.b16 %v67
  %v156 = vunpack.c.l.b16 %v68
  %v157 = vpack.c.b16 %v150, %v149
  %v158 = vpack.c.b16 %v152, %v151
  %v159 = vpack.c.b16 %v154, %v153
  %v160 = vpack.c.b16 %v156, %v155
  %vm165 = vcmask 523264
  %v167 = vsel %vm165, %v140, 0
  %169 = vmatprep.subr.bf16.mxu0 0
  %170 = vmatpush1.bf16.msra.mxu0 0
  %171 = vmatprep.subr.bf16.mxu0 0
  %172 = vmatpush1.bf16.msra.mxu0 0
  %173 = vmatprep.subr.bf16.mxu0 0
  %174 = vmatpush1.bf16.msra.mxu0 0
  %175 = vmatprep.subr.bf16.mxu0 0
  %176 = vmatpush1.bf16.msra.mxu0 0
  %177 = vmatprep.subr.bf16.mxu0 0
  %178 = vmatpush1.bf16.msra.mxu0 %v160
  %179 = vmatprep.subr.bf16.mxu0 0
  %180 = vmatpush1.bf16.msra.mxu0 %v159
  %181 = vmatprep.subr.bf16.mxu0 0
  %182 = vmatpush1.bf16.msra.mxu0 %v158
  %183 = vmatprep.subr.bf16.mxu0 0
  %184 = vmatpush1.bf16.msra.mxu0 %v157
  %185 = vmatprep.subr.bf16.mxu0 0
  %186 = vmatpush2.bf16.msra.mxu0 0
  %187 = vmatprep.subr.bf16.mxu0 0
  %188 = vmatpush2.bf16.msra.mxu0 0
  %189 = vmatprep.subr.bf16.mxu0 0
  %190 = vmatpush2.bf16.msra.mxu0 0
  %191 = vmatprep.subr.bf16.mxu0 0
  %192 = vmatpush2.bf16.msra.mxu0 0
  %193 = vmatprep.subr.bf16.mxu0 0
  %194 = vmatpush2.bf16.msra.mxu0 0
  %195 = vmatprep.subr.bf16.mxu0 0
  %196 = vmatpush2.bf16.msra.mxu0 0
  %197 = vmatprep.subr.bf16.mxu0 0
  %198 = vmatpush2.bf16.msra.mxu0 0
  %199 = vmatprep.subr.bf16.mxu0 0
  %200 = vmatpush2.bf16.msra.mxu0 0
  %201 = vmatprep.mubr.bf16.mxu0 0
  %202 = vmatmul.mubr.bf16.gmra.mxu0 %v167
  %v203 = vpop.f32.mrf.mxu0
  %v204 = vadd.f32 %v83, %v203
  %v205 = vpop.f32.mrf.mxu0
  %v206 = vpop.f32.mrf.mxu0
  %v207 = vpop.f32.mrf.mxu0
  %208 = vdwg.mxu0
  %v211 = vunpack.c.l.s4 1966171168
  %v212 = vunpack.c.0.s8 %v211
  %v213 = vlaneseq
  %v214 = vshrl.u32 %v213, 7
  %v215 = vsub.s32 %v212, %v214
  %v216 = vrot.slane %v204, %v215
  %v217 = vcombine.high %v216, %v216
  %v219 = vunpack.c.l.s4 1966171168
  %v220 = vunpack.c.0.s8 %v219
  %v221 = vlaneseq
  %v222 = vshrl.u32 %v221, 7
  %v223 = vsub.s32 %v220, %v222
  %v224 = vrot.slane %v216, %v223
  %v226 = vunpack.c.l.s4 1966171168
  %v227 = vunpack.c.0.s8 %v226
  %v228 = vlaneseq
  %v229 = vshrl.u32 %v228, 7
  %v230 = vsub.s32 %v227, %v229
  %v231 = vrot.slane %v217, %v230
  %v232 = vcombine.high %v224, %v224
  %v233 = vcombine.high %v231, %v231
  %v234 = vlaneseq
  %v235 = vshrl.u32 %v234, 7
  %v236 = vsub.s32 0, %v235
  %v237 = vrot.slane %v224, %v236
  %v238 = vlaneseq
  %v239 = vshrl.u32 %v238, 7
  %v240 = vsub.s32 0, %v239
  %v241 = vrot.slane %v231, %v240
  %v242 = vlaneseq
  %v243 = vshrl.u32 %v242, 7
  %v244 = vsub.s32 0, %v243
  %v245 = vrot.slane %v232, %v244
  %v246 = vlaneseq
  %v247 = vshrl.u32 %v246, 7
  %v248 = vsub.s32 0, %v247
  %v249 = vrot.slane %v233, %v248
  %v254 = vadd.f32 %v237, %v50
  %v255 = vadd.f32 %v241, %v51
  %v256 = vadd.f32 %v245, %v50
  %v257 = vadd.f32 %v249, %v51
  %v258 = vtanh.pop %v254
  %v259 = vtanh.pop %v255
  %v260 = vtanh.pop %v256
  %v261 = vtanh.pop %v257
  %v263 = vlaneseq
  %v264 = vshrl.u32 %v263, 7
  %v265 = vsub.s32 0, %v264
  %v266 = vrot.slane %v60, %v265
  %v268 = vmul.f32 %v258, %v266
  %v269 = vmul.f32 %v259, %v266
  %v270 = vmul.f32 %v260, %v266
  %v271 = vmul.f32 %v261, %v266
  %v272 = vsel %vm138, %v268, 0.0
  %273 = vadd.xlane.f32.xlu0 %v272
  %v274 = vpop.xlane.xlu0 %273
  %v275 = vsel %vm138, %v269, 0.0
  %276 = vadd.xlane.f32.xlu0 %v275
  %v277 = vpop.xlane.xlu0 %276
  %v278 = vsel %vm138, %v270, 0.0
  %279 = vadd.xlane.f32.xlu0 %v278
  %v280 = vpop.xlane.xlu0 %279
  %v281 = vsel %vm138, %v271, 0.0
  %282 = vadd.xlane.f32.xlu0 %v281
  %v283 = vpop.xlane.xlu0 %282
  %v285 = vlaneseq
  %v286 = vshrl.u32 %v285, 7
  %v287 = vsub.s32 0, %v286
  %v288 = vrot.slane %v59, %v287
  %290 = vbcast.lane.b32.xlu0 %v288, 256
  %v291 = vpop.permute.xlu0 %290
  %v292 = vlaneseq
  %v293 = vshrl.u32 %v292, 7
  %v294 = vsub.s32 1, %v293
  %v295 = vrot.slane %v59, %v294
  %297 = vbcast.lane.b32.xlu0 %v295, 256
  %v298 = vpop.permute.xlu0 %297
  %v299 = vlaneseq
  %v300 = vshrl.u32 %v299, 7
  %v301 = vsub.s32 2, %v300
  %v302 = vrot.slane %v59, %v301
  %304 = vbcast.lane.b32.xlu0 %v302, 256
  %v305 = vpop.permute.xlu0 %304
  %v306 = vlaneseq
  %v307 = vshrl.u32 %v306, 7
  %v308 = vsub.s32 3, %v307
  %v309 = vrot.slane %v59, %v308
  %311 = vbcast.lane.b32.xlu0 %v309, 256
  %v312 = vpop.permute.xlu0 %311
  %v317 = vadd.f32 %v274, %v291
  %v318 = vadd.f32 %v277, %v298
  %v319 = vadd.f32 %v280, %v305
  %v320 = vadd.f32 %v283, %v312
  %325 = vset.pattern.permute.xlu0 0
  %326 = vperm.xlu0 %325, %v317
  %v327 = vpop.permute.xlu0 %326
  %328 = vset.pattern.permute.xlu0 0
  %329 = vperm.xlu0 %328, %v318
  %v330 = vpop.permute.xlu0 %329
  %331 = vset.pattern.permute.xlu0 0
  %332 = vperm.xlu0 %331, %v319
  %v333 = vpop.permute.xlu0 %332
  %334 = vset.pattern.permute.xlu0 0
  %335 = vperm.xlu0 %334, %v320
  %v336 = vpop.permute.xlu0 %335
  %v337 = vlaneseq
  %v338 = vand.u32 %v337, 127
  %v339 = vlaneseq
  %v340 = vshrl.u32 %v339, 7
  %v341 = vsub.s32 %v338, %v340
  %v342 = vrot.slane %v327, %v341
  %v343 = vlaneseq
  %v344 = vshrl.u32 %v343, 7
  %v345 = vsub.s32 %v338, %v344
  %v346 = vrot.slane %v330, %v345
  %v347 = vlaneseq
  %v348 = vshrl.u32 %v347, 7
  %v349 = vsub.s32 %v338, %v348
  %v350 = vrot.slane %v333, %v349
  %v351 = vlaneseq
  %v352 = vshrl.u32 %v351, 7
  %v353 = vsub.s32 %v338, %v352
  %v354 = vrot.slane %v336, %v353
  %vm355 = vcmask 1041409
  %v356 = vsel %vm355, %v346, %v342
  %vm357 = vcmask 1042434
  %v358 = vsel %vm357, %v350, %v356
  %vm359 = vcmask 1043459
  %v360 = vsel %vm359, %v354, %v358
  %vm362 = vcmask 60416
  %v363 = vsel %vm362, %v360, -inf
  %364 = vmax.xlane.f32.xlu0 %v363
  %v365 = vpop.xlane.xlu0 %364
  %v367 = vlaneseq
  %v368 = vshrl.u32 %v367, 7
  %v369 = vsub.s32 0, %v368
  %v370 = vrot.slane %v365, %v369
  %v371 = vlaneseq
  %v372 = vshrl.u32 %v371, 7
  %v373 = vsub.s32 1, %v372
  %v374 = vrot.slane %v365, %v373
  %v375 = vlaneseq
  %v376 = vshrl.u32 %v375, 7
  %v377 = vsub.s32 2, %v376
  %v378 = vrot.slane %v365, %v377
  %v379 = vlaneseq
  %v380 = vshrl.u32 %v379, 7
  %v381 = vsub.s32 3, %v380
  %v382 = vrot.slane %v365, %v381
  %v387 = vsub.f32 %v317, %v370
  %v388 = vsub.f32 %v318, %v374
  %v389 = vsub.f32 %v319, %v378
  %v390 = vsub.f32 %v320, %v382
  %v391 = vmul.f32 %v387, 1.442695
  %v392 = vpow.pop %v391
  %v393 = vmul.f32 %v388, 1.442695
  %v394 = vpow.pop %v393
  %v395 = vmul.f32 %v389, 1.442695
  %v396 = vpow.pop %v395
  %v397 = vmul.f32 %v390, 1.442695
  %v398 = vpow.pop %v397
  %403 = vset.pattern.permute.xlu0 0
  %404 = vperm.xlu0 %403, %v392
  %v405 = vpop.permute.xlu0 %404
  %406 = vset.pattern.permute.xlu0 0
  %407 = vperm.xlu0 %406, %v394
  %v408 = vpop.permute.xlu0 %407
  %409 = vset.pattern.permute.xlu0 0
  %410 = vperm.xlu0 %409, %v396
  %v411 = vpop.permute.xlu0 %410
  %412 = vset.pattern.permute.xlu0 0
  %413 = vperm.xlu0 %412, %v398
  %v414 = vpop.permute.xlu0 %413
  %v415 = vlaneseq
  %v416 = vshrl.u32 %v415, 7
  %v417 = vsub.s32 %v338, %v416
  %v418 = vrot.slane %v405, %v417
  %v419 = vlaneseq
  %v420 = vshrl.u32 %v419, 7
  %v421 = vsub.s32 %v338, %v420
  %v422 = vrot.slane %v408, %v421
  %v423 = vlaneseq
  %v424 = vshrl.u32 %v423, 7
  %v425 = vsub.s32 %v338, %v424
  %v426 = vrot.slane %v411, %v425
  %v427 = vlaneseq
  %v428 = vshrl.u32 %v427, 7
  %v429 = vsub.s32 %v338, %v428
  %v430 = vrot.slane %v414, %v429
  %v431 = vsel %vm355, %v422, %v418
  %v432 = vsel %vm357, %v426, %v431
  %v433 = vsel %vm359, %v430, %v432
  %v435 = vsel %vm362, %v433, 0.0
  %436 = vadd.xlane.f32.xlu0 %v435
  %v437 = vpop.xlane.xlu0 %436
  %v438 = vrcp.pop %v437
  %v440 = vlaneseq
  %v441 = vshrl.u32 %v440, 7
  %v442 = vsub.s32 0, %v441
  %v443 = vrot.slane %v438, %v442
  %v444 = vlaneseq
  %v445 = vshrl.u32 %v444, 7
  %v446 = vsub.s32 1, %v445
  %v447 = vrot.slane %v438, %v446
  %v448 = vlaneseq
  %v449 = vshrl.u32 %v448, 7
  %v450 = vsub.s32 2, %v449
  %v451 = vrot.slane %v438, %v450
  %v452 = vlaneseq
  %v453 = vshrl.u32 %v452, 7
  %v454 = vsub.s32 3, %v453
  %v455 = vrot.slane %v438, %v454
  %v460 = vmul.f32 %v392, %v443
  %v461 = vmul.f32 %v394, %v447
  %v462 = vmul.f32 %v396, %v451
  %v463 = vmul.f32 %v398, %v455
  %v464 = vpack.c.bf16 %v460, %v460
  %v465 = vpack.c.bf16 %v461, %v461
  %v466 = vpack.c.bf16 %v462, %v462
  %v467 = vpack.c.bf16 %v463, %v463
  %v469 = vunpack.c.l.b16 %v464
  %470 = vset.pattern.permute.xlu0 0
  %471 = vperm.xlu0 %470, %v469
  %v472 = vpop.permute.xlu0 %471
  %v473 = vlaneseq
  %v474 = vshrl.u32 %v473, 7
  %v475 = vsub.s32 %v338, %v474
  %v476 = vrot.slane %v472, %v475
  %v477 = vpack.c.b16 %v476, %v476
  %vm478 = vcmask 64512
  %v480 = vsel %vm478, %v477, 0
  %vm482 = vcmask 1043456
  %v484 = vsel %vm482, %v48, 0
  %486 = vmatprep.subr.bf16.mxu0 0
  %487 = vmatpush1.bf16.msra.mxu0 0
  %488 = vmatprep.subr.bf16.mxu0 0
  %489 = vmatpush1.bf16.msra.mxu0 0
  %490 = vmatprep.subr.bf16.mxu0 0
  %491 = vmatpush1.bf16.msra.mxu0 0
  %492 = vmatprep.subr.bf16.mxu0 0
  %493 = vmatpush1.bf16.msra.mxu0 0
  %494 = vmatprep.subr.bf16.mxu0 0
  %495 = vmatpush1.bf16.msra.mxu0 0
  %496 = vmatprep.subr.bf16.mxu0 0
  %497 = vmatpush1.bf16.msra.mxu0 0
  %498 = vmatprep.subr.bf16.mxu0 0
  %499 = vmatpush1.bf16.msra.mxu0 0
  %500 = vmatprep.subr.bf16.mxu0 0
  %501 = vmatpush1.bf16.msra.mxu0 %v484
  %502 = vmatprep.subr.bf16.mxu0 0
  %503 = vmatpush2.bf16.msra.mxu0 0
  %504 = vmatprep.subr.bf16.mxu0 0
  %505 = vmatpush2.bf16.msra.mxu0 0
  %506 = vmatprep.subr.bf16.mxu0 0
  %507 = vmatpush2.bf16.msra.mxu0 0
  %508 = vmatprep.subr.bf16.mxu0 0
  %509 = vmatpush2.bf16.msra.mxu0 0
  %510 = vmatprep.subr.bf16.mxu0 0
  %511 = vmatpush2.bf16.msra.mxu0 0
  %512 = vmatprep.subr.bf16.mxu0 0
  %513 = vmatpush2.bf16.msra.mxu0 0
  %514 = vmatprep.subr.bf16.mxu0 0
  %515 = vmatpush2.bf16.msra.mxu0 0
  %516 = vmatprep.subr.bf16.mxu0 0
  %517 = vmatpush2.bf16.msra.mxu0 0
  %518 = vmatprep.mubr.bf16.mxu0 0
  %519 = vmatmul.mubr.bf16.gmra.mxu0 %v480
  %v520 = vpop.f32.mrf.mxu0
  %v521 = vadd.f32 0.0, %v520
  %v522 = vpop.f32.mrf.mxu0
  %v523 = vpop.f32.mrf.mxu0
  %v524 = vpop.f32.mrf.mxu0
  %525 = vdwg.mxu0
  %v527 = vunpack.c.l.b16 %v465
  %528 = vset.pattern.permute.xlu0 0
  %529 = vperm.xlu0 %528, %v527
  %v530 = vpop.permute.xlu0 %529
  %v531 = vlaneseq
  %v532 = vshrl.u32 %v531, 7
  %v533 = vsub.s32 %v338, %v532
  %v534 = vrot.slane %v530, %v533
  %v535 = vpack.c.b16 %v534, %v534
  %v537 = vsel %vm478, %v535, 0
  %v540 = vsel %vm482, %v49, 0
  %542 = vmatprep.subr.bf16.mxu0 0
  %543 = vmatpush1.bf16.msra.mxu0 0
  %544 = vmatprep.subr.bf16.mxu0 0
  %545 = vmatpush1.bf16.msra.mxu0 0
  %546 = vmatprep.subr.bf16.mxu0 0
  %547 = vmatpush1.bf16.msra.mxu0 0
  %548 = vmatprep.subr.bf16.mxu0 0
  %549 = vmatpush1.bf16.msra.mxu0 0
  %550 = vmatprep.subr.bf16.mxu0 0
  %551 = vmatpush1.bf16.msra.mxu0 0
  %552 = vmatprep.subr.bf16.mxu0 0
  %553 = vmatpush1.bf16.msra.mxu0 0
  %554 = vmatprep.subr.bf16.mxu0 0
  %555 = vmatpush1.bf16.msra.mxu0 0
  %556 = vmatprep.subr.bf16.mxu0 0
  %557 = vmatpush1.bf16.msra.mxu0 %v540
  %558 = vmatprep.subr.bf16.mxu0 0
  %559 = vmatpush2.bf16.msra.mxu0 0
  %560 = vmatprep.subr.bf16.mxu0 0
  %561 = vmatpush2.bf16.msra.mxu0 0
  %562 = vmatprep.subr.bf16.mxu0 0
  %563 = vmatpush2.bf16.msra.mxu0 0
  %564 = vmatprep.subr.bf16.mxu0 0
  %565 = vmatpush2.bf16.msra.mxu0 0
  %566 = vmatprep.subr.bf16.mxu0 0
  %567 = vmatpush2.bf16.msra.mxu0 0
  %568 = vmatprep.subr.bf16.mxu0 0
  %569 = vmatpush2.bf16.msra.mxu0 0
  %570 = vmatprep.subr.bf16.mxu0 0
  %571 = vmatpush2.bf16.msra.mxu0 0
  %572 = vmatprep.subr.bf16.mxu0 0
  %573 = vmatpush2.bf16.msra.mxu0 0
  %574 = vmatprep.mubr.bf16.mxu0 0
  %575 = vmatmul.mubr.bf16.gmra.mxu0 %v537
  %v576 = vpop.f32.mrf.mxu0
  %v577 = vadd.f32 0.0, %v576
  %v578 = vpop.f32.mrf.mxu0
  %v579 = vpop.f32.mrf.mxu0
  %v580 = vpop.f32.mrf.mxu0
  %581 = vdwg.mxu0
  %v583 = vunpack.c.l.b16 %v466
  %584 = vset.pattern.permute.xlu0 0
  %585 = vperm.xlu0 %584, %v583
  %v586 = vpop.permute.xlu0 %585
  %v587 = vlaneseq
  %v588 = vshrl.u32 %v587, 7
  %v589 = vsub.s32 %v338, %v588
  %v590 = vrot.slane %v586, %v589
  %v591 = vpack.c.b16 %v590, %v590
  %v593 = vsel %vm478, %v591, 0
  %595 = vmatprep.subr.bf16.mxu0 0
  %596 = vmatpush1.bf16.msra.mxu0 0
  %597 = vmatprep.subr.bf16.mxu0 0
  %598 = vmatpush1.bf16.msra.mxu0 0
  %599 = vmatprep.subr.bf16.mxu0 0
  %600 = vmatpush1.bf16.msra.mxu0 0
  %601 = vmatprep.subr.bf16.mxu0 0
  %602 = vmatpush1.bf16.msra.mxu0 0
  %603 = vmatprep.subr.bf16.mxu0 0
  %604 = vmatpush1.bf16.msra.mxu0 0
  %605 = vmatprep.subr.bf16.mxu0 0
  %606 = vmatpush1.bf16.msra.mxu0 0
  %607 = vmatprep.subr.bf16.mxu0 0
  %608 = vmatpush1.bf16.msra.mxu0 0
  %609 = vmatprep.subr.bf16.mxu0 0
  %610 = vmatpush1.bf16.msra.mxu0 %v484
  %611 = vmatprep.subr.bf16.mxu0 0
  %612 = vmatpush2.bf16.msra.mxu0 0
  %613 = vmatprep.subr.bf16.mxu0 0
  %614 = vmatpush2.bf16.msra.mxu0 0
  %615 = vmatprep.subr.bf16.mxu0 0
  %616 = vmatpush2.bf16.msra.mxu0 0
  %617 = vmatprep.subr.bf16.mxu0 0
  %618 = vmatpush2.bf16.msra.mxu0 0
  %619 = vmatprep.subr.bf16.mxu0 0
  %620 = vmatpush2.bf16.msra.mxu0 0
  %621 = vmatprep.subr.bf16.mxu0 0
  %622 = vmatpush2.bf16.msra.mxu0 0
  %623 = vmatprep.subr.bf16.mxu0 0
  %624 = vmatpush2.bf16.msra.mxu0 0
  %625 = vmatprep.subr.bf16.mxu0 0
  %626 = vmatpush2.bf16.msra.mxu0 0
  %627 = vmatprep.mubr.bf16.mxu0 0
  %628 = vmatmul.mubr.bf16.gmra.mxu0 %v593
  %v629 = vpop.f32.mrf.mxu0
  %v630 = vadd.f32 0.0, %v629
  %v631 = vpop.f32.mrf.mxu0
  %v632 = vpop.f32.mrf.mxu0
  %v633 = vpop.f32.mrf.mxu0
  %634 = vdwg.mxu0
  %v636 = vunpack.c.l.b16 %v467
  %637 = vset.pattern.permute.xlu0 0
  %638 = vperm.xlu0 %637, %v636
  %v639 = vpop.permute.xlu0 %638
  %v640 = vlaneseq
  %v641 = vshrl.u32 %v640, 7
  %v642 = vsub.s32 %v338, %v641
  %v643 = vrot.slane %v639, %v642
  %v644 = vpack.c.b16 %v643, %v643
  %v646 = vsel %vm478, %v644, 0
  %648 = vmatprep.subr.bf16.mxu0 0
  %649 = vmatpush1.bf16.msra.mxu0 0
  %650 = vmatprep.subr.bf16.mxu0 0
  %651 = vmatpush1.bf16.msra.mxu0 0
  %652 = vmatprep.subr.bf16.mxu0 0
  %653 = vmatpush1.bf16.msra.mxu0 0
  %654 = vmatprep.subr.bf16.mxu0 0
  %655 = vmatpush1.bf16.msra.mxu0 0
  %656 = vmatprep.subr.bf16.mxu0 0
  %657 = vmatpush1.bf16.msra.mxu0 0
  %658 = vmatprep.subr.bf16.mxu0 0
  %659 = vmatpush1.bf16.msra.mxu0 0
  %660 = vmatprep.subr.bf16.mxu0 0
  %661 = vmatpush1.bf16.msra.mxu0 0
  %662 = vmatprep.subr.bf16.mxu0 0
  %663 = vmatpush1.bf16.msra.mxu0 %v540
  %664 = vmatprep.subr.bf16.mxu0 0
  %665 = vmatpush2.bf16.msra.mxu0 0
  %666 = vmatprep.subr.bf16.mxu0 0
  %667 = vmatpush2.bf16.msra.mxu0 0
  %668 = vmatprep.subr.bf16.mxu0 0
  %669 = vmatpush2.bf16.msra.mxu0 0
  %670 = vmatprep.subr.bf16.mxu0 0
  %671 = vmatpush2.bf16.msra.mxu0 0
  %672 = vmatprep.subr.bf16.mxu0 0
  %673 = vmatpush2.bf16.msra.mxu0 0
  %674 = vmatprep.subr.bf16.mxu0 0
  %675 = vmatpush2.bf16.msra.mxu0 0
  %676 = vmatprep.subr.bf16.mxu0 0
  %677 = vmatpush2.bf16.msra.mxu0 0
  %678 = vmatprep.subr.bf16.mxu0 0
  %679 = vmatpush2.bf16.msra.mxu0 0
  %680 = vmatprep.mubr.bf16.mxu0 0
  %681 = vmatmul.mubr.bf16.gmra.mxu0 %v646
  %v682 = vpop.f32.mrf.mxu0
  %v683 = vadd.f32 0.0, %v682
  %v684 = vpop.f32.mrf.mxu0
  %v685 = vpop.f32.mrf.mxu0
  %v686 = vpop.f32.mrf.mxu0
  %687 = vdwg.mxu0
  %v688 = vrot.slane %v125, 1
  %v689 = vrot.slane %v125, 2
  %v690 = vrot.slane %v125, 3
  %v694 = vmul.f32 %v521, %v125
  %v695 = vmul.f32 %v577, %v688
  %v696 = vmul.f32 %v630, %v689
  %v697 = vmul.f32 %v683, %v690
  %v698 = vrot.slane %v131, 1
  %v699 = vrot.slane %v131, 2
  %v700 = vrot.slane %v131, 3
  %v704 = vmul.f32 %v521, %v131
  %v705 = vmul.f32 %v577, %v698
  %v706 = vmul.f32 %v630, %v699
  %v707 = vmul.f32 %v683, %v700
  %v712 = vrot.slane %v695, 7
  %v713 = vsel %vm355, %v712, %v694
  %v714 = vrot.slane %v696, 6
  %v715 = vsel %vm357, %v714, %v713
  %v716 = vrot.slane %v697, 5
  %v717 = vsel %vm359, %v716, %v715
  %v723 = vrot.slane %v705, 7
  %v724 = vsel %vm355, %v723, %v704
  %v725 = vrot.slane %v706, 6
  %v726 = vsel %vm357, %v725, %v724
  %v727 = vrot.slane %v707, 5
  %v728 = vsel %vm359, %v727, %v726
  %729 = vrot.lane.b32.xlu0 %v728, 32
  %v730 = vpop.permute.xlu0 %729
  %v732 = vsel %vm138, %v717, %v730
  %v733 = vpack.c.bf16 %v732, %v732
  %v742 = vunpack.c.l.b16 %v84
  %v743 = vunpack.c.l.b16 %v85
  %v744 = vunpack.c.l.b16 %v86
  %v745 = vunpack.c.l.b16 %v87
  %v746 = vunpack.c.l.b16 %v88
  %v747 = vunpack.c.l.b16 %v89
  %v748 = vunpack.c.l.b16 %v90
  %v749 = vunpack.c.l.b16 %v91
  %v750 = vpack.c.b16 %v743, %v742
  %v751 = vpack.c.b16 %v745, %v744
  %v752 = vpack.c.b16 %v747, %v746
  %v753 = vpack.c.b16 %v749, %v748
  %v759 = vsel %vm165, %v733, 0
  %761 = vmatprep.subr.bf16.mxu0 0
  %762 = vmatpush1.bf16.msra.mxu0 0
  %763 = vmatprep.subr.bf16.mxu0 0
  %764 = vmatpush1.bf16.msra.mxu0 0
  %765 = vmatprep.subr.bf16.mxu0 0
  %766 = vmatpush1.bf16.msra.mxu0 0
  %767 = vmatprep.subr.bf16.mxu0 0
  %768 = vmatpush1.bf16.msra.mxu0 0
  %769 = vmatprep.subr.bf16.mxu0 0
  %770 = vmatpush1.bf16.msra.mxu0 %v753
  %771 = vmatprep.subr.bf16.mxu0 0
  %772 = vmatpush1.bf16.msra.mxu0 %v752
  %773 = vmatprep.subr.bf16.mxu0 0
  %774 = vmatpush1.bf16.msra.mxu0 %v751
  %775 = vmatprep.subr.bf16.mxu0 0
  %776 = vmatpush1.bf16.msra.mxu0 %v750
  %777 = vmatprep.subr.bf16.mxu0 0
  %778 = vmatpush2.bf16.msra.mxu0 0
  %779 = vmatprep.subr.bf16.mxu0 0
  %780 = vmatpush2.bf16.msra.mxu0 0
  %781 = vmatprep.subr.bf16.mxu0 0
  %782 = vmatpush2.bf16.msra.mxu0 0
  %783 = vmatprep.subr.bf16.mxu0 0
  %784 = vmatpush2.bf16.msra.mxu0 0
  %785 = vmatprep.subr.bf16.mxu0 0
  %786 = vmatpush2.bf16.msra.mxu0 0
  %787 = vmatprep.subr.bf16.mxu0 0
  %788 = vmatpush2.bf16.msra.mxu0 0
  %789 = vmatprep.subr.bf16.mxu0 0
  %790 = vmatpush2.bf16.msra.mxu0 0
  %791 = vmatprep.subr.bf16.mxu0 0
  %792 = vmatpush2.bf16.msra.mxu0 0
  %793 = vmatprep.mubr.bf16.mxu0 0
  %794 = vmatmul.mubr.bf16.gmra.mxu0 %v759
  %v795 = vpop.f32.mrf.mxu0
  %v796 = vadd.f32 %v106, %v795
  %v797 = vpop.f32.mrf.mxu0
  %v798 = vpop.f32.mrf.mxu0
  %v799 = vpop.f32.mrf.mxu0
  %800 = vdwg.mxu0
  %801 = vrot.lane.b32.xlu0 %v204, 96
  %v802 = vpop.permute.xlu0 %801
  %v804 = vadd.f32 %v796, %v802
  %v805 = vxor.u32 %v804, 2147483648
  %v806 = vmul.f32 %v805, 1.442695
  %v807 = vpow.pop %v806
  %v808 = vadd.f32 %v807, 1.0
  %v809 = vrcp.pop %v808
  %v810 = vmul.f32 1.0, %v809
  %811 = vrot.lane.b32.xlu0 %v204, 32
  %v812 = vpop.permute.xlu0 %811
  %v814 = vmul.f32 %v810, %v812
  %816 = vrot.lane.b32.xlu0 %v814, 64
  %v817 = vpop.permute.xlu0 %816
  %v819 = vadd.f32 %v796, %v817
  %v820 = vtanh.pop %v819
  %v821 = vsub.f32 1.0, %v810
  %823 = vrot.lane.b32.xlu0 %v820, 96
  %v824 = vpop.permute.xlu0 %823
  %v826 = vmul.f32 %v821, %v824
  %828 = vrot.lane.b32.xlu0 %v121, 32
  %v829 = vpop.permute.xlu0 %828
  %v831 = vmul.f32 %v810, %v829
  %v832 = vadd.f32 %v826, %v831
  %v833 = vpack.c.bf16 %v832, %v832
  %v835 = vlaneseq
  %v836 = vshrl.u32 %v835, 7
  %v837 = vsub.s32 0, %v836
  %v838 = vrot.slane %v111, %v837
  %841 = vrot.lane.b32.xlu0 %v833, 96
  %v842 = vpop.permute.xlu0 %841
  %v847 = vunpack.c.l.b16 %v107
  %v848 = vunpack.c.l.b16 %v108
  %v849 = vunpack.c.l.b16 %v109
  %v850 = vunpack.c.l.b16 %v110
  %v851 = vpack.c.b16 %v848, %v847
  %v852 = vpack.c.b16 %v850, %v849
  %v856 = vsel %vm138, %v842, 0
  %858 = vmatprep.subr.bf16.mxu0 0
  %859 = vmatpush1.bf16.msra.mxu0 0
  %860 = vmatprep.subr.bf16.mxu0 0
  %861 = vmatpush1.bf16.msra.mxu0 0
  %862 = vmatprep.subr.bf16.mxu0 0
  %863 = vmatpush1.bf16.msra.mxu0 0
  %864 = vmatprep.subr.bf16.mxu0 0
  %865 = vmatpush1.bf16.msra.mxu0 0
  %866 = vmatprep.subr.bf16.mxu0 0
  %867 = vmatpush1.bf16.msra.mxu0 0
  %868 = vmatprep.subr.bf16.mxu0 0
  %869 = vmatpush1.bf16.msra.mxu0 0
  %870 = vmatprep.subr.bf16.mxu0 0
  %871 = vmatpush1.bf16.msra.mxu0 %v852
  %872 = vmatprep.subr.bf16.mxu0 0
  %873 = vmatpush1.bf16.msra.mxu0 %v851
  %874 = vmatprep.subr.bf16.mxu0 0
  %875 = vmatpush2.bf16.msra.mxu0 0
  %876 = vmatprep.subr.bf16.mxu0 0
  %877 = vmatpush2.bf16.msra.mxu0 0
  %878 = vmatprep.subr.bf16.mxu0 0
  %879 = vmatpush2.bf16.msra.mxu0 0
  %880 = vmatprep.subr.bf16.mxu0 0
  %881 = vmatpush2.bf16.msra.mxu0 0
  %882 = vmatprep.subr.bf16.mxu0 0
  %883 = vmatpush2.bf16.msra.mxu0 0
  %884 = vmatprep.subr.bf16.mxu0 0
  %885 = vmatpush2.bf16.msra.mxu0 0
  %886 = vmatprep.subr.bf16.mxu0 0
  %887 = vmatpush2.bf16.msra.mxu0 0
  %888 = vmatprep.subr.bf16.mxu0 0
  %889 = vmatpush2.bf16.msra.mxu0 0
  %890 = vmatprep.mubr.bf16.mxu0 0
  %891 = vmatmul.mubr.bf16.gmra.mxu0 %v856
  %v892 = vpop.f32.mrf.mxu0
  %v893 = vadd.f32 %v838, %v892
  %v894 = vpop.f32.mrf.mxu0
  %v895 = vpop.f32.mrf.mxu0
  %v896 = vpop.f32.mrf.mxu0
  %897 = vdwg.mxu0
  %v900 = vunpack.c.l.s4 1983009808
  %v901 = vunpack.c.0.s8 %v900
  %v902 = vlaneseq
  %v903 = vshrl.u32 %v902, 7
  %v904 = vsub.s32 %v901, %v903
  %v905 = vrot.slane %v893, %v904
  %906 = vrot.lane.b32.xlu0 %v905, 32
  %v907 = vpop.permute.xlu0 %906
  %vm909 = vcmask 517376
  %910 = vst.msk [vmem:[%s14] sm:$0x3] %vm909, %v907
  %v911 = vcombine.high %v905, %v905
  %912 = vrot.lane.b32.xlu0 %v911, 64
  %v913 = vpop.permute.xlu0 %912
  %vm915 = vcmask 779776
  %916 = vst.msk [vmem:[%s14] sm:$0x3] %vm915, %v913
  %v917 = vmul.f32 %v832, %v125
  %v918 = vmul.f32 %v832, %v131
  %920 = vrot.lane.b32.xlu0 %v917, 96
  %v921 = vpop.permute.xlu0 %920
  %v923 = vsel %vm138, %v921, %v918
  %v924 = vpack.c.bf16 %v923, %v923
  %v926 = vsel %vm165, %v924, 0
  %928 = vmatprep.subr.bf16.mxu0 0
  %929 = vmatpush1.bf16.msra.mxu0 0
  %930 = vmatprep.subr.bf16.mxu0 0
  %931 = vmatpush1.bf16.msra.mxu0 0
  %932 = vmatprep.subr.bf16.mxu0 0
  %933 = vmatpush1.bf16.msra.mxu0 0
  %934 = vmatprep.subr.bf16.mxu0 0
  %935 = vmatpush1.bf16.msra.mxu0 0
  %936 = vmatprep.subr.bf16.mxu0 0
  %937 = vmatpush1.bf16.msra.mxu0 %v160
  %938 = vmatprep.subr.bf16.mxu0 0
  %939 = vmatpush1.bf16.msra.mxu0 %v159
  %940 = vmatprep.subr.bf16.mxu0 0
  %941 = vmatpush1.bf16.msra.mxu0 %v158
  %942 = vmatprep.subr.bf16.mxu0 0
  %943 = vmatpush1.bf16.msra.mxu0 %v157
  %944 = vmatprep.subr.bf16.mxu0 0
  %945 = vmatpush2.bf16.msra.mxu0 0
  %946 = vmatprep.subr.bf16.mxu0 0
  %947 = vmatpush2.bf16.msra.mxu0 0
  %948 = vmatprep.subr.bf16.mxu0 0
  %949 = vmatpush2.bf16.msra.mxu0 0
  %950 = vmatprep.subr.bf16.mxu0 0
  %951 = vmatpush2.bf16.msra.mxu0 0
  %952 = vmatprep.subr.bf16.mxu0 0
  %953 = vmatpush2.bf16.msra.mxu0 0
  %954 = vmatprep.subr.bf16.mxu0 0
  %955 = vmatpush2.bf16.msra.mxu0 0
  %956 = vmatprep.subr.bf16.mxu0 0
  %957 = vmatpush2.bf16.msra.mxu0 0
  %958 = vmatprep.subr.bf16.mxu0 0
  %959 = vmatpush2.bf16.msra.mxu0 0
  %960 = vmatprep.mubr.bf16.mxu0 0
  %961 = vmatmul.mubr.bf16.gmra.mxu0 %v926
  %v962 = vpop.f32.mrf.mxu0
  %v963 = vadd.f32 %v83, %v962
  %v964 = vpop.f32.mrf.mxu0
  %v965 = vpop.f32.mrf.mxu0
  %v966 = vpop.f32.mrf.mxu0
  %967 = vdwg.mxu0
  %v970 = vunpack.c.l.s4 1966171168
  %v971 = vunpack.c.0.s8 %v970
  %v972 = vlaneseq
  %v973 = vshrl.u32 %v972, 7
  %v974 = vsub.s32 %v971, %v973
  %v975 = vrot.slane %v963, %v974
  %v976 = vcombine.high %v975, %v975
  %v978 = vunpack.c.l.s4 1966171168
  %v979 = vunpack.c.0.s8 %v978
  %v980 = vlaneseq
  %v981 = vshrl.u32 %v980, 7
  %v982 = vsub.s32 %v979, %v981
  %v983 = vrot.slane %v975, %v982
  %v985 = vunpack.c.l.s4 1966171168
  %v986 = vunpack.c.0.s8 %v985
  %v987 = vlaneseq
  %v988 = vshrl.u32 %v987, 7
  %v989 = vsub.s32 %v986, %v988
  %v990 = vrot.slane %v976, %v989
  %v991 = vcombine.high %v983, %v983
  %v992 = vcombine.high %v990, %v990
  %v993 = vlaneseq
  %v994 = vshrl.u32 %v993, 7
  %v995 = vsub.s32 0, %v994
  %v996 = vrot.slane %v983, %v995
  %v997 = vlaneseq
  %v998 = vshrl.u32 %v997, 7
  %v999 = vsub.s32 0, %v998
  %v1000 = vrot.slane %v990, %v999
  %v1001 = vlaneseq
  %v1002 = vshrl.u32 %v1001, 7
  %v1003 = vsub.s32 0, %v1002
  %v1004 = vrot.slane %v991, %v1003
  %v1005 = vlaneseq
  %v1006 = vshrl.u32 %v1005, 7
  %v1007 = vsub.s32 0, %v1006
  %v1008 = vrot.slane %v992, %v1007
  %v1013 = vadd.f32 %v996, %v50
  %v1014 = vadd.f32 %v1000, %v51
  %v1015 = vadd.f32 %v1004, %v50
  %v1016 = vadd.f32 %v1008, %v51
  %v1017 = vtanh.pop %v1013
  %v1018 = vtanh.pop %v1014
  %v1019 = vtanh.pop %v1015
  %v1020 = vtanh.pop %v1016
  %v1021 = vmul.f32 %v1017, %v266
  %v1022 = vmul.f32 %v1018, %v266
  %v1023 = vmul.f32 %v1019, %v266
  %v1024 = vmul.f32 %v1020, %v266
  %v1025 = vsel %vm138, %v1021, 0.0
  %1026 = vadd.xlane.f32.xlu0 %v1025
  %v1027 = vpop.xlane.xlu0 %1026
  %v1028 = vsel %vm138, %v1022, 0.0
  %1029 = vadd.xlane.f32.xlu0 %v1028
  %v1030 = vpop.xlane.xlu0 %1029
  %v1031 = vsel %vm138, %v1023, 0.0
  %1032 = vadd.xlane.f32.xlu0 %v1031
  %v1033 = vpop.xlane.xlu0 %1032
  %v1034 = vsel %vm138, %v1024, 0.0
  %1035 = vadd.xlane.f32.xlu0 %v1034
  %v1036 = vpop.xlane.xlu0 %1035
  %v1037 = vadd.f32 %v1027, %v291
  %v1038 = vadd.f32 %v1030, %v298
  %v1039 = vadd.f32 %v1033, %v305
  %v1040 = vadd.f32 %v1036, %v312
  %1045 = vset.pattern.permute.xlu0 0
  %1046 = vperm.xlu0 %1045, %v1037
  %v1047 = vpop.permute.xlu0 %1046
  %1048 = vset.pattern.permute.xlu0 0
  %1049 = vperm.xlu0 %1048, %v1038
  %v1050 = vpop.permute.xlu0 %1049
  %1051 = vset.pattern.permute.xlu0 0
  %1052 = vperm.xlu0 %1051, %v1039
  %v1053 = vpop.permute.xlu0 %1052
  %1054 = vset.pattern.permute.xlu0 0
  %1055 = vperm.xlu0 %1054, %v1040
  %v1056 = vpop.permute.xlu0 %1055
  %v1057 = vlaneseq
  %v1058 = vshrl.u32 %v1057, 7
  %v1059 = vsub.s32 %v338, %v1058
  %v1060 = vrot.slane %v1047, %v1059
  %v1061 = vlaneseq
  %v1062 = vshrl.u32 %v1061, 7
  %v1063 = vsub.s32 %v338, %v1062
  %v1064 = vrot.slane %v1050, %v1063
  %v1065 = vlaneseq
  %v1066 = vshrl.u32 %v1065, 7
  %v1067 = vsub.s32 %v338, %v1066
  %v1068 = vrot.slane %v1053, %v1067
  %v1069 = vlaneseq
  %v1070 = vshrl.u32 %v1069, 7
  %v1071 = vsub.s32 %v338, %v1070
  %v1072 = vrot.slane %v1056, %v1071
  %v1073 = vsel %vm355, %v1064, %v1060
  %v1074 = vsel %vm357, %v1068, %v1073
  %v1075 = vsel %vm359, %v1072, %v1074
  %v1077 = vsel %vm362, %v1075, -inf
  %1078 = vmax.xlane.f32.xlu0 %v1077
  %v1079 = vpop.xlane.xlu0 %1078
  %v1081 = vlaneseq
  %v1082 = vshrl.u32 %v1081, 7
  %v1083 = vsub.s32 0, %v1082
  %v1084 = vrot.slane %v1079, %v1083
  %v1085 = vlaneseq
  %v1086 = vshrl.u32 %v1085, 7
  %v1087 = vsub.s32 1, %v1086
  %v1088 = vrot.slane %v1079, %v1087
  %v1089 = vlaneseq
  %v1090 = vshrl.u32 %v1089, 7
  %v1091 = vsub.s32 2, %v1090
  %v1092 = vrot.slane %v1079, %v1091
  %v1093 = vlaneseq
  %v1094 = vshrl.u32 %v1093, 7
  %v1095 = vsub.s32 3, %v1094
  %v1096 = vrot.slane %v1079, %v1095
  %v1101 = vsub.f32 %v1037, %v1084
  %v1102 = vsub.f32 %v1038, %v1088
  %v1103 = vsub.f32 %v1039, %v1092
  %v1104 = vsub.f32 %v1040, %v1096
  %v1105 = vmul.f32 %v1101, 1.442695
  %v1106 = vpow.pop %v1105
  %v1107 = vmul.f32 %v1102, 1.442695
  %v1108 = vpow.pop %v1107
  %v1109 = vmul.f32 %v1103, 1.442695
  %v1110 = vpow.pop %v1109
  %v1111 = vmul.f32 %v1104, 1.442695
  %v1112 = vpow.pop %v1111
  %1117 = vset.pattern.permute.xlu0 0
  %1118 = vperm.xlu0 %1117, %v1106
  %v1119 = vpop.permute.xlu0 %1118
  %1120 = vset.pattern.permute.xlu0 0
  %1121 = vperm.xlu0 %1120, %v1108
  %v1122 = vpop.permute.xlu0 %1121
  %1123 = vset.pattern.permute.xlu0 0
  %1124 = vperm.xlu0 %1123, %v1110
  %v1125 = vpop.permute.xlu0 %1124
  %1126 = vset.pattern.permute.xlu0 0
  %1127 = vperm.xlu0 %1126, %v1112
  %v1128 = vpop.permute.xlu0 %1127
  %v1129 = vlaneseq
  %v1130 = vshrl.u32 %v1129, 7
  %v1131 = vsub.s32 %v338, %v1130
  %v1132 = vrot.slane %v1119, %v1131
  %v1133 = vlaneseq
  %v1134 = vshrl.u32 %v1133, 7
  %v1135 = vsub.s32 %v338, %v1134
  %v1136 = vrot.slane %v1122, %v1135
  %v1137 = vlaneseq
  %v1138 = vshrl.u32 %v1137, 7
  %v1139 = vsub.s32 %v338, %v1138
  %v1140 = vrot.slane %v1125, %v1139
  %v1141 = vlaneseq
  %v1142 = vshrl.u32 %v1141, 7
  %v1143 = vsub.s32 %v338, %v1142
  %v1144 = vrot.slane %v1128, %v1143
  %v1145 = vsel %vm355, %v1136, %v1132
  %v1146 = vsel %vm357, %v1140, %v1145
  %v1147 = vsel %vm359, %v1144, %v1146
  %v1149 = vsel %vm362, %v1147, 0.0
  %1150 = vadd.xlane.f32.xlu0 %v1149
  %v1151 = vpop.xlane.xlu0 %1150
  %v1152 = vrcp.pop %v1151
  %v1154 = vlaneseq
  %v1155 = vshrl.u32 %v1154, 7
  %v1156 = vsub.s32 0, %v1155
  %v1157 = vrot.slane %v1152, %v1156
  %v1158 = vlaneseq
  %v1159 = vshrl.u32 %v1158, 7
  %v1160 = vsub.s32 1, %v1159
  %v1161 = vrot.slane %v1152, %v1160
  %v1162 = vlaneseq
  %v1163 = vshrl.u32 %v1162, 7
  %v1164 = vsub.s32 2, %v1163
  %v1165 = vrot.slane %v1152, %v1164
  %v1166 = vlaneseq
  %v1167 = vshrl.u32 %v1166, 7
  %v1168 = vsub.s32 3, %v1167
  %v1169 = vrot.slane %v1152, %v1168
  %v1174 = vmul.f32 %v1106, %v1157
  %v1175 = vmul.f32 %v1108, %v1161
  %v1176 = vmul.f32 %v1110, %v1165
  %v1177 = vmul.f32 %v1112, %v1169
  %v1178 = vpack.c.bf16 %v1174, %v1174
  %v1179 = vpack.c.bf16 %v1175, %v1175
  %v1180 = vpack.c.bf16 %v1176, %v1176
  %v1181 = vpack.c.bf16 %v1177, %v1177
  %v1183 = vunpack.c.l.b16 %v1178
  %1184 = vset.pattern.permute.xlu0 0
  %1185 = vperm.xlu0 %1184, %v1183
  %v1186 = vpop.permute.xlu0 %1185
  %v1187 = vlaneseq
  %v1188 = vshrl.u32 %v1187, 7
  %v1189 = vsub.s32 %v338, %v1188
  %v1190 = vrot.slane %v1186, %v1189
  %v1191 = vpack.c.b16 %v1190, %v1190
  %v1193 = vsel %vm478, %v1191, 0
  %1195 = vmatprep.subr.bf16.mxu0 0
  %1196 = vmatpush1.bf16.msra.mxu0 0
  %1197 = vmatprep.subr.bf16.mxu0 0
  %1198 = vmatpush1.bf16.msra.mxu0 0
  %1199 = vmatprep.subr.bf16.mxu0 0
  %1200 = vmatpush1.bf16.msra.mxu0 0
  %1201 = vmatprep.subr.bf16.mxu0 0
  %1202 = vmatpush1.bf16.msra.mxu0 0
  %1203 = vmatprep.subr.bf16.mxu0 0
  %1204 = vmatpush1.bf16.msra.mxu0 0
  %1205 = vmatprep.subr.bf16.mxu0 0
  %1206 = vmatpush1.bf16.msra.mxu0 0
  %1207 = vmatprep.subr.bf16.mxu0 0
  %1208 = vmatpush1.bf16.msra.mxu0 0
  %1209 = vmatprep.subr.bf16.mxu0 0
  %1210 = vmatpush1.bf16.msra.mxu0 %v484
  %1211 = vmatprep.subr.bf16.mxu0 0
  %1212 = vmatpush2.bf16.msra.mxu0 0
  %1213 = vmatprep.subr.bf16.mxu0 0
  %1214 = vmatpush2.bf16.msra.mxu0 0
  %1215 = vmatprep.subr.bf16.mxu0 0
  %1216 = vmatpush2.bf16.msra.mxu0 0
  %1217 = vmatprep.subr.bf16.mxu0 0
  %1218 = vmatpush2.bf16.msra.mxu0 0
  %1219 = vmatprep.subr.bf16.mxu0 0
  %1220 = vmatpush2.bf16.msra.mxu0 0
  %1221 = vmatprep.subr.bf16.mxu0 0
  %1222 = vmatpush2.bf16.msra.mxu0 0
  %1223 = vmatprep.subr.bf16.mxu0 0
  %1224 = vmatpush2.bf16.msra.mxu0 0
  %1225 = vmatprep.subr.bf16.mxu0 0
  %1226 = vmatpush2.bf16.msra.mxu0 0
  %1227 = vmatprep.mubr.bf16.mxu0 0
  %1228 = vmatmul.mubr.bf16.gmra.mxu0 %v1193
  %v1229 = vpop.f32.mrf.mxu0
  %v1230 = vadd.f32 0.0, %v1229
  %v1231 = vpop.f32.mrf.mxu0
  %v1232 = vpop.f32.mrf.mxu0
  %v1233 = vpop.f32.mrf.mxu0
  %1234 = vdwg.mxu0
  %v1236 = vunpack.c.l.b16 %v1179
  %1237 = vset.pattern.permute.xlu0 0
  %1238 = vperm.xlu0 %1237, %v1236
  %v1239 = vpop.permute.xlu0 %1238
  %v1240 = vlaneseq
  %v1241 = vshrl.u32 %v1240, 7
  %v1242 = vsub.s32 %v338, %v1241
  %v1243 = vrot.slane %v1239, %v1242
  %v1244 = vpack.c.b16 %v1243, %v1243
  %v1246 = vsel %vm478, %v1244, 0
  %1248 = vmatprep.subr.bf16.mxu0 0
  %1249 = vmatpush1.bf16.msra.mxu0 0
  %1250 = vmatprep.subr.bf16.mxu0 0
  %1251 = vmatpush1.bf16.msra.mxu0 0
  %1252 = vmatprep.subr.bf16.mxu0 0
  %1253 = vmatpush1.bf16.msra.mxu0 0
  %1254 = vmatprep.subr.bf16.mxu0 0
  %1255 = vmatpush1.bf16.msra.mxu0 0
  %1256 = vmatprep.subr.bf16.mxu0 0
  %1257 = vmatpush1.bf16.msra.mxu0 0
  %1258 = vmatprep.subr.bf16.mxu0 0
  %1259 = vmatpush1.bf16.msra.mxu0 0
  %1260 = vmatprep.subr.bf16.mxu0 0
  %1261 = vmatpush1.bf16.msra.mxu0 0
  %1262 = vmatprep.subr.bf16.mxu0 0
  %1263 = vmatpush1.bf16.msra.mxu0 %v540
  %1264 = vmatprep.subr.bf16.mxu0 0
  %1265 = vmatpush2.bf16.msra.mxu0 0
  %1266 = vmatprep.subr.bf16.mxu0 0
  %1267 = vmatpush2.bf16.msra.mxu0 0
  %1268 = vmatprep.subr.bf16.mxu0 0
  %1269 = vmatpush2.bf16.msra.mxu0 0
  %1270 = vmatprep.subr.bf16.mxu0 0
  %1271 = vmatpush2.bf16.msra.mxu0 0
  %1272 = vmatprep.subr.bf16.mxu0 0
  %1273 = vmatpush2.bf16.msra.mxu0 0
  %1274 = vmatprep.subr.bf16.mxu0 0
  %1275 = vmatpush2.bf16.msra.mxu0 0
  %1276 = vmatprep.subr.bf16.mxu0 0
  %1277 = vmatpush2.bf16.msra.mxu0 0
  %1278 = vmatprep.subr.bf16.mxu0 0
  %1279 = vmatpush2.bf16.msra.mxu0 0
  %1280 = vmatprep.mubr.bf16.mxu0 0
  %1281 = vmatmul.mubr.bf16.gmra.mxu0 %v1246
  %v1282 = vpop.f32.mrf.mxu0
  %v1283 = vadd.f32 0.0, %v1282
  %v1284 = vpop.f32.mrf.mxu0
  %v1285 = vpop.f32.mrf.mxu0
  %v1286 = vpop.f32.mrf.mxu0
  %1287 = vdwg.mxu0
  %v1289 = vunpack.c.l.b16 %v1180
  %1290 = vset.pattern.permute.xlu0 0
  %1291 = vperm.xlu0 %1290, %v1289
  %v1292 = vpop.permute.xlu0 %1291
  %v1293 = vlaneseq
  %v1294 = vshrl.u32 %v1293, 7
  %v1295 = vsub.s32 %v338, %v1294
  %v1296 = vrot.slane %v1292, %v1295
  %v1297 = vpack.c.b16 %v1296, %v1296
  %v1299 = vsel %vm478, %v1297, 0
  %1301 = vmatprep.subr.bf16.mxu0 0
  %1302 = vmatpush1.bf16.msra.mxu0 0
  %1303 = vmatprep.subr.bf16.mxu0 0
  %1304 = vmatpush1.bf16.msra.mxu0 0
  %1305 = vmatprep.subr.bf16.mxu0 0
  %1306 = vmatpush1.bf16.msra.mxu0 0
  %1307 = vmatprep.subr.bf16.mxu0 0
  %1308 = vmatpush1.bf16.msra.mxu0 0
  %1309 = vmatprep.subr.bf16.mxu0 0
  %1310 = vmatpush1.bf16.msra.mxu0 0
  %1311 = vmatprep.subr.bf16.mxu0 0
  %1312 = vmatpush1.bf16.msra.mxu0 0
  %1313 = vmatprep.subr.bf16.mxu0 0
  %1314 = vmatpush1.bf16.msra.mxu0 0
  %1315 = vmatprep.subr.bf16.mxu0 0
  %1316 = vmatpush1.bf16.msra.mxu0 %v484
  %1317 = vmatprep.subr.bf16.mxu0 0
  %1318 = vmatpush2.bf16.msra.mxu0 0
  %1319 = vmatprep.subr.bf16.mxu0 0
  %1320 = vmatpush2.bf16.msra.mxu0 0
  %1321 = vmatprep.subr.bf16.mxu0 0
  %1322 = vmatpush2.bf16.msra.mxu0 0
  %1323 = vmatprep.subr.bf16.mxu0 0
  %1324 = vmatpush2.bf16.msra.mxu0 0
  %1325 = vmatprep.subr.bf16.mxu0 0
  %1326 = vmatpush2.bf16.msra.mxu0 0
  %1327 = vmatprep.subr.bf16.mxu0 0
  %1328 = vmatpush2.bf16.msra.mxu0 0
  %1329 = vmatprep.subr.bf16.mxu0 0
  %1330 = vmatpush2.bf16.msra.mxu0 0
  %1331 = vmatprep.subr.bf16.mxu0 0
  %1332 = vmatpush2.bf16.msra.mxu0 0
  %1333 = vmatprep.mubr.bf16.mxu0 0
  %1334 = vmatmul.mubr.bf16.gmra.mxu0 %v1299
  %v1335 = vpop.f32.mrf.mxu0
  %v1336 = vadd.f32 0.0, %v1335
  %v1337 = vpop.f32.mrf.mxu0
  %v1338 = vpop.f32.mrf.mxu0
  %v1339 = vpop.f32.mrf.mxu0
  %1340 = vdwg.mxu0
  %v1342 = vunpack.c.l.b16 %v1181
  %1343 = vset.pattern.permute.xlu0 0
  %1344 = vperm.xlu0 %1343, %v1342
  %v1345 = vpop.permute.xlu0 %1344
  %v1346 = vlaneseq
  %v1347 = vshrl.u32 %v1346, 7
  %v1348 = vsub.s32 %v338, %v1347
  %v1349 = vrot.slane %v1345, %v1348
  %v1350 = vpack.c.b16 %v1349, %v1349
  %v1352 = vsel %vm478, %v1350, 0
  %1354 = vmatprep.subr.bf16.mxu0 0
  %1355 = vmatpush1.bf16.msra.mxu0 0
  %1356 = vmatprep.subr.bf16.mxu0 0
  %1357 = vmatpush1.bf16.msra.mxu0 0
  %1358 = vmatprep.subr.bf16.mxu0 0
  %1359 = vmatpush1.bf16.msra.mxu0 0
  %1360 = vmatprep.subr.bf16.mxu0 0
  %1361 = vmatpush1.bf16.msra.mxu0 0
  %1362 = vmatprep.subr.bf16.mxu0 0
  %1363 = vmatpush1.bf16.msra.mxu0 0
  %1364 = vmatprep.subr.bf16.mxu0 0
  %1365 = vmatpush1.bf16.msra.mxu0 0
  %1366 = vmatprep.subr.bf16.mxu0 0
  %1367 = vmatpush1.bf16.msra.mxu0 0
  %1368 = vmatprep.subr.bf16.mxu0 0
  %1369 = vmatpush1.bf16.msra.mxu0 %v540
  %1370 = vmatprep.subr.bf16.mxu0 0
  %1371 = vmatpush2.bf16.msra.mxu0 0
  %1372 = vmatprep.subr.bf16.mxu0 0
  %1373 = vmatpush2.bf16.msra.mxu0 0
  %1374 = vmatprep.subr.bf16.mxu0 0
  %1375 = vmatpush2.bf16.msra.mxu0 0
  %1376 = vmatprep.subr.bf16.mxu0 0
  %1377 = vmatpush2.bf16.msra.mxu0 0
  %1378 = vmatprep.subr.bf16.mxu0 0
  %1379 = vmatpush2.bf16.msra.mxu0 0
  %1380 = vmatprep.subr.bf16.mxu0 0
  %1381 = vmatpush2.bf16.msra.mxu0 0
  %1382 = vmatprep.subr.bf16.mxu0 0
  %1383 = vmatpush2.bf16.msra.mxu0 0
  %1384 = vmatprep.subr.bf16.mxu0 0
  %1385 = vmatpush2.bf16.msra.mxu0 0
  %1386 = vmatprep.mubr.bf16.mxu0 0
  %1387 = vmatmul.mubr.bf16.gmra.mxu0 %v1352
  %v1388 = vpop.f32.mrf.mxu0
  %v1389 = vadd.f32 0.0, %v1388
  %v1390 = vpop.f32.mrf.mxu0
  %v1391 = vpop.f32.mrf.mxu0
  %v1392 = vpop.f32.mrf.mxu0
  %1393 = vdwg.mxu0
  %v1394 = vmul.f32 %v1230, %v125
  %v1395 = vmul.f32 %v1283, %v688
  %v1396 = vmul.f32 %v1336, %v689
  %v1397 = vmul.f32 %v1389, %v690
  %v1398 = vmul.f32 %v1230, %v131
  %v1399 = vmul.f32 %v1283, %v698
  %v1400 = vmul.f32 %v1336, %v699
  %v1401 = vmul.f32 %v1389, %v700
  %v1406 = vrot.slane %v1395, 7
  %v1407 = vsel %vm355, %v1406, %v1394
  %v1408 = vrot.slane %v1396, 6
  %v1409 = vsel %vm357, %v1408, %v1407
  %v1410 = vrot.slane %v1397, 5
  %v1411 = vsel %vm359, %v1410, %v1409
  %v1417 = vrot.slane %v1399, 7
  %v1418 = vsel %vm355, %v1417, %v1398
  %v1419 = vrot.slane %v1400, 6
  %v1420 = vsel %vm357, %v1419, %v1418
  %v1421 = vrot.slane %v1401, 5
  %v1422 = vsel %vm359, %v1421, %v1420
  %1423 = vrot.lane.b32.xlu0 %v1422, 32
  %v1424 = vpop.permute.xlu0 %1423
  %v1426 = vsel %vm138, %v1411, %v1424
  %v1427 = vpack.c.bf16 %v1426, %v1426
  %v1429 = vsel %vm165, %v1427, 0
  %1431 = vmatprep.subr.bf16.mxu0 0
  %1432 = vmatpush1.bf16.msra.mxu0 0
  %1433 = vmatprep.subr.bf16.mxu0 0
  %1434 = vmatpush1.bf16.msra.mxu0 0
  %1435 = vmatprep.subr.bf16.mxu0 0
  %1436 = vmatpush1.bf16.msra.mxu0 0
  %1437 = vmatprep.subr.bf16.mxu0 0
  %1438 = vmatpush1.bf16.msra.mxu0 0
  %1439 = vmatprep.subr.bf16.mxu0 0
  %1440 = vmatpush1.bf16.msra.mxu0 %v753
  %1441 = vmatprep.subr.bf16.mxu0 0
  %1442 = vmatpush1.bf16.msra.mxu0 %v752
  %1443 = vmatprep.subr.bf16.mxu0 0
  %1444 = vmatpush1.bf16.msra.mxu0 %v751
  %1445 = vmatprep.subr.bf16.mxu0 0
  %1446 = vmatpush1.bf16.msra.mxu0 %v750
  %1447 = vmatprep.subr.bf16.mxu0 0
  %1448 = vmatpush2.bf16.msra.mxu0 0
  %1449 = vmatprep.subr.bf16.mxu0 0
  %1450 = vmatpush2.bf16.msra.mxu0 0
  %1451 = vmatprep.subr.bf16.mxu0 0
  %1452 = vmatpush2.bf16.msra.mxu0 0
  %1453 = vmatprep.subr.bf16.mxu0 0
  %1454 = vmatpush2.bf16.msra.mxu0 0
  %1455 = vmatprep.subr.bf16.mxu0 0
  %1456 = vmatpush2.bf16.msra.mxu0 0
  %1457 = vmatprep.subr.bf16.mxu0 0
  %1458 = vmatpush2.bf16.msra.mxu0 0
  %1459 = vmatprep.subr.bf16.mxu0 0
  %1460 = vmatpush2.bf16.msra.mxu0 0
  %1461 = vmatprep.subr.bf16.mxu0 0
  %1462 = vmatpush2.bf16.msra.mxu0 0
  %1463 = vmatprep.mubr.bf16.mxu0 0
  %1464 = vmatmul.mubr.bf16.gmra.mxu0 %v1429
  %v1465 = vpop.f32.mrf.mxu0
  %v1466 = vadd.f32 %v106, %v1465
  %v1467 = vpop.f32.mrf.mxu0
  %v1468 = vpop.f32.mrf.mxu0
  %v1469 = vpop.f32.mrf.mxu0
  %1470 = vdwg.mxu0
  %1471 = vrot.lane.b32.xlu0 %v963, 96
  %v1472 = vpop.permute.xlu0 %1471
  %v1474 = vadd.f32 %v1466, %v1472
  %v1475 = vxor.u32 %v1474, 2147483648
  %v1476 = vmul.f32 %v1475, 1.442695
  %v1477 = vpow.pop %v1476
  %v1478 = vadd.f32 %v1477, 1.0
  %v1479 = vrcp.pop %v1478
  %v1480 = vmul.f32 1.0, %v1479
  %1481 = vrot.lane.b32.xlu0 %v963, 32
  %v1482 = vpop.permute.xlu0 %1481
  %v1484 = vmul.f32 %v1480, %v1482
  %1486 = vrot.lane.b32.xlu0 %v1484, 64
  %v1487 = vpop.permute.xlu0 %1486
  %v1489 = vadd.f32 %v1466, %v1487
  %v1490 = vtanh.pop %v1489
  %v1491 = vsub.f32 1.0, %v1480
  %1493 = vrot.lane.b32.xlu0 %v1490, 96
  %v1494 = vpop.permute.xlu0 %1493
  %v1496 = vmul.f32 %v1491, %v1494
  %v1497 = vmul.f32 %v1480, %v832
  %v1498 = vadd.f32 %v1496, %v1497
  %v1499 = vpack.c.bf16 %v1498, %v1498
  %1501 = vrot.lane.b32.xlu0 %v1499, 96
  %v1502 = vpop.permute.xlu0 %1501
  %v1504 = vsel %vm138, %v1502, 0
  %1506 = vmatprep.subr.bf16.mxu0 0
  %1507 = vmatpush1.bf16.msra.mxu0 0
  %1508 = vmatprep.subr.bf16.mxu0 0
  %1509 = vmatpush1.bf16.msra.mxu0 0
  %1510 = vmatprep.subr.bf16.mxu0 0
  %1511 = vmatpush1.bf16.msra.mxu0 0
  %1512 = vmatprep.subr.bf16.mxu0 0
  %1513 = vmatpush1.bf16.msra.mxu0 0
  %1514 = vmatprep.subr.bf16.mxu0 0
  %1515 = vmatpush1.bf16.msra.mxu0 0
  %1516 = vmatprep.subr.bf16.mxu0 0
  %1517 = vmatpush1.bf16.msra.mxu0 0
  %1518 = vmatprep.subr.bf16.mxu0 0
  %1519 = vmatpush1.bf16.msra.mxu0 %v852
  %1520 = vmatprep.subr.bf16.mxu0 0
  %1521 = vmatpush1.bf16.msra.mxu0 %v851
  %1522 = vmatprep.subr.bf16.mxu0 0
  %1523 = vmatpush2.bf16.msra.mxu0 0
  %1524 = vmatprep.subr.bf16.mxu0 0
  %1525 = vmatpush2.bf16.msra.mxu0 0
  %1526 = vmatprep.subr.bf16.mxu0 0
  %1527 = vmatpush2.bf16.msra.mxu0 0
  %1528 = vmatprep.subr.bf16.mxu0 0
  %1529 = vmatpush2.bf16.msra.mxu0 0
  %1530 = vmatprep.subr.bf16.mxu0 0
  %1531 = vmatpush2.bf16.msra.mxu0 0
  %1532 = vmatprep.subr.bf16.mxu0 0
  %1533 = vmatpush2.bf16.msra.mxu0 0
  %1534 = vmatprep.subr.bf16.mxu0 0
  %1535 = vmatpush2.bf16.msra.mxu0 0
  %1536 = vmatprep.subr.bf16.mxu0 0
  %1537 = vmatpush2.bf16.msra.mxu0 0
  %1538 = vmatprep.mubr.bf16.mxu0 0
  %1539 = vmatmul.mubr.bf16.gmra.mxu0 %v1504
  %v1540 = vpop.f32.mrf.mxu0
  %v1541 = vadd.f32 %v838, %v1540
  %v1542 = vpop.f32.mrf.mxu0
  %v1543 = vpop.f32.mrf.mxu0
  %v1544 = vpop.f32.mrf.mxu0
  %1545 = vdwg.mxu0
  %v1548 = vunpack.c.l.s4 1983009808
  %v1549 = vunpack.c.0.s8 %v1548
  %v1550 = vlaneseq
  %v1551 = vshrl.u32 %v1550, 7
  %v1552 = vsub.s32 %v1549, %v1551
  %v1553 = vrot.slane %v1541, %v1552
  %1554 = vrot.lane.b32.xlu0 %v1553, 96
  %v1555 = vpop.permute.xlu0 %1554
  %vm1557 = vcmask 1042176
  %1558 = vst.msk [vmem:[%s14] sm:$0x3] %vm1557, %v1555
  %v1559 = vcombine.high %v1553, %v1553
  %1561 = vst.msk [vmem:[%s14 + $0x2] sm:$0x3] %vm115, %v1559
  %v1562 = vmul.f32 %v1498, %v125
  %v1563 = vmul.f32 %v1498, %v131
  %1565 = vrot.lane.b32.xlu0 %v1562, 96
  %v1566 = vpop.permute.xlu0 %1565
  %v1568 = vsel %vm138, %v1566, %v1563
  %v1569 = vpack.c.bf16 %v1568, %v1568
  %v1571 = vsel %vm165, %v1569, 0
  %1573 = vmatprep.subr.bf16.mxu0 0
  %1574 = vmatpush1.bf16.msra.mxu0 0
  %1575 = vmatprep.subr.bf16.mxu0 0
  %1576 = vmatpush1.bf16.msra.mxu0 0
  %1577 = vmatprep.subr.bf16.mxu0 0
  %1578 = vmatpush1.bf16.msra.mxu0 0
  %1579 = vmatprep.subr.bf16.mxu0 0
  %1580 = vmatpush1.bf16.msra.mxu0 0
  %1581 = vmatprep.subr.bf16.mxu0 0
  %1582 = vmatpush1.bf16.msra.mxu0 %v160
  %1583 = vmatprep.subr.bf16.mxu0 0
  %1584 = vmatpush1.bf16.msra.mxu0 %v159
  %1585 = vmatprep.subr.bf16.mxu0 0
  %1586 = vmatpush1.bf16.msra.mxu0 %v158
  %1587 = vmatprep.subr.bf16.mxu0 0
  %1588 = vmatpush1.bf16.msra.mxu0 %v157
  %1589 = vmatprep.subr.bf16.mxu0 0
  %1590 = vmatpush2.bf16.msra.mxu0 0
  %1591 = vmatprep.subr.bf16.mxu0 0
  %1592 = vmatpush2.bf16.msra.mxu0 0
  %1593 = vmatprep.subr.bf16.mxu0 0
  %1594 = vmatpush2.bf16.msra.mxu0 0
  %1595 = vmatprep.subr.bf16.mxu0 0
  %1596 = vmatpush2.bf16.msra.mxu0 0
  %1597 = vmatprep.subr.bf16.mxu0 0
  %1598 = vmatpush2.bf16.msra.mxu0 0
  %1599 = vmatprep.subr.bf16.mxu0 0
  %1600 = vmatpush2.bf16.msra.mxu0 0
  %1601 = vmatprep.subr.bf16.mxu0 0
  %1602 = vmatpush2.bf16.msra.mxu0 0
  %1603 = vmatprep.subr.bf16.mxu0 0
  %1604 = vmatpush2.bf16.msra.mxu0 0
  %1605 = vmatprep.mubr.bf16.mxu0 0
  %1606 = vmatmul.mubr.bf16.gmra.mxu0 %v1571
  %v1607 = vpop.f32.mrf.mxu0
  %v1608 = vadd.f32 %v83, %v1607
  %v1609 = vpop.f32.mrf.mxu0
  %v1610 = vpop.f32.mrf.mxu0
  %v1611 = vpop.f32.mrf.mxu0
  %1612 = vdwg.mxu0
  %v1615 = vunpack.c.l.s4 1966171168
  %v1616 = vunpack.c.0.s8 %v1615
  %v1617 = vlaneseq
  %v1618 = vshrl.u32 %v1617, 7
  %v1619 = vsub.s32 %v1616, %v1618
  %v1620 = vrot.slane %v1608, %v1619
  %v1621 = vcombine.high %v1620, %v1620
  %v1623 = vunpack.c.l.s4 1966171168
  %v1624 = vunpack.c.0.s8 %v1623
  %v1625 = vlaneseq
  %v1626 = vshrl.u32 %v1625, 7
  %v1627 = vsub.s32 %v1624, %v1626
  %v1628 = vrot.slane %v1620, %v1627
  %v1630 = vunpack.c.l.s4 1966171168
  %v1631 = vunpack.c.0.s8 %v1630
  %v1632 = vlaneseq
  %v1633 = vshrl.u32 %v1632, 7
  %v1634 = vsub.s32 %v1631, %v1633
  %v1635 = vrot.slane %v1621, %v1634
  %v1636 = vcombine.high %v1628, %v1628
  %v1637 = vcombine.high %v1635, %v1635
  %v1638 = vlaneseq
  %v1639 = vshrl.u32 %v1638, 7
  %v1640 = vsub.s32 0, %v1639
  %v1641 = vrot.slane %v1628, %v1640
  %v1642 = vlaneseq
  %v1643 = vshrl.u32 %v1642, 7
  %v1644 = vsub.s32 0, %v1643
  %v1645 = vrot.slane %v1635, %v1644
  %v1646 = vlaneseq
  %v1647 = vshrl.u32 %v1646, 7
  %v1648 = vsub.s32 0, %v1647
  %v1649 = vrot.slane %v1636, %v1648
  %v1650 = vlaneseq
  %v1651 = vshrl.u32 %v1650, 7
  %v1652 = vsub.s32 0, %v1651
  %v1653 = vrot.slane %v1637, %v1652
  %v1658 = vadd.f32 %v1641, %v50
  %v1659 = vadd.f32 %v1645, %v51
  %v1660 = vadd.f32 %v1649, %v50
  %v1661 = vadd.f32 %v1653, %v51
  %v1662 = vtanh.pop %v1658
  %v1663 = vtanh.pop %v1659
  %v1664 = vtanh.pop %v1660
  %v1665 = vtanh.pop %v1661
  %v1666 = vmul.f32 %v1662, %v266
  %v1667 = vmul.f32 %v1663, %v266
  %v1668 = vmul.f32 %v1664, %v266
  %v1669 = vmul.f32 %v1665, %v266
  %v1670 = vsel %vm138, %v1666, 0.0
  %1671 = vadd.xlane.f32.xlu0 %v1670
  %v1672 = vpop.xlane.xlu0 %1671
  %v1673 = vsel %vm138, %v1667, 0.0
  %1674 = vadd.xlane.f32.xlu0 %v1673
  %v1675 = vpop.xlane.xlu0 %1674
  %v1676 = vsel %vm138, %v1668, 0.0
  %1677 = vadd.xlane.f32.xlu0 %v1676
  %v1678 = vpop.xlane.xlu0 %1677
  %v1679 = vsel %vm138, %v1669, 0.0
  %1680 = vadd.xlane.f32.xlu0 %v1679
  %v1681 = vpop.xlane.xlu0 %1680
  %v1682 = vadd.f32 %v1672, %v291
  %v1683 = vadd.f32 %v1675, %v298
  %v1684 = vadd.f32 %v1678, %v305
  %v1685 = vadd.f32 %v1681, %v312
  %1690 = vset.pattern.permute.xlu0 0
  %1691 = vperm.xlu0 %1690, %v1682
  %v1692 = vpop.permute.xlu0 %1691
  %1693 = vset.pattern.permute.xlu0 0
  %1694 = vperm.xlu0 %1693, %v1683
  %v1695 = vpop.permute.xlu0 %1694
  %1696 = vset.pattern.permute.xlu0 0
  %1697 = vperm.xlu0 %1696, %v1684
  %v1698 = vpop.permute.xlu0 %1697
  %1699 = vset.pattern.permute.xlu0 0
  %1700 = vperm.xlu0 %1699, %v1685
  %v1701 = vpop.permute.xlu0 %1700
  %v1702 = vlaneseq
  %v1703 = vshrl.u32 %v1702, 7
  %v1704 = vsub.s32 %v338, %v1703
  %v1705 = vrot.slane %v1692, %v1704
  %v1706 = vlaneseq
  %v1707 = vshrl.u32 %v1706, 7
  %v1708 = vsub.s32 %v338, %v1707
  %v1709 = vrot.slane %v1695, %v1708
  %v1710 = vlaneseq
  %v1711 = vshrl.u32 %v1710, 7
  %v1712 = vsub.s32 %v338, %v1711
  %v1713 = vrot.slane %v1698, %v1712
  %v1714 = vlaneseq
  %v1715 = vshrl.u32 %v1714, 7
  %v1716 = vsub.s32 %v338, %v1715
  %v1717 = vrot.slane %v1701, %v1716
  %v1718 = vsel %vm355, %v1709, %v1705
  %v1719 = vsel %vm357, %v1713, %v1718
  %v1720 = vsel %vm359, %v1717, %v1719
  %v1722 = vsel %vm362, %v1720, -inf
  %1723 = vmax.xlane.f32.xlu0 %v1722
  %v1724 = vpop.xlane.xlu0 %1723
  %v1726 = vlaneseq
  %v1727 = vshrl.u32 %v1726, 7
  %v1728 = vsub.s32 0, %v1727
  %v1729 = vrot.slane %v1724, %v1728
  %v1730 = vlaneseq
  %v1731 = vshrl.u32 %v1730, 7
  %v1732 = vsub.s32 1, %v1731
  %v1733 = vrot.slane %v1724, %v1732
  %v1734 = vlaneseq
  %v1735 = vshrl.u32 %v1734, 7
  %v1736 = vsub.s32 2, %v1735
  %v1737 = vrot.slane %v1724, %v1736
  %v1738 = vlaneseq
  %v1739 = vshrl.u32 %v1738, 7
  %v1740 = vsub.s32 3, %v1739
  %v1741 = vrot.slane %v1724, %v1740
  %v1746 = vsub.f32 %v1682, %v1729
  %v1747 = vsub.f32 %v1683, %v1733
  %v1748 = vsub.f32 %v1684, %v1737
  %v1749 = vsub.f32 %v1685, %v1741
  %v1750 = vmul.f32 %v1746, 1.442695
  %v1751 = vpow.pop %v1750
  %v1752 = vmul.f32 %v1747, 1.442695
  %v1753 = vpow.pop %v1752
  %v1754 = vmul.f32 %v1748, 1.442695
  %v1755 = vpow.pop %v1754
  %v1756 = vmul.f32 %v1749, 1.442695
  %v1757 = vpow.pop %v1756
  %1762 = vset.pattern.permute.xlu0 0
  %1763 = vperm.xlu0 %1762, %v1751
  %v1764 = vpop.permute.xlu0 %1763
  %1765 = vset.pattern.permute.xlu0 0
  %1766 = vperm.xlu0 %1765, %v1753
  %v1767 = vpop.permute.xlu0 %1766
  %1768 = vset.pattern.permute.xlu0 0
  %1769 = vperm.xlu0 %1768, %v1755
  %v1770 = vpop.permute.xlu0 %1769
  %1771 = vset.pattern.permute.xlu0 0
  %1772 = vperm.xlu0 %1771, %v1757
  %v1773 = vpop.permute.xlu0 %1772
  %v1774 = vlaneseq
  %v1775 = vshrl.u32 %v1774, 7
  %v1776 = vsub.s32 %v338, %v1775
  %v1777 = vrot.slane %v1764, %v1776
  %v1778 = vlaneseq
  %v1779 = vshrl.u32 %v1778, 7
  %v1780 = vsub.s32 %v338, %v1779
  %v1781 = vrot.slane %v1767, %v1780
  %v1782 = vlaneseq
  %v1783 = vshrl.u32 %v1782, 7
  %v1784 = vsub.s32 %v338, %v1783
  %v1785 = vrot.slane %v1770, %v1784
  %v1786 = vlaneseq
  %v1787 = vshrl.u32 %v1786, 7
  %v1788 = vsub.s32 %v338, %v1787
  %v1789 = vrot.slane %v1773, %v1788
  %v1790 = vsel %vm355, %v1781, %v1777
  %v1791 = vsel %vm357, %v1785, %v1790
  %v1792 = vsel %vm359, %v1789, %v1791
  %v1794 = vsel %vm362, %v1792, 0.0
  %1795 = vadd.xlane.f32.xlu0 %v1794
  %v1796 = vpop.xlane.xlu0 %1795
  %v1797 = vrcp.pop %v1796
  %v1799 = vlaneseq
  %v1800 = vshrl.u32 %v1799, 7
  %v1801 = vsub.s32 0, %v1800
  %v1802 = vrot.slane %v1797, %v1801
  %v1803 = vlaneseq
  %v1804 = vshrl.u32 %v1803, 7
  %v1805 = vsub.s32 1, %v1804
  %v1806 = vrot.slane %v1797, %v1805
  %v1807 = vlaneseq
  %v1808 = vshrl.u32 %v1807, 7
  %v1809 = vsub.s32 2, %v1808
  %v1810 = vrot.slane %v1797, %v1809
  %v1811 = vlaneseq
  %v1812 = vshrl.u32 %v1811, 7
  %v1813 = vsub.s32 3, %v1812
  %v1814 = vrot.slane %v1797, %v1813
  %v1819 = vmul.f32 %v1751, %v1802
  %v1820 = vmul.f32 %v1753, %v1806
  %v1821 = vmul.f32 %v1755, %v1810
  %v1822 = vmul.f32 %v1757, %v1814
  %v1823 = vpack.c.bf16 %v1819, %v1819
  %v1824 = vpack.c.bf16 %v1820, %v1820
  %v1825 = vpack.c.bf16 %v1821, %v1821
  %v1826 = vpack.c.bf16 %v1822, %v1822
  %v1828 = vunpack.c.l.b16 %v1823
  %1829 = vset.pattern.permute.xlu0 0
  %1830 = vperm.xlu0 %1829, %v1828
  %v1831 = vpop.permute.xlu0 %1830
  %v1832 = vlaneseq
  %v1833 = vshrl.u32 %v1832, 7
  %v1834 = vsub.s32 %v338, %v1833
  %v1835 = vrot.slane %v1831, %v1834
  %v1836 = vpack.c.b16 %v1835, %v1835
  %v1838 = vsel %vm478, %v1836, 0
  %1840 = vmatprep.subr.bf16.mxu0 0
  %1841 = vmatpush1.bf16.msra.mxu0 0
  %1842 = vmatprep.subr.bf16.mxu0 0
  %1843 = vmatpush1.bf16.msra.mxu0 0
  %1844 = vmatprep.subr.bf16.mxu0 0
  %1845 = vmatpush1.bf16.msra.mxu0 0
  %1846 = vmatprep.subr.bf16.mxu0 0
  %1847 = vmatpush1.bf16.msra.mxu0 0
  %1848 = vmatprep.subr.bf16.mxu0 0
  %1849 = vmatpush1.bf16.msra.mxu0 0
  %1850 = vmatprep.subr.bf16.mxu0 0
  %1851 = vmatpush1.bf16.msra.mxu0 0
  %1852 = vmatprep.subr.bf16.mxu0 0
  %1853 = vmatpush1.bf16.msra.mxu0 0
  %1854 = vmatprep.subr.bf16.mxu0 0
  %1855 = vmatpush1.bf16.msra.mxu0 %v484
  %1856 = vmatprep.subr.bf16.mxu0 0
  %1857 = vmatpush2.bf16.msra.mxu0 0
  %1858 = vmatprep.subr.bf16.mxu0 0
  %1859 = vmatpush2.bf16.msra.mxu0 0
  %1860 = vmatprep.subr.bf16.mxu0 0
  %1861 = vmatpush2.bf16.msra.mxu0 0
  %1862 = vmatprep.subr.bf16.mxu0 0
  %1863 = vmatpush2.bf16.msra.mxu0 0
  %1864 = vmatprep.subr.bf16.mxu0 0
  %1865 = vmatpush2.bf16.msra.mxu0 0
  %1866 = vmatprep.subr.bf16.mxu0 0
  %1867 = vmatpush2.bf16.msra.mxu0 0
  %1868 = vmatprep.subr.bf16.mxu0 0
  %1869 = vmatpush2.bf16.msra.mxu0 0
  %1870 = vmatprep.subr.bf16.mxu0 0
  %1871 = vmatpush2.bf16.msra.mxu0 0
  %1872 = vmatprep.mubr.bf16.mxu0 0
  %1873 = vmatmul.mubr.bf16.gmra.mxu0 %v1838
  %v1874 = vpop.f32.mrf.mxu0
  %v1875 = vadd.f32 0.0, %v1874
  %v1876 = vpop.f32.mrf.mxu0
  %v1877 = vpop.f32.mrf.mxu0
  %v1878 = vpop.f32.mrf.mxu0
  %1879 = vdwg.mxu0
  %v1881 = vunpack.c.l.b16 %v1824
  %1882 = vset.pattern.permute.xlu0 0
  %1883 = vperm.xlu0 %1882, %v1881
  %v1884 = vpop.permute.xlu0 %1883
  %v1885 = vlaneseq
  %v1886 = vshrl.u32 %v1885, 7
  %v1887 = vsub.s32 %v338, %v1886
  %v1888 = vrot.slane %v1884, %v1887
  %v1889 = vpack.c.b16 %v1888, %v1888
  %v1891 = vsel %vm478, %v1889, 0
  %1893 = vmatprep.subr.bf16.mxu0 0
  %1894 = vmatpush1.bf16.msra.mxu0 0
  %1895 = vmatprep.subr.bf16.mxu0 0
  %1896 = vmatpush1.bf16.msra.mxu0 0
  %1897 = vmatprep.subr.bf16.mxu0 0
  %1898 = vmatpush1.bf16.msra.mxu0 0
  %1899 = vmatprep.subr.bf16.mxu0 0
  %1900 = vmatpush1.bf16.msra.mxu0 0
  %1901 = vmatprep.subr.bf16.mxu0 0
  %1902 = vmatpush1.bf16.msra.mxu0 0
  %1903 = vmatprep.subr.bf16.mxu0 0
  %1904 = vmatpush1.bf16.msra.mxu0 0
  %1905 = vmatprep.subr.bf16.mxu0 0
  %1906 = vmatpush1.bf16.msra.mxu0 0
  %1907 = vmatprep.subr.bf16.mxu0 0
  %1908 = vmatpush1.bf16.msra.mxu0 %v540
  %1909 = vmatprep.subr.bf16.mxu0 0
  %1910 = vmatpush2.bf16.msra.mxu0 0
  %1911 = vmatprep.subr.bf16.mxu0 0
  %1912 = vmatpush2.bf16.msra.mxu0 0
  %1913 = vmatprep.subr.bf16.mxu0 0
  %1914 = vmatpush2.bf16.msra.mxu0 0
  %1915 = vmatprep.subr.bf16.mxu0 0
  %1916 = vmatpush2.bf16.msra.mxu0 0
  %1917 = vmatprep.subr.bf16.mxu0 0
  %1918 = vmatpush2.bf16.msra.mxu0 0
  %1919 = vmatprep.subr.bf16.mxu0 0
  %1920 = vmatpush2.bf16.msra.mxu0 0
  %1921 = vmatprep.subr.bf16.mxu0 0
  %1922 = vmatpush2.bf16.msra.mxu0 0
  %1923 = vmatprep.subr.bf16.mxu0 0
  %1924 = vmatpush2.bf16.msra.mxu0 0
  %1925 = vmatprep.mubr.bf16.mxu0 0
  %1926 = vmatmul.mubr.bf16.gmra.mxu0 %v1891
  %v1927 = vpop.f32.mrf.mxu0
  %v1928 = vadd.f32 0.0, %v1927
  %v1929 = vpop.f32.mrf.mxu0
  %v1930 = vpop.f32.mrf.mxu0
  %v1931 = vpop.f32.mrf.mxu0
  %1932 = vdwg.mxu0
  %v1934 = vunpack.c.l.b16 %v1825
  %1935 = vset.pattern.permute.xlu0 0
  %1936 = vperm.xlu0 %1935, %v1934
  %v1937 = vpop.permute.xlu0 %1936
  %v1938 = vlaneseq
  %v1939 = vshrl.u32 %v1938, 7
  %v1940 = vsub.s32 %v338, %v1939
  %v1941 = vrot.slane %v1937, %v1940
  %v1942 = vpack.c.b16 %v1941, %v1941
  %v1944 = vsel %vm478, %v1942, 0
  %1946 = vmatprep.subr.bf16.mxu0 0
  %1947 = vmatpush1.bf16.msra.mxu0 0
  %1948 = vmatprep.subr.bf16.mxu0 0
  %1949 = vmatpush1.bf16.msra.mxu0 0
  %1950 = vmatprep.subr.bf16.mxu0 0
  %1951 = vmatpush1.bf16.msra.mxu0 0
  %1952 = vmatprep.subr.bf16.mxu0 0
  %1953 = vmatpush1.bf16.msra.mxu0 0
  %1954 = vmatprep.subr.bf16.mxu0 0
  %1955 = vmatpush1.bf16.msra.mxu0 0
  %1956 = vmatprep.subr.bf16.mxu0 0
  %1957 = vmatpush1.bf16.msra.mxu0 0
  %1958 = vmatprep.subr.bf16.mxu0 0
  %1959 = vmatpush1.bf16.msra.mxu0 0
  %1960 = vmatprep.subr.bf16.mxu0 0
  %1961 = vmatpush1.bf16.msra.mxu0 %v484
  %1962 = vmatprep.subr.bf16.mxu0 0
  %1963 = vmatpush2.bf16.msra.mxu0 0
  %1964 = vmatprep.subr.bf16.mxu0 0
  %1965 = vmatpush2.bf16.msra.mxu0 0
  %1966 = vmatprep.subr.bf16.mxu0 0
  %1967 = vmatpush2.bf16.msra.mxu0 0
  %1968 = vmatprep.subr.bf16.mxu0 0
  %1969 = vmatpush2.bf16.msra.mxu0 0
  %1970 = vmatprep.subr.bf16.mxu0 0
  %1971 = vmatpush2.bf16.msra.mxu0 0
  %1972 = vmatprep.subr.bf16.mxu0 0
  %1973 = vmatpush2.bf16.msra.mxu0 0
  %1974 = vmatprep.subr.bf16.mxu0 0
  %1975 = vmatpush2.bf16.msra.mxu0 0
  %1976 = vmatprep.subr.bf16.mxu0 0
  %1977 = vmatpush2.bf16.msra.mxu0 0
  %1978 = vmatprep.mubr.bf16.mxu0 0
  %1979 = vmatmul.mubr.bf16.gmra.mxu0 %v1944
  %v1980 = vpop.f32.mrf.mxu0
  %v1981 = vadd.f32 0.0, %v1980
  %v1982 = vpop.f32.mrf.mxu0
  %v1983 = vpop.f32.mrf.mxu0
  %v1984 = vpop.f32.mrf.mxu0
  %1985 = vdwg.mxu0
  %v1987 = vunpack.c.l.b16 %v1826
  %1988 = vset.pattern.permute.xlu0 0
  %1989 = vperm.xlu0 %1988, %v1987
  %v1990 = vpop.permute.xlu0 %1989
  %v1991 = vlaneseq
  %v1992 = vshrl.u32 %v1991, 7
  %v1993 = vsub.s32 %v338, %v1992
  %v1994 = vrot.slane %v1990, %v1993
  %v1995 = vpack.c.b16 %v1994, %v1994
  %v1997 = vsel %vm478, %v1995, 0
  %1999 = vmatprep.subr.bf16.mxu0 0
  %2000 = vmatpush1.bf16.msra.mxu0 0
  %2001 = vmatprep.subr.bf16.mxu0 0
  %2002 = vmatpush1.bf16.msra.mxu0 0
  %2003 = vmatprep.subr.bf16.mxu0 0
  %2004 = vmatpush1.bf16.msra.mxu0 0
  %2005 = vmatprep.subr.bf16.mxu0 0
  %2006 = vmatpush1.bf16.msra.mxu0 0
  %2007 = vmatprep.subr.bf16.mxu0 0
  %2008 = vmatpush1.bf16.msra.mxu0 0
  %2009 = vmatprep.subr.bf16.mxu0 0
  %2010 = vmatpush1.bf16.msra.mxu0 0
  %2011 = vmatprep.subr.bf16.mxu0 0
  %2012 = vmatpush1.bf16.msra.mxu0 0
  %2013 = vmatprep.subr.bf16.mxu0 0
  %2014 = vmatpush1.bf16.msra.mxu0 %v540
  %2015 = vmatprep.subr.bf16.mxu0 0
  %2016 = vmatpush2.bf16.msra.mxu0 0
  %2017 = vmatprep.subr.bf16.mxu0 0
  %2018 = vmatpush2.bf16.msra.mxu0 0
  %2019 = vmatprep.subr.bf16.mxu0 0
  %2020 = vmatpush2.bf16.msra.mxu0 0
  %2021 = vmatprep.subr.bf16.mxu0 0
  %2022 = vmatpush2.bf16.msra.mxu0 0
  %2023 = vmatprep.subr.bf16.mxu0 0
  %2024 = vmatpush2.bf16.msra.mxu0 0
  %2025 = vmatprep.subr.bf16.mxu0 0
  %2026 = vmatpush2.bf16.msra.mxu0 0
  %2027 = vmatprep.subr.bf16.mxu0 0
  %2028 = vmatpush2.bf16.msra.mxu0 0
  %2029 = vmatprep.subr.bf16.mxu0 0
  %2030 = vmatpush2.bf16.msra.mxu0 0
  %2031 = vmatprep.mubr.bf16.mxu0 0
  %2032 = vmatmul.mubr.bf16.gmra.mxu0 %v1997
  %v2033 = vpop.f32.mrf.mxu0
  %v2034 = vadd.f32 0.0, %v2033
  %v2035 = vpop.f32.mrf.mxu0
  %v2036 = vpop.f32.mrf.mxu0
  %v2037 = vpop.f32.mrf.mxu0
  %2038 = vdwg.mxu0
  %v2039 = vmul.f32 %v1875, %v125
  %v2040 = vmul.f32 %v1928, %v688
  %v2041 = vmul.f32 %v1981, %v689
  %v2042 = vmul.f32 %v2034, %v690
  %v2043 = vmul.f32 %v1875, %v131
  %v2044 = vmul.f32 %v1928, %v698
  %v2045 = vmul.f32 %v1981, %v699
  %v2046 = vmul.f32 %v2034, %v700
  %v2051 = vrot.slane %v2040, 7
  %v2052 = vsel %vm355, %v2051, %v2039
  %v2053 = vrot.slane %v2041, 6
  %v2054 = vsel %vm357, %v2053, %v2052
  %v2055 = vrot.slane %v2042, 5
  %v2056 = vsel %vm359, %v2055, %v2054
  %v2062 = vrot.slane %v2044, 7
  %v2063 = vsel %vm355, %v2062, %v2043
  %v2064 = vrot.slane %v2045, 6
  %v2065 = vsel %vm357, %v2064, %v2063
  %v2066 = vrot.slane %v2046, 5
  %v2067 = vsel %vm359, %v2066, %v2065
  %2068 = vrot.lane.b32.xlu0 %v2067, 32
  %v2069 = vpop.permute.xlu0 %2068
  %v2071 = vsel %vm138, %v2056, %v2069
  %v2072 = vpack.c.bf16 %v2071, %v2071
  %v2074 = vsel %vm165, %v2072, 0
  %2076 = vmatprep.subr.bf16.mxu0 0
  %2077 = vmatpush1.bf16.msra.mxu0 0
  %2078 = vmatprep.subr.bf16.mxu0 0
  %2079 = vmatpush1.bf16.msra.mxu0 0
  %2080 = vmatprep.subr.bf16.mxu0 0
  %2081 = vmatpush1.bf16.msra.mxu0 0
  %2082 = vmatprep.subr.bf16.mxu0 0
  %2083 = vmatpush1.bf16.msra.mxu0 0
  %2084 = vmatprep.subr.bf16.mxu0 0
  %2085 = vmatpush1.bf16.msra.mxu0 %v753
  %2086 = vmatprep.subr.bf16.mxu0 0
  %2087 = vmatpush1.bf16.msra.mxu0 %v752
  %2088 = vmatprep.subr.bf16.mxu0 0
  %2089 = vmatpush1.bf16.msra.mxu0 %v751
  %2090 = vmatprep.subr.bf16.mxu0 0
  %2091 = vmatpush1.bf16.msra.mxu0 %v750
  %2092 = vmatprep.subr.bf16.mxu0 0
  %2093 = vmatpush2.bf16.msra.mxu0 0
  %2094 = vmatprep.subr.bf16.mxu0 0
  %2095 = vmatpush2.bf16.msra.mxu0 0
  %2096 = vmatprep.subr.bf16.mxu0 0
  %2097 = vmatpush2.bf16.msra.mxu0 0
  %2098 = vmatprep.subr.bf16.mxu0 0
  %2099 = vmatpush2.bf16.msra.mxu0 0
  %2100 = vmatprep.subr.bf16.mxu0 0
  %2101 = vmatpush2.bf16.msra.mxu0 0
  %2102 = vmatprep.subr.bf16.mxu0 0
  %2103 = vmatpush2.bf16.msra.mxu0 0
  %2104 = vmatprep.subr.bf16.mxu0 0
  %2105 = vmatpush2.bf16.msra.mxu0 0
  %2106 = vmatprep.subr.bf16.mxu0 0
  %2107 = vmatpush2.bf16.msra.mxu0 0
  %2108 = vmatprep.mubr.bf16.mxu0 0
  %2109 = vmatmul.mubr.bf16.gmra.mxu0 %v2074
  %v2110 = vpop.f32.mrf.mxu0
  %v2111 = vadd.f32 %v106, %v2110
  %v2112 = vpop.f32.mrf.mxu0
  %v2113 = vpop.f32.mrf.mxu0
  %v2114 = vpop.f32.mrf.mxu0
  %2115 = vdwg.mxu0
  %2116 = vrot.lane.b32.xlu0 %v1608, 96
  %v2117 = vpop.permute.xlu0 %2116
  %v2119 = vadd.f32 %v2111, %v2117
  %v2120 = vxor.u32 %v2119, 2147483648
  %v2121 = vmul.f32 %v2120, 1.442695
  %v2122 = vpow.pop %v2121
  %v2123 = vadd.f32 %v2122, 1.0
  %v2124 = vrcp.pop %v2123
  %v2125 = vmul.f32 1.0, %v2124
  %2126 = vrot.lane.b32.xlu0 %v1608, 32
  %v2127 = vpop.permute.xlu0 %2126
  %v2129 = vmul.f32 %v2125, %v2127
  %2131 = vrot.lane.b32.xlu0 %v2129, 64
  %v2132 = vpop.permute.xlu0 %2131
  %v2134 = vadd.f32 %v2111, %v2132
  %v2135 = vtanh.pop %v2134
  %v2136 = vsub.f32 1.0, %v2125
  %2138 = vrot.lane.b32.xlu0 %v2135, 96
  %v2139 = vpop.permute.xlu0 %2138
  %v2141 = vmul.f32 %v2136, %v2139
  %v2142 = vmul.f32 %v2125, %v1498
  %v2143 = vadd.f32 %v2141, %v2142
  %v2144 = vpack.c.bf16 %v2143, %v2143
  %2146 = vrot.lane.b32.xlu0 %v2144, 96
  %v2147 = vpop.permute.xlu0 %2146
  %v2149 = vsel %vm138, %v2147, 0
  %2151 = vmatprep.subr.bf16.mxu0 0
  %2152 = vmatpush1.bf16.msra.mxu0 0
  %2153 = vmatprep.subr.bf16.mxu0 0
  %2154 = vmatpush1.bf16.msra.mxu0 0
  %2155 = vmatprep.subr.bf16.mxu0 0
  %2156 = vmatpush1.bf16.msra.mxu0 0
  %2157 = vmatprep.subr.bf16.mxu0 0
  %2158 = vmatpush1.bf16.msra.mxu0 0
  %2159 = vmatprep.subr.bf16.mxu0 0
  %2160 = vmatpush1.bf16.msra.mxu0 0
  %2161 = vmatprep.subr.bf16.mxu0 0
  %2162 = vmatpush1.bf16.msra.mxu0 0
  %2163 = vmatprep.subr.bf16.mxu0 0
  %2164 = vmatpush1.bf16.msra.mxu0 %v852
  %2165 = vmatprep.subr.bf16.mxu0 0
  %2166 = vmatpush1.bf16.msra.mxu0 %v851
  %2167 = vmatprep.subr.bf16.mxu0 0
  %2168 = vmatpush2.bf16.msra.mxu0 0
  %2169 = vmatprep.subr.bf16.mxu0 0
  %2170 = vmatpush2.bf16.msra.mxu0 0
  %2171 = vmatprep.subr.bf16.mxu0 0
  %2172 = vmatpush2.bf16.msra.mxu0 0
  %2173 = vmatprep.subr.bf16.mxu0 0
  %2174 = vmatpush2.bf16.msra.mxu0 0
  %2175 = vmatprep.subr.bf16.mxu0 0
  %2176 = vmatpush2.bf16.msra.mxu0 0
  %2177 = vmatprep.subr.bf16.mxu0 0
  %2178 = vmatpush2.bf16.msra.mxu0 0
  %2179 = vmatprep.subr.bf16.mxu0 0
  %2180 = vmatpush2.bf16.msra.mxu0 0
  %2181 = vmatprep.subr.bf16.mxu0 0
  %2182 = vmatpush2.bf16.msra.mxu0 0
  %2183 = vmatprep.mubr.bf16.mxu0 0
  %2184 = vmatmul.mubr.bf16.gmra.mxu0 %v2149
  %v2185 = vpop.f32.mrf.mxu0
  %v2186 = vadd.f32 %v838, %v2185
  %v2187 = vpop.f32.mrf.mxu0
  %v2188 = vpop.f32.mrf.mxu0
  %v2189 = vpop.f32.mrf.mxu0
  %2190 = vdwg.mxu0
  %v2193 = vunpack.c.l.s4 1983009808
  %v2194 = vunpack.c.0.s8 %v2193
  %v2195 = vlaneseq
  %v2196 = vshrl.u32 %v2195, 7
  %v2197 = vsub.s32 %v2194, %v2196
  %v2198 = vrot.slane %v2186, %v2197
  %2199 = vrot.lane.b32.xlu0 %v2198, 32
  %v2200 = vpop.permute.xlu0 %2199
  %2202 = vst.msk [vmem:[%s14 + $0x2] sm:$0x3] %vm909, %v2200
  %v2203 = vcombine.high %v2198, %v2198
  %2204 = vrot.lane.b32.xlu0 %v2203, 64
  %v2205 = vpop.permute.xlu0 %2204
  %2207 = vst.msk [vmem:[%s14 + $0x2] sm:$0x3] %vm915, %v2205
  %v2208 = vmul.f32 %v2143, %v125
  %v2209 = vmul.f32 %v2143, %v131
  %2211 = vrot.lane.b32.xlu0 %v2208, 96
  %v2212 = vpop.permute.xlu0 %2211
  %v2214 = vsel %vm138, %v2212, %v2209
  %v2215 = vpack.c.bf16 %v2214, %v2214
  %v2217 = vsel %vm165, %v2215, 0
  %2219 = vmatprep.subr.bf16.mxu0 0
  %2220 = vmatpush1.bf16.msra.mxu0 0
  %2221 = vmatprep.subr.bf16.mxu0 0
  %2222 = vmatpush1.bf16.msra.mxu0 0
  %2223 = vmatprep.subr.bf16.mxu0 0
  %2224 = vmatpush1.bf16.msra.mxu0 0
  %2225 = vmatprep.subr.bf16.mxu0 0
  %2226 = vmatpush1.bf16.msra.mxu0 0
  %2227 = vmatprep.subr.bf16.mxu0 0
  %2228 = vmatpush1.bf16.msra.mxu0 %v160
  %2229 = vmatprep.subr.bf16.mxu0 0
  %2230 = vmatpush1.bf16.msra.mxu0 %v159
  %2231 = vmatprep.subr.bf16.mxu0 0
  %2232 = vmatpush1.bf16.msra.mxu0 %v158
  %2233 = vmatprep.subr.bf16.mxu0 0
  %2234 = vmatpush1.bf16.msra.mxu0 %v157
  %2235 = vmatprep.subr.bf16.mxu0 0
  %2236 = vmatpush2.bf16.msra.mxu0 0
  %2237 = vmatprep.subr.bf16.mxu0 0
  %2238 = vmatpush2.bf16.msra.mxu0 0
  %2239 = vmatprep.subr.bf16.mxu0 0
  %2240 = vmatpush2.bf16.msra.mxu0 0
  %2241 = vmatprep.subr.bf16.mxu0 0
  %2242 = vmatpush2.bf16.msra.mxu0 0
  %2243 = vmatprep.subr.bf16.mxu0 0
  %2244 = vmatpush2.bf16.msra.mxu0 0
  %2245 = vmatprep.subr.bf16.mxu0 0
  %2246 = vmatpush2.bf16.msra.mxu0 0
  %2247 = vmatprep.subr.bf16.mxu0 0
  %2248 = vmatpush2.bf16.msra.mxu0 0
  %2249 = vmatprep.subr.bf16.mxu0 0
  %2250 = vmatpush2.bf16.msra.mxu0 0
  %2251 = vmatprep.mubr.bf16.mxu0 0
  %2252 = vmatmul.mubr.bf16.gmra.mxu0 %v2217
  %v2253 = vpop.f32.mrf.mxu0
  %v2254 = vadd.f32 %v83, %v2253
  %v2255 = vpop.f32.mrf.mxu0
  %v2256 = vpop.f32.mrf.mxu0
  %v2257 = vpop.f32.mrf.mxu0
  %2258 = vdwg.mxu0
  %v2261 = vunpack.c.l.s4 1966171168
  %v2262 = vunpack.c.0.s8 %v2261
  %v2263 = vlaneseq
  %v2264 = vshrl.u32 %v2263, 7
  %v2265 = vsub.s32 %v2262, %v2264
  %v2266 = vrot.slane %v2254, %v2265
  %v2267 = vcombine.high %v2266, %v2266
  %v2269 = vunpack.c.l.s4 1966171168
  %v2270 = vunpack.c.0.s8 %v2269
  %v2271 = vlaneseq
  %v2272 = vshrl.u32 %v2271, 7
  %v2273 = vsub.s32 %v2270, %v2272
  %v2274 = vrot.slane %v2266, %v2273
  %v2276 = vunpack.c.l.s4 1966171168
  %v2277 = vunpack.c.0.s8 %v2276
  %v2278 = vlaneseq
  %v2279 = vshrl.u32 %v2278, 7
  %v2280 = vsub.s32 %v2277, %v2279
  %v2281 = vrot.slane %v2267, %v2280
  %v2282 = vcombine.high %v2274, %v2274
  %v2283 = vcombine.high %v2281, %v2281
  %v2284 = vlaneseq
  %v2285 = vshrl.u32 %v2284, 7
  %v2286 = vsub.s32 0, %v2285
  %v2287 = vrot.slane %v2274, %v2286
  %v2288 = vlaneseq
  %v2289 = vshrl.u32 %v2288, 7
  %v2290 = vsub.s32 0, %v2289
  %v2291 = vrot.slane %v2281, %v2290
  %v2292 = vlaneseq
  %v2293 = vshrl.u32 %v2292, 7
  %v2294 = vsub.s32 0, %v2293
  %v2295 = vrot.slane %v2282, %v2294
  %v2296 = vlaneseq
  %v2297 = vshrl.u32 %v2296, 7
  %v2298 = vsub.s32 0, %v2297
  %v2299 = vrot.slane %v2283, %v2298
  %v2304 = vadd.f32 %v2287, %v50
  %v2305 = vadd.f32 %v2291, %v51
  %v2306 = vadd.f32 %v2295, %v50
  %v2307 = vadd.f32 %v2299, %v51
  %v2308 = vtanh.pop %v2304
  %v2309 = vtanh.pop %v2305
  %v2310 = vtanh.pop %v2306
  %v2311 = vtanh.pop %v2307
  %v2312 = vmul.f32 %v2308, %v266
  %v2313 = vmul.f32 %v2309, %v266
  %v2314 = vmul.f32 %v2310, %v266
  %v2315 = vmul.f32 %v2311, %v266
  %v2316 = vsel %vm138, %v2312, 0.0
  %2317 = vadd.xlane.f32.xlu0 %v2316
  %v2318 = vpop.xlane.xlu0 %2317
  %v2319 = vsel %vm138, %v2313, 0.0
  %2320 = vadd.xlane.f32.xlu0 %v2319
  %v2321 = vpop.xlane.xlu0 %2320
  %v2322 = vsel %vm138, %v2314, 0.0
  %2323 = vadd.xlane.f32.xlu0 %v2322
  %v2324 = vpop.xlane.xlu0 %2323
  %v2325 = vsel %vm138, %v2315, 0.0
  %2326 = vadd.xlane.f32.xlu0 %v2325
  %v2327 = vpop.xlane.xlu0 %2326
  %v2328 = vadd.f32 %v2318, %v291
  %v2329 = vadd.f32 %v2321, %v298
  %v2330 = vadd.f32 %v2324, %v305
  %v2331 = vadd.f32 %v2327, %v312
  %2336 = vset.pattern.permute.xlu0 0
  %2337 = vperm.xlu0 %2336, %v2328
  %v2338 = vpop.permute.xlu0 %2337
  %2339 = vset.pattern.permute.xlu0 0
  %2340 = vperm.xlu0 %2339, %v2329
  %v2341 = vpop.permute.xlu0 %2340
  %2342 = vset.pattern.permute.xlu0 0
  %2343 = vperm.xlu0 %2342, %v2330
  %v2344 = vpop.permute.xlu0 %2343
  %2345 = vset.pattern.permute.xlu0 0
  %2346 = vperm.xlu0 %2345, %v2331
  %v2347 = vpop.permute.xlu0 %2346
  %v2348 = vlaneseq
  %v2349 = vshrl.u32 %v2348, 7
  %v2350 = vsub.s32 %v338, %v2349
  %v2351 = vrot.slane %v2338, %v2350
  %v2352 = vlaneseq
  %v2353 = vshrl.u32 %v2352, 7
  %v2354 = vsub.s32 %v338, %v2353
  %v2355 = vrot.slane %v2341, %v2354
  %v2356 = vlaneseq
  %v2357 = vshrl.u32 %v2356, 7
  %v2358 = vsub.s32 %v338, %v2357
  %v2359 = vrot.slane %v2344, %v2358
  %v2360 = vlaneseq
  %v2361 = vshrl.u32 %v2360, 7
  %v2362 = vsub.s32 %v338, %v2361
  %v2363 = vrot.slane %v2347, %v2362
  %v2364 = vsel %vm355, %v2355, %v2351
  %v2365 = vsel %vm357, %v2359, %v2364
  %v2366 = vsel %vm359, %v2363, %v2365
  %v2368 = vsel %vm362, %v2366, -inf
  %2369 = vmax.xlane.f32.xlu0 %v2368
  %v2370 = vpop.xlane.xlu0 %2369
  %v2372 = vlaneseq
  %v2373 = vshrl.u32 %v2372, 7
  %v2374 = vsub.s32 0, %v2373
  %v2375 = vrot.slane %v2370, %v2374
  %v2376 = vlaneseq
  %v2377 = vshrl.u32 %v2376, 7
  %v2378 = vsub.s32 1, %v2377
  %v2379 = vrot.slane %v2370, %v2378
  %v2380 = vlaneseq
  %v2381 = vshrl.u32 %v2380, 7
  %v2382 = vsub.s32 2, %v2381
  %v2383 = vrot.slane %v2370, %v2382
  %v2384 = vlaneseq
  %v2385 = vshrl.u32 %v2384, 7
  %v2386 = vsub.s32 3, %v2385
  %v2387 = vrot.slane %v2370, %v2386
  %v2392 = vsub.f32 %v2328, %v2375
  %v2393 = vsub.f32 %v2329, %v2379
  %v2394 = vsub.f32 %v2330, %v2383
  %v2395 = vsub.f32 %v2331, %v2387
  %v2396 = vmul.f32 %v2392, 1.442695
  %v2397 = vpow.pop %v2396
  %v2398 = vmul.f32 %v2393, 1.442695
  %v2399 = vpow.pop %v2398
  %v2400 = vmul.f32 %v2394, 1.442695
  %v2401 = vpow.pop %v2400
  %v2402 = vmul.f32 %v2395, 1.442695
  %v2403 = vpow.pop %v2402
  %2408 = vset.pattern.permute.xlu0 0
  %2409 = vperm.xlu0 %2408, %v2397
  %v2410 = vpop.permute.xlu0 %2409
  %2411 = vset.pattern.permute.xlu0 0
  %2412 = vperm.xlu0 %2411, %v2399
  %v2413 = vpop.permute.xlu0 %2412
  %2414 = vset.pattern.permute.xlu0 0
  %2415 = vperm.xlu0 %2414, %v2401
  %v2416 = vpop.permute.xlu0 %2415
  %2417 = vset.pattern.permute.xlu0 0
  %2418 = vperm.xlu0 %2417, %v2403
  %v2419 = vpop.permute.xlu0 %2418
  %v2420 = vlaneseq
  %v2421 = vshrl.u32 %v2420, 7
  %v2422 = vsub.s32 %v338, %v2421
  %v2423 = vrot.slane %v2410, %v2422
  %v2424 = vlaneseq
  %v2425 = vshrl.u32 %v2424, 7
  %v2426 = vsub.s32 %v338, %v2425
  %v2427 = vrot.slane %v2413, %v2426
  %v2428 = vlaneseq
  %v2429 = vshrl.u32 %v2428, 7
  %v2430 = vsub.s32 %v338, %v2429
  %v2431 = vrot.slane %v2416, %v2430
  %v2432 = vlaneseq
  %v2433 = vshrl.u32 %v2432, 7
  %v2434 = vsub.s32 %v338, %v2433
  %v2435 = vrot.slane %v2419, %v2434
  %v2436 = vsel %vm355, %v2427, %v2423
  %v2437 = vsel %vm357, %v2431, %v2436
  %v2438 = vsel %vm359, %v2435, %v2437
  %v2440 = vsel %vm362, %v2438, 0.0
  %2441 = vadd.xlane.f32.xlu0 %v2440
  %v2442 = vpop.xlane.xlu0 %2441
  %v2443 = vrcp.pop %v2442
  %v2445 = vlaneseq
  %v2446 = vshrl.u32 %v2445, 7
  %v2447 = vsub.s32 0, %v2446
  %v2448 = vrot.slane %v2443, %v2447
  %v2449 = vlaneseq
  %v2450 = vshrl.u32 %v2449, 7
  %v2451 = vsub.s32 1, %v2450
  %v2452 = vrot.slane %v2443, %v2451
  %v2453 = vlaneseq
  %v2454 = vshrl.u32 %v2453, 7
  %v2455 = vsub.s32 2, %v2454
  %v2456 = vrot.slane %v2443, %v2455
  %v2457 = vlaneseq
  %v2458 = vshrl.u32 %v2457, 7
  %v2459 = vsub.s32 3, %v2458
  %v2460 = vrot.slane %v2443, %v2459
  %v2465 = vmul.f32 %v2397, %v2448
  %v2466 = vmul.f32 %v2399, %v2452
  %v2467 = vmul.f32 %v2401, %v2456
  %v2468 = vmul.f32 %v2403, %v2460
  %v2469 = vpack.c.bf16 %v2465, %v2465
  %v2470 = vpack.c.bf16 %v2466, %v2466
  %v2471 = vpack.c.bf16 %v2467, %v2467
  %v2472 = vpack.c.bf16 %v2468, %v2468
  %v2474 = vunpack.c.l.b16 %v2469
  %2475 = vset.pattern.permute.xlu0 0
  %2476 = vperm.xlu0 %2475, %v2474
  %v2477 = vpop.permute.xlu0 %2476
  %v2478 = vlaneseq
  %v2479 = vshrl.u32 %v2478, 7
  %v2480 = vsub.s32 %v338, %v2479
  %v2481 = vrot.slane %v2477, %v2480
  %v2482 = vpack.c.b16 %v2481, %v2481
  %v2484 = vsel %vm478, %v2482, 0
  %2486 = vmatprep.subr.bf16.mxu0 0
  %2487 = vmatpush1.bf16.msra.mxu0 0
  %2488 = vmatprep.subr.bf16.mxu0 0
  %2489 = vmatpush1.bf16.msra.mxu0 0
  %2490 = vmatprep.subr.bf16.mxu0 0
  %2491 = vmatpush1.bf16.msra.mxu0 0
  %2492 = vmatprep.subr.bf16.mxu0 0
  %2493 = vmatpush1.bf16.msra.mxu0 0
  %2494 = vmatprep.subr.bf16.mxu0 0
  %2495 = vmatpush1.bf16.msra.mxu0 0
  %2496 = vmatprep.subr.bf16.mxu0 0
  %2497 = vmatpush1.bf16.msra.mxu0 0
  %2498 = vmatprep.subr.bf16.mxu0 0
  %2499 = vmatpush1.bf16.msra.mxu0 0
  %2500 = vmatprep.subr.bf16.mxu0 0
  %2501 = vmatpush1.bf16.msra.mxu0 %v484
  %2502 = vmatprep.subr.bf16.mxu0 0
  %2503 = vmatpush2.bf16.msra.mxu0 0
  %2504 = vmatprep.subr.bf16.mxu0 0
  %2505 = vmatpush2.bf16.msra.mxu0 0
  %2506 = vmatprep.subr.bf16.mxu0 0
  %2507 = vmatpush2.bf16.msra.mxu0 0
  %2508 = vmatprep.subr.bf16.mxu0 0
  %2509 = vmatpush2.bf16.msra.mxu0 0
  %2510 = vmatprep.subr.bf16.mxu0 0
  %2511 = vmatpush2.bf16.msra.mxu0 0
  %2512 = vmatprep.subr.bf16.mxu0 0
  %2513 = vmatpush2.bf16.msra.mxu0 0
  %2514 = vmatprep.subr.bf16.mxu0 0
  %2515 = vmatpush2.bf16.msra.mxu0 0
  %2516 = vmatprep.subr.bf16.mxu0 0
  %2517 = vmatpush2.bf16.msra.mxu0 0
  %2518 = vmatprep.mubr.bf16.mxu0 0
  %2519 = vmatmul.mubr.bf16.gmra.mxu0 %v2484
  %v2520 = vpop.f32.mrf.mxu0
  %v2521 = vadd.f32 0.0, %v2520
  %v2522 = vpop.f32.mrf.mxu0
  %v2523 = vpop.f32.mrf.mxu0
  %v2524 = vpop.f32.mrf.mxu0
  %2525 = vdwg.mxu0
  %v2527 = vunpack.c.l.b16 %v2470
  %2528 = vset.pattern.permute.xlu0 0
  %2529 = vperm.xlu0 %2528, %v2527
  %v2530 = vpop.permute.xlu0 %2529
  %v2531 = vlaneseq
  %v2532 = vshrl.u32 %v2531, 7
  %v2533 = vsub.s32 %v338, %v2532
  %v2534 = vrot.slane %v2530, %v2533
  %v2535 = vpack.c.b16 %v2534, %v2534
  %v2537 = vsel %vm478, %v2535, 0
  %2539 = vmatprep.subr.bf16.mxu0 0
  %2540 = vmatpush1.bf16.msra.mxu0 0
  %2541 = vmatprep.subr.bf16.mxu0 0
  %2542 = vmatpush1.bf16.msra.mxu0 0
  %2543 = vmatprep.subr.bf16.mxu0 0
  %2544 = vmatpush1.bf16.msra.mxu0 0
  %2545 = vmatprep.subr.bf16.mxu0 0
  %2546 = vmatpush1.bf16.msra.mxu0 0
  %2547 = vmatprep.subr.bf16.mxu0 0
  %2548 = vmatpush1.bf16.msra.mxu0 0
  %2549 = vmatprep.subr.bf16.mxu0 0
  %2550 = vmatpush1.bf16.msra.mxu0 0
  %2551 = vmatprep.subr.bf16.mxu0 0
  %2552 = vmatpush1.bf16.msra.mxu0 0
  %2553 = vmatprep.subr.bf16.mxu0 0
  %2554 = vmatpush1.bf16.msra.mxu0 %v540
  %2555 = vmatprep.subr.bf16.mxu0 0
  %2556 = vmatpush2.bf16.msra.mxu0 0
  %2557 = vmatprep.subr.bf16.mxu0 0
  %2558 = vmatpush2.bf16.msra.mxu0 0
  %2559 = vmatprep.subr.bf16.mxu0 0
  %2560 = vmatpush2.bf16.msra.mxu0 0
  %2561 = vmatprep.subr.bf16.mxu0 0
  %2562 = vmatpush2.bf16.msra.mxu0 0
  %2563 = vmatprep.subr.bf16.mxu0 0
  %2564 = vmatpush2.bf16.msra.mxu0 0
  %2565 = vmatprep.subr.bf16.mxu0 0
  %2566 = vmatpush2.bf16.msra.mxu0 0
  %2567 = vmatprep.subr.bf16.mxu0 0
  %2568 = vmatpush2.bf16.msra.mxu0 0
  %2569 = vmatprep.subr.bf16.mxu0 0
  %2570 = vmatpush2.bf16.msra.mxu0 0
  %2571 = vmatprep.mubr.bf16.mxu0 0
  %2572 = vmatmul.mubr.bf16.gmra.mxu0 %v2537
  %v2573 = vpop.f32.mrf.mxu0
  %v2574 = vadd.f32 0.0, %v2573
  %v2575 = vpop.f32.mrf.mxu0
  %v2576 = vpop.f32.mrf.mxu0
  %v2577 = vpop.f32.mrf.mxu0
  %2578 = vdwg.mxu0
  %v2580 = vunpack.c.l.b16 %v2471
  %2581 = vset.pattern.permute.xlu0 0
  %2582 = vperm.xlu0 %2581, %v2580
  %v2583 = vpop.permute.xlu0 %2582
  %v2584 = vlaneseq
  %v2585 = vshrl.u32 %v2584, 7
  %v2586 = vsub.s32 %v338, %v2585
  %v2587 = vrot.slane %v2583, %v2586
  %v2588 = vpack.c.b16 %v2587, %v2587
  %v2590 = vsel %vm478, %v2588, 0
  %2592 = vmatprep.subr.bf16.mxu0 0
  %2593 = vmatpush1.bf16.msra.mxu0 0
  %2594 = vmatprep.subr.bf16.mxu0 0
  %2595 = vmatpush1.bf16.msra.mxu0 0
  %2596 = vmatprep.subr.bf16.mxu0 0
  %2597 = vmatpush1.bf16.msra.mxu0 0
  %2598 = vmatprep.subr.bf16.mxu0 0
  %2599 = vmatpush1.bf16.msra.mxu0 0
  %2600 = vmatprep.subr.bf16.mxu0 0
  %2601 = vmatpush1.bf16.msra.mxu0 0
  %2602 = vmatprep.subr.bf16.mxu0 0
  %2603 = vmatpush1.bf16.msra.mxu0 0
  %2604 = vmatprep.subr.bf16.mxu0 0
  %2605 = vmatpush1.bf16.msra.mxu0 0
  %2606 = vmatprep.subr.bf16.mxu0 0
  %2607 = vmatpush1.bf16.msra.mxu0 %v484
  %2608 = vmatprep.subr.bf16.mxu0 0
  %2609 = vmatpush2.bf16.msra.mxu0 0
  %2610 = vmatprep.subr.bf16.mxu0 0
  %2611 = vmatpush2.bf16.msra.mxu0 0
  %2612 = vmatprep.subr.bf16.mxu0 0
  %2613 = vmatpush2.bf16.msra.mxu0 0
  %2614 = vmatprep.subr.bf16.mxu0 0
  %2615 = vmatpush2.bf16.msra.mxu0 0
  %2616 = vmatprep.subr.bf16.mxu0 0
  %2617 = vmatpush2.bf16.msra.mxu0 0
  %2618 = vmatprep.subr.bf16.mxu0 0
  %2619 = vmatpush2.bf16.msra.mxu0 0
  %2620 = vmatprep.subr.bf16.mxu0 0
  %2621 = vmatpush2.bf16.msra.mxu0 0
  %2622 = vmatprep.subr.bf16.mxu0 0
  %2623 = vmatpush2.bf16.msra.mxu0 0
  %2624 = vmatprep.mubr.bf16.mxu0 0
  %2625 = vmatmul.mubr.bf16.gmra.mxu0 %v2590
  %v2626 = vpop.f32.mrf.mxu0
  %v2627 = vadd.f32 0.0, %v2626
  %v2628 = vpop.f32.mrf.mxu0
  %v2629 = vpop.f32.mrf.mxu0
  %v2630 = vpop.f32.mrf.mxu0
  %2631 = vdwg.mxu0
  %v2633 = vunpack.c.l.b16 %v2472
  %2634 = vset.pattern.permute.xlu0 0
  %2635 = vperm.xlu0 %2634, %v2633
  %v2636 = vpop.permute.xlu0 %2635
  %v2637 = vlaneseq
  %v2638 = vshrl.u32 %v2637, 7
  %v2639 = vsub.s32 %v338, %v2638
  %v2640 = vrot.slane %v2636, %v2639
  %v2641 = vpack.c.b16 %v2640, %v2640
  %v2643 = vsel %vm478, %v2641, 0
  %2645 = vmatprep.subr.bf16.mxu0 0
  %2646 = vmatpush1.bf16.msra.mxu0 0
  %2647 = vmatprep.subr.bf16.mxu0 0
  %2648 = vmatpush1.bf16.msra.mxu0 0
  %2649 = vmatprep.subr.bf16.mxu0 0
  %2650 = vmatpush1.bf16.msra.mxu0 0
  %2651 = vmatprep.subr.bf16.mxu0 0
  %2652 = vmatpush1.bf16.msra.mxu0 0
  %2653 = vmatprep.subr.bf16.mxu0 0
  %2654 = vmatpush1.bf16.msra.mxu0 0
  %2655 = vmatprep.subr.bf16.mxu0 0
  %2656 = vmatpush1.bf16.msra.mxu0 0
  %2657 = vmatprep.subr.bf16.mxu0 0
  %2658 = vmatpush1.bf16.msra.mxu0 0
  %2659 = vmatprep.subr.bf16.mxu0 0
  %2660 = vmatpush1.bf16.msra.mxu0 %v540
  %2661 = vmatprep.subr.bf16.mxu0 0
  %2662 = vmatpush2.bf16.msra.mxu0 0
  %2663 = vmatprep.subr.bf16.mxu0 0
  %2664 = vmatpush2.bf16.msra.mxu0 0
  %2665 = vmatprep.subr.bf16.mxu0 0
  %2666 = vmatpush2.bf16.msra.mxu0 0
  %2667 = vmatprep.subr.bf16.mxu0 0
  %2668 = vmatpush2.bf16.msra.mxu0 0
  %2669 = vmatprep.subr.bf16.mxu0 0
  %2670 = vmatpush2.bf16.msra.mxu0 0
  %2671 = vmatprep.subr.bf16.mxu0 0
  %2672 = vmatpush2.bf16.msra.mxu0 0
  %2673 = vmatprep.subr.bf16.mxu0 0
  %2674 = vmatpush2.bf16.msra.mxu0 0
  %2675 = vmatprep.subr.bf16.mxu0 0
  %2676 = vmatpush2.bf16.msra.mxu0 0
  %2677 = vmatprep.mubr.bf16.mxu0 0
  %2678 = vmatmul.mubr.bf16.gmra.mxu0 %v2643
  %v2679 = vpop.f32.mrf.mxu0
  %v2680 = vadd.f32 0.0, %v2679
  %v2681 = vpop.f32.mrf.mxu0
  %v2682 = vpop.f32.mrf.mxu0
  %v2683 = vpop.f32.mrf.mxu0
  %2684 = vdwg.mxu0
  %v2685 = vmul.f32 %v2521, %v125
  %v2686 = vmul.f32 %v2574, %v688
  %v2687 = vmul.f32 %v2627, %v689
  %v2688 = vmul.f32 %v2680, %v690
  %v2689 = vmul.f32 %v2521, %v131
  %v2690 = vmul.f32 %v2574, %v698
  %v2691 = vmul.f32 %v2627, %v699
  %v2692 = vmul.f32 %v2680, %v700
  %v2697 = vrot.slane %v2686, 7
  %v2698 = vsel %vm355, %v2697, %v2685
  %v2699 = vrot.slane %v2687, 6
  %v2700 = vsel %vm357, %v2699, %v2698
  %v2701 = vrot.slane %v2688, 5
  %v2702 = vsel %vm359, %v2701, %v2700
  %v2708 = vrot.slane %v2690, 7
  %v2709 = vsel %vm355, %v2708, %v2689
  %v2710 = vrot.slane %v2691, 6
  %v2711 = vsel %vm357, %v2710, %v2709
  %v2712 = vrot.slane %v2692, 5
  %v2713 = vsel %vm359, %v2712, %v2711
  %2714 = vrot.lane.b32.xlu0 %v2713, 32
  %v2715 = vpop.permute.xlu0 %2714
  %v2717 = vsel %vm138, %v2702, %v2715
  %v2718 = vpack.c.bf16 %v2717, %v2717
  %v2720 = vsel %vm165, %v2718, 0
  %2722 = vmatprep.subr.bf16.mxu0 0
  %2723 = vmatpush1.bf16.msra.mxu0 0
  %2724 = vmatprep.subr.bf16.mxu0 0
  %2725 = vmatpush1.bf16.msra.mxu0 0
  %2726 = vmatprep.subr.bf16.mxu0 0
  %2727 = vmatpush1.bf16.msra.mxu0 0
  %2728 = vmatprep.subr.bf16.mxu0 0
  %2729 = vmatpush1.bf16.msra.mxu0 0
  %2730 = vmatprep.subr.bf16.mxu0 0
  %2731 = vmatpush1.bf16.msra.mxu0 %v753
  %2732 = vmatprep.subr.bf16.mxu0 0
  %2733 = vmatpush1.bf16.msra.mxu0 %v752
  %2734 = vmatprep.subr.bf16.mxu0 0
  %2735 = vmatpush1.bf16.msra.mxu0 %v751
  %2736 = vmatprep.subr.bf16.mxu0 0
  %2737 = vmatpush1.bf16.msra.mxu0 %v750
  %2738 = vmatprep.subr.bf16.mxu0 0
  %2739 = vmatpush2.bf16.msra.mxu0 0
  %2740 = vmatprep.subr.bf16.mxu0 0
  %2741 = vmatpush2.bf16.msra.mxu0 0
  %2742 = vmatprep.subr.bf16.mxu0 0
  %2743 = vmatpush2.bf16.msra.mxu0 0
  %2744 = vmatprep.subr.bf16.mxu0 0
  %2745 = vmatpush2.bf16.msra.mxu0 0
  %2746 = vmatprep.subr.bf16.mxu0 0
  %2747 = vmatpush2.bf16.msra.mxu0 0
  %2748 = vmatprep.subr.bf16.mxu0 0
  %2749 = vmatpush2.bf16.msra.mxu0 0
  %2750 = vmatprep.subr.bf16.mxu0 0
  %2751 = vmatpush2.bf16.msra.mxu0 0
  %2752 = vmatprep.subr.bf16.mxu0 0
  %2753 = vmatpush2.bf16.msra.mxu0 0
  %2754 = vmatprep.mubr.bf16.mxu0 0
  %2755 = vmatmul.mubr.bf16.gmra.mxu0 %v2720
  %v2756 = vpop.f32.mrf.mxu0
  %v2757 = vadd.f32 %v106, %v2756
  %v2758 = vpop.f32.mrf.mxu0
  %v2759 = vpop.f32.mrf.mxu0
  %v2760 = vpop.f32.mrf.mxu0
  %2761 = vdwg.mxu0
  %2762 = vrot.lane.b32.xlu0 %v2254, 96
  %v2763 = vpop.permute.xlu0 %2762
  %v2765 = vadd.f32 %v2757, %v2763
  %v2766 = vxor.u32 %v2765, 2147483648
  %v2767 = vmul.f32 %v2766, 1.442695
  %v2768 = vpow.pop %v2767
  %v2769 = vadd.f32 %v2768, 1.0
  %v2770 = vrcp.pop %v2769
  %v2771 = vmul.f32 1.0, %v2770
  %2772 = vrot.lane.b32.xlu0 %v2254, 32
  %v2773 = vpop.permute.xlu0 %2772
  %v2775 = vmul.f32 %v2771, %v2773
  %2777 = vrot.lane.b32.xlu0 %v2775, 64
  %v2778 = vpop.permute.xlu0 %2777
  %v2780 = vadd.f32 %v2757, %v2778
  %v2781 = vtanh.pop %v2780
  %v2782 = vsub.f32 1.0, %v2771
  %2784 = vrot.lane.b32.xlu0 %v2781, 96
  %v2785 = vpop.permute.xlu0 %2784
  %v2787 = vmul.f32 %v2782, %v2785
  %v2788 = vmul.f32 %v2771, %v2143
  %v2789 = vadd.f32 %v2787, %v2788
  %v2790 = vpack.c.bf16 %v2789, %v2789
  %2792 = vrot.lane.b32.xlu0 %v2790, 96
  %v2793 = vpop.permute.xlu0 %2792
  %v2795 = vsel %vm138, %v2793, 0
  %2797 = vmatprep.subr.bf16.mxu0 0
  %2798 = vmatpush1.bf16.msra.mxu0 0
  %2799 = vmatprep.subr.bf16.mxu0 0
  %2800 = vmatpush1.bf16.msra.mxu0 0
  %2801 = vmatprep.subr.bf16.mxu0 0
  %2802 = vmatpush1.bf16.msra.mxu0 0
  %2803 = vmatprep.subr.bf16.mxu0 0
  %2804 = vmatpush1.bf16.msra.mxu0 0
  %2805 = vmatprep.subr.bf16.mxu0 0
  %2806 = vmatpush1.bf16.msra.mxu0 0
  %2807 = vmatprep.subr.bf16.mxu0 0
  %2808 = vmatpush1.bf16.msra.mxu0 0
  %2809 = vmatprep.subr.bf16.mxu0 0
  %2810 = vmatpush1.bf16.msra.mxu0 %v852
  %2811 = vmatprep.subr.bf16.mxu0 0
  %2812 = vmatpush1.bf16.msra.mxu0 %v851
  %2813 = vmatprep.subr.bf16.mxu0 0
  %2814 = vmatpush2.bf16.msra.mxu0 0
  %2815 = vmatprep.subr.bf16.mxu0 0
  %2816 = vmatpush2.bf16.msra.mxu0 0
  %2817 = vmatprep.subr.bf16.mxu0 0
  %2818 = vmatpush2.bf16.msra.mxu0 0
  %2819 = vmatprep.subr.bf16.mxu0 0
  %2820 = vmatpush2.bf16.msra.mxu0 0
  %2821 = vmatprep.subr.bf16.mxu0 0
  %2822 = vmatpush2.bf16.msra.mxu0 0
  %2823 = vmatprep.subr.bf16.mxu0 0
  %2824 = vmatpush2.bf16.msra.mxu0 0
  %2825 = vmatprep.subr.bf16.mxu0 0
  %2826 = vmatpush2.bf16.msra.mxu0 0
  %2827 = vmatprep.subr.bf16.mxu0 0
  %2828 = vmatpush2.bf16.msra.mxu0 0
  %2829 = vmatprep.mubr.bf16.mxu0 0
  %2830 = vmatmul.mubr.bf16.gmra.mxu0 %v2795
  %v2831 = vpop.f32.mrf.mxu0
  %v2832 = vadd.f32 %v838, %v2831
  %v2833 = vpop.f32.mrf.mxu0
  %v2834 = vpop.f32.mrf.mxu0
  %v2835 = vpop.f32.mrf.mxu0
  %2836 = vdwg.mxu0
  %v2839 = vunpack.c.l.s4 1983009808
  %v2840 = vunpack.c.0.s8 %v2839
  %v2841 = vlaneseq
  %v2842 = vshrl.u32 %v2841, 7
  %v2843 = vsub.s32 %v2840, %v2842
  %v2844 = vrot.slane %v2832, %v2843
  %2845 = vrot.lane.b32.xlu0 %v2844, 96
  %v2846 = vpop.permute.xlu0 %2845
  %2848 = vst.msk [vmem:[%s14 + $0x2] sm:$0x3] %vm1557, %v2846
  // Predicated region
  $region58: #{decoder_forward.2} parent=0 // pred_check
    _
  $region59: #{decoder_forward.2} parent=0 // pred_check_branch
    %2850 = sbr.rel (0) target = $region61
  $region60: #{decoder_forward.2} parent=0 // pred_region
    _
  $region61: #{decoder_forward.2} parent=0 // pred_fallthru
    _
  // Predicated region
  $region62: #{decoder_forward.2} parent=0 // pred_check
    _
  $region63: #{decoder_forward.2} parent=0 // pred_check_branch
    %2852 = sbr.rel (0) target = $region65
  $region64: #{decoder_forward.2} parent=0 // pred_region
    _
  $region65: #{decoder_forward.2} parent=0 // pred_fallthru
    _

</llo_original>
